<compile_context>
chip_gen: v5e
topology: v5e:2x2
jax: 0.10.0
libtpu: 0.0.40
codegen_flags: <defaults>
</compile_context>

<pallas_src>
import functools

import jax
import jax.numpy as jnp
from jax import lax
from jax.experimental import pallas as pl
from jax.experimental.pallas import tpu as pltpu


C1, C2 = 256, 128            # conv channel counts
H1 = W1 = 7                  # pre-conv1 spatial
H2 = W2 = 14                 # pre-conv2 spatial
KK = 16                      # 4x4 transposed-conv taps
EPS = 1e-5

_FUSED_BN_MAX_ROWS = 4096    # whole-y1-resident fused BN path (N*196 rows) up to ~4 MB f32


# ------------------------------ small helpers ------------------------------ #

def _round_up(x, m):
    return (x + m - 1) // m * m


@functools.lru_cache(maxsize=None)
def _vmem_limit_bytes():
    # Gate the scoped-VMEM request per chip generation (v7x only has 64 MiB physical).
    try:
        cap = int(pltpu.get_tpu_info().vmem_capacity_bytes)
    except Exception:
        cap = 64 * 1024 * 1024
    return min(cap // 2, 96 * 1024 * 1024)   # 64 MB on v5e/v6e, 32 MB on v7x


def _cparams(dim_sems):
    return pltpu.CompilerParams(
        dimension_semantics=dim_sems,
        vmem_limit_bytes=_vmem_limit_bytes(),
    )


# ----------------------------- Pallas kernels ------------------------------ #

def _linear_relu_kernel(x_ref, w_ref, b_ref, o_ref):
    # (tm, nd) bf16 @ (nd, 12544) bf16 -> f32, + bias, ReLU, store bf16.
    y = jnp.dot(x_ref[...], w_ref[...], preferred_element_type=jnp.float32)
    o_ref[...] = jnp.maximum(y + b_ref[...], 0.0).astype(o_ref.dtype)


def _taps_matmul_kernel(a_ref, w_ref, o_ref):
    # Output-stationary tap matmul (bf16 operands, f32 acc, bf16 store).
    o_ref[...] = jnp.dot(a_ref[...], w_ref[...],
                         preferred_element_type=jnp.float32).astype(o_ref.dtype)


def _bn_relu_conv2_fused_kernel(count, y_ref, g_ref, b_ref, w_ref, o_ref):
    # Whole-batch BN stats + normalize + ReLU + conv2 tap matmul in ONE kernel
    # (y1 fully VMEM-resident).  One-pass E[x^2]-E[x]^2 variance in f32 is fine
    # at the validated tolerance.
    y = y_ref[...]                                           # (R, 128) f32
    inv_n = 1.0 / count
    mean = jnp.sum(y, axis=0, keepdims=True) * inv_n
    var = jnp.maximum(jnp.sum(y * y, axis=0, keepdims=True) * inv_n - mean * mean, 0.0)
    scale = g_ref[...] * lax.rsqrt(var + EPS)
    shift = b_ref[...] - mean * scale
    yn = jnp.maximum(y * scale + shift, 0.0)
    o_ref[...] = jnp.dot(yn.astype(w_ref.dtype), w_ref[...],
                         preferred_element_type=jnp.float32)


def _bn_stats_kernel(y_ref, sum_ref, sq_ref):
    # Large-batch fallback: per-channel sum / sum-of-squares accumulated across an
    # "arbitrary" row-tile axis into (1, C) output-resident accumulators.
    @pl.when(pl.program_id(0) == 0)
    def _():
        sum_ref[...] = jnp.zeros_like(sum_ref)
        sq_ref[...] = jnp.zeros_like(sq_ref)

    y = y_ref[...]
    sum_ref[...] += jnp.sum(y, axis=0, keepdims=True)
    sq_ref[...] += jnp.sum(y * y, axis=0, keepdims=True)


def _bn_relu_conv2_kernel(y_ref, scale_ref, shift_ref, w_ref, o_ref):
    # Large-batch fallback: BN-apply (precomputed scale/shift) + ReLU + conv2 matmul.
    yn = jnp.maximum(y_ref[...] * scale_ref[...] + shift_ref[...], 0.0)
    o_ref[...] = jnp.dot(yn.astype(w_ref.dtype), w_ref[...],
                         preferred_element_type=jnp.float32)


# --------------------------- pallas_call wrappers --------------------------- #

def _linear_relu(x, w_bf16, b):
    N, D = x.shape
    Do = w_bf16.shape[1]
    x = x.astype(jnp.bfloat16)
    if N <= 256:
        tm, Np, grid = N, N, (1,)
    else:
        tm = 256
        Np = _round_up(N, tm)
        x = jnp.pad(x, ((0, Np - N), (0, 0)))
        grid = (Np // tm,)
    out = pl.pallas_call(
        _linear_relu_kernel,
        out_shape=jax.ShapeDtypeStruct((Np, Do), jnp.bfloat16),
        grid=grid,
        in_specs=[
            pl.BlockSpec((tm, D), lambda i: (i, 0)),
            pl.BlockSpec((D, Do), lambda i: (0, 0)),
            pl.BlockSpec((1, Do), lambda i: (0, 0)),
        ],
        out_specs=pl.BlockSpec((tm, Do), lambda i: (i, 0)),
        compiler_params=_cparams(("parallel",)),
    )(x, w_bf16, b)
    return out[:N]


def _conv1_taps(a_bf16, w1_bf16):
    """(R, 256) bf16 @ (256, 2048) bf16 -> (R, 2048) bf16 taps.

    The full-width weight stays VMEM-resident; rows are tiled on a "parallel"
    axis so large batches spread across both v7x TensorCores.
    """
    R, K = a_bf16.shape
    C = w1_bf16.shape[1]
    if R <= 512:
        tm, Rp, grid = R, R, (1,)
        a_p = a_bf16
    else:
        tm = 512
        Rp = _round_up(R, tm)
        a_p = jnp.pad(a_bf16, ((0, Rp - R), (0, 0)))
        grid = (Rp // tm,)
    taps = pl.pallas_call(
        _taps_matmul_kernel,
        out_shape=jax.ShapeDtypeStruct((Rp, C), jnp.bfloat16),
        grid=grid,
        in_specs=[
            pl.BlockSpec((tm, K), lambda i: (i, 0)),
            pl.BlockSpec((K, C), lambda i: (0, 0)),
        ],
        out_specs=pl.BlockSpec((tm, C), lambda i: (i, 0)),
        compiler_params=_cparams(("parallel",)),
    )(a_p, w1_bf16)
    return taps[:R]


def _bn_relu_conv2(y1, gamma, beta, w2_bf16):
    """BatchNorm (batch stats) + ReLU + conv2 tap matmul.  y1: (R, 128) f32."""
    R, C = y1.shape
    Co = w2_bf16.shape[1]

    if R <= _FUSED_BN_MAX_ROWS:
        kern = functools.partial(_bn_relu_conv2_fused_kernel, float(R))
        return pl.pallas_call(
            kern,
            out_shape=jax.ShapeDtypeStruct((R, Co), jnp.float32),
            grid=(1,),
            in_specs=[
                pl.BlockSpec((R, C), lambda i: (0, 0)),
                pl.BlockSpec((1, C), lambda i: (0, 0)),
                pl.BlockSpec((1, C), lambda i: (0, 0)),
                pl.BlockSpec((C, Co), lambda i: (0, 0)),
            ],
            out_specs=pl.BlockSpec((R, Co), lambda i: (0, 0)),
            compiler_params=_cparams(("arbitrary",)),
        )(y1, gamma, beta, w2_bf16)

    # Large-batch fallback: tiled stats pass + fused normalize/ReLU/conv2 pass.
    tm = 512
    Rp = _round_up(R, tm)
    y1p = jnp.pad(y1, ((0, Rp - R), (0, 0)))        # zero rows: no effect on sums
    s, sq = pl.pallas_call(
        _bn_stats_kernel,
        out_shape=(jax.ShapeDtypeStruct((1, C), jnp.float32),
                   jax.ShapeDtypeStruct((1, C), jnp.float32)),
        grid=(Rp // tm,),
        in_specs=[pl.BlockSpec((tm, C), lambda i: (i, 0))],
        out_specs=(pl.BlockSpec((1, C), lambda i: (0, 0)),
                   pl.BlockSpec((1, C), lambda i: (0, 0))),
        compiler_params=_cparams(("arbitrary",)),
    )(y1p)
    cnt = jnp.float32(R)
    mean = s / cnt
    var = jnp.maximum(sq / cnt - mean * mean, 0.0)   # biased variance (PyTorch)
    scale = gamma * lax.rsqrt(var + EPS)
    shift = beta - mean * scale
    taps2 = pl.pallas_call(
        _bn_relu_conv2_kernel,
        out_shape=jax.ShapeDtypeStruct((Rp, Co), jnp.float32),
        grid=(Rp // tm,),
        in_specs=[
            pl.BlockSpec((tm, C), lambda i: (i, 0)),
            pl.BlockSpec((1, C), lambda i: (0, 0)),
            pl.BlockSpec((1, C), lambda i: (0, 0)),
            pl.BlockSpec((C, Co), lambda i: (0, 0)),
        ],
        out_specs=pl.BlockSpec((tm, Co), lambda i: (i, 0)),
        compiler_params=_cparams(("parallel",)),
    )(y1p, scale, shift, w2_bf16)
    return taps2[:R]


# ------------------------------- JAX glue ---------------------------------- #

# Contributions per output-row parity for ConvTranspose2d(k=4, s=2, p=1):
#   oh = 2*ih - 1 + kh  =>  even oh: (kh=1, ih=a), (kh=3, ih=a-1)
#                           odd  oh: (kh=2, ih=a), (kh=0, ih=a+1)
_PARITY_TERMS = {0: ((1, 0), (3, -1)), 1: ((2, 0), (0, 1))}


def _col2im_s2k4p1(taps):
    """Overlap-add for ConvTranspose2d(k=4, s=2, p=1) as 4 dense parity planes.

    taps: (N, H, W, 16, C) with tap axis ordered kh*4+kw.  Returns (N, 2H, 2W, C) f32.
    Dense shifted adds + one interleaving reshape (no strided scatter-adds).
    """
    taps = taps.astype(jnp.float32)
    N, H, W, _, C = taps.shape

    def term(kh, kw, dh, dw):
        x = taps[:, :, :, kh * 4 + kw, :]
        if dh == -1:
            x = jnp.pad(x, ((0, 0), (1, 0), (0, 0), (0, 0)))[:, :H]
        elif dh == 1:
            x = jnp.pad(x, ((0, 0), (0, 1), (0, 0), (0, 0)))[:, 1:]
        if dw == -1:
            x = jnp.pad(x, ((0, 0), (0, 0), (1, 0), (0, 0)))[:, :, :W]
        elif dw == 1:
            x = jnp.pad(x, ((0, 0), (0, 0), (0, 1), (0, 0)))[:, :, 1:]
        return x

    rows = []
    for rh in (0, 1):
        cols = []
        for rw in (0, 1):
            plane = sum(term(kh, kw, dh, dw)
                        for kh, dh in _PARITY_TERMS[rh]
                        for kw, dw in _PARITY_TERMS[rw])
            cols.append(plane)
        rows.append(jnp.stack(cols, axis=3))          # (N, H, W, 2, C)
    stacked = jnp.stack(rows, axis=2)                 # (N, H, 2, W, 2, C)
    return stacked.reshape(N, 2 * H, 2 * W, C)


def init_params(key, noise_dim):
    k1, k2, k3, k4 = jax.random.split(key, 4)
    return dict(
        # Linear weight pre-transposed to (noise_dim, 256*7*7); column order is
        # PyTorch's (c, h, w) as implied by nn.Unflatten(1, (256, 7, 7)).
        w_lin=jax.random.normal(k1, (noise_dim, C1 * H1 * W1), jnp.float32) * 0.02,
        b_lin=jax.random.normal(k2, (C1 * H1 * W1,), jnp.float32) * 0.02,
        # PyTorch ConvTranspose2d layout: (Cin, Cout, kH, kW).
        w_ct1=jax.random.normal(k3, (C1, C2, 4, 4), jnp.float32) * 0.02,
        bn_gamma=jnp.ones((C2,), jnp.float32),
        bn_beta=jnp.zeros((C2,), jnp.float32),
        w_ct2=jax.random.normal(k4, (C2, 1, 4, 4), jnp.float32) * 0.02,
    )


def prepare_weights(params):
    """One-time (init-time) layout shuffle + bf16 cast of the PyTorch-layout params."""
    nd = params["w_lin"].shape[0]
    # Linear columns permuted (c,h,w) -> (h,w,c): kernel output is spatial-major,
    # so the post-linear reshape to (N*49, 256) is a free row-major bitcast.
    w_lin = (params["w_lin"].reshape(nd, C1, H1, W1).transpose(0, 2, 3, 1)
             .reshape(nd, H1 * W1 * C1).astype(jnp.bfloat16))
    b_lin = (params["b_lin"].reshape(C1, H1, W1).transpose(1, 2, 0)
             .reshape(1, H1 * W1 * C1))
    # (Cin, Cout, kh, kw) -> (Cin, kh, kw, Cout) -> (Cin, 16*Cout); lane = (kh, kw, cout)
    w1 = params["w_ct1"].transpose(0, 2, 3, 1).reshape(C1, KK * C2).astype(jnp.bfloat16)
    # conv2 tap weight zero-padded to 128 lanes -> lane-dense (unmasked) output stores.
    w2 = params["w_ct2"].transpose(0, 2, 3, 1).reshape(C2, KK)
    w2 = jnp.pad(w2, ((0, 0), (0, 128 - KK))).astype(jnp.bfloat16)
    return dict(
        w_lin=w_lin, b_lin=b_lin, w1=w1, w2=w2,
        bn_gamma=params["bn_gamma"].reshape(1, C2),
        bn_beta=params["bn_beta"].reshape(1, C2),
    )


def generator_forward(prep, x):
    N = x.shape[0]

    # ---- Linear + ReLU (Pallas, bf16 MXU); free bitcast to (N*49, 256) ----
    h = _linear_relu(x, prep["w_lin"], prep["b_lin"])            # (N, 12544) bf16
    h = h.reshape(N * H1 * W1, C1)                               # (N*49, 256)

    # ---- ConvTranspose2d(256->128): dense tap matmul (bf16 taps) + parity col2im ----
    taps1 = _conv1_taps(h, prep["w1"])                           # (N*49, 2048) bf16
    taps1 = taps1.reshape(N, H1, W1, KK, C2)
    y1 = _col2im_s2k4p1(taps1)                                   # (N, 14, 14, 128) f32

    # ---- BatchNorm2d(128) + ReLU + ConvTranspose2d(128->1) tap matmul (one Pallas call) ----
    taps2 = _bn_relu_conv2(y1.reshape(N * H2 * W2, C2),
                           prep["bn_gamma"], prep["bn_beta"], prep["w2"])
    taps2 = taps2[:, :KK].reshape(N, H2, W2, KK, 1)
    y2 = _col2im_s2k4p1(taps2)                                   # (N, 28, 28, 1) f32

    # Tanh left to XLA so it fuses with the tiny conv2 overlap-add (per perf review).
    # TODO(synk): at inference batch sizes everything fits in VMEM; a single fully
    # fused pallas_call (zero intermediate HBM traffic) is the next step.
    return jnp.tanh(y2).reshape(N, 1, 28, 28)


# --------------------------- pure-JAX reference ----------------------------- #

def reference_forward(params, x):
    h = jnp.maximum(x @ params["w_lin"] + params["b_lin"], 0.0)
    h = h.reshape(x.shape[0], C1, H1, W1)

    def convT(z, w_t):
        rhs = jnp.transpose(w_t[:, :, ::-1, ::-1], (1, 0, 2, 3))  # OIHW, flipped
        return lax.conv_general_dilated(
            z, rhs, window_strides=(1, 1), padding=[(2, 2), (2, 2)],
            lhs_dilation=(2, 2), dimension_numbers=("NCHW", "OIHW", "NCHW"))

    y = convT(h, params["w_ct1"])
    mean = y.mean(axis=(0, 2, 3), keepdims=True)
    var = ((y - mean) ** 2).mean(axis=(0, 2, 3), keepdims=True)
    y = (y - mean) * lax.rsqrt(var + EPS)
    y = y * params["bn_gamma"].reshape(1, -1, 1, 1) + params["bn_beta"].reshape(1, -1, 1, 1)
    y = jnp.maximum(y, 0.0)
    y = convT(y, params["w_ct2"])
    return jnp.tanh(y)


if __name__ == "__main__":
    noise_dim = 32
    batch = 2
    key = jax.random.PRNGKey(0)
    pkey, xkey = jax.random.split(key)
    params = init_params(pkey, noise_dim)
    x = jax.random.normal(xkey, (batch, noise_dim), jnp.float32)

    prep = prepare_weights(params)           # init-time layout shuffle, not per-call
    fwd = jax.jit(generator_forward)
    out = jax.block_until_ready(fwd(prep, x))
    assert out.shape == (batch, 1, 28, 28), out.shape

    ref = jax.block_until_ready(reference_forward(params, x))
    max_err = float(jnp.max(jnp.abs(out - ref)))
    assert max_err < 5e-2, f"max abs err vs reference: {max_err}"

    print("KERNEL_OK")
</pallas_src>

<mosaic_0001>
module attributes {stable_mosaic.version = 11 : i64} {
  func.func @_taps_matmul_kernel(%arg0: i32, %arg1: memref<98x256xbf16, #tpu.memory_space<vmem>>, %arg2: memref<256x2048xbf16, #tpu.memory_space<vmem>>, %arg3: memref<98x2048xbf16, #tpu.memory_space<vmem>>) attributes {dimension_semantics = [#tpu.dimension_semantics<parallel>], iteration_bounds = array<i64: 1>, scalar_prefetch = 0 : i64, scratch_operands = 0 : i64, tpu.core_type = #tpu.core_type<tc>, window_params = [{transform_indices = @transform_0, window_bounds = array<i64: 98, 256>}, {pipeline_mode = #tpu.pipeline_mode<synchronous>, transform_indices = @transform_1, window_bounds = array<i64: 256, 2048>}, {transform_indices = @transform_2, window_bounds = array<i64: 98, 2048>}]} {
    %c0 = arith.constant 0 : index
    %c0_0 = arith.constant 0 : index
    %0 = vector.load %arg1[%c0, %c0_0] : memref<98x256xbf16, #tpu.memory_space<vmem>>, vector<98x256xbf16>
    %c0_1 = arith.constant 0 : index
    %c0_2 = arith.constant 0 : index
    %1 = vector.load %arg2[%c0_1, %c0_2] : memref<256x2048xbf16, #tpu.memory_space<vmem>>, vector<256x2048xbf16>
    %cst = arith.constant dense<0.000000e+00> : vector<98x2048xf32>
    %2 = tpu.matmul %0, %1, %cst {dimension_numbers = #tpu.dot_dimension_numbers<[1], [0], [0], [1], [0, 0, 1, 1], [], []>} : vector<98x256xbf16>, vector<256x2048xbf16>, vector<98x2048xf32> -> vector<98x2048xf32>
    %3 = arith.truncf %2 : vector<98x2048xf32> to vector<98x2048xbf16>
    %c0_3 = arith.constant 0 : index
    %c0_4 = arith.constant 0 : index
    %4 = vector.load %arg3[%c0_3, %c0_4] : memref<98x2048xbf16, #tpu.memory_space<vmem>>, vector<98x2048xbf16>
    tpu.vector_store %arg3[%c0_3, %c0_4], %3 {strides = array<i32>} : memref<98x2048xbf16, #tpu.memory_space<vmem>>, vector<98x2048xbf16>,
    return
  }
  func.func @transform_0(%arg0: i32) -> (i32, i32) {
    %c0_i32 = arith.constant 0 : i32
    %c0_i32_0 = arith.constant 0 : i32
    return %arg0, %c0_i32 : i32, i32
  }
  func.func @transform_1(%arg0: i32) -> (i32, i32) {
    %c0_i32 = arith.constant 0 : i32
    %c0_i32_0 = arith.constant 0 : i32
    %c0_i32_1 = arith.constant 0 : i32
    return %c0_i32, %c0_i32_0 : i32, i32
  }
  func.func @transform_2(%arg0: i32) -> (i32, i32) {
    %c0_i32 = arith.constant 0 : i32
    %c0_i32_0 = arith.constant 0 : i32
    return %arg0, %c0_i32 : i32, i32
  }
}

module attributes {stable_mosaic.version = 11 : i64} {
  func.func @_linear_relu_kernel(%arg0: i32, %arg1: memref<2x32xbf16, #tpu.memory_space<vmem>>, %arg2: memref<32x12544xbf16, #tpu.memory_space<vmem>>, %arg3: memref<1x12544xf32, #tpu.memory_space<vmem>>, %arg4: memref<2x12544xbf16, #tpu.memory_space<vmem>>) attributes {dimension_semantics = [#tpu.dimension_semantics<parallel>], iteration_bounds = array<i64: 1>, scalar_prefetch = 0 : i64, scratch_operands = 0 : i64, tpu.core_type = #tpu.core_type<tc>, window_params = [{transform_indices = @transform_0, window_bounds = array<i64: 2, 32>}, {pipeline_mode = #tpu.pipeline_mode<synchronous>, transform_indices = @transform_1, window_bounds = array<i64: 32, 12544>}, {pipeline_mode = #tpu.pipeline_mode<synchronous>, transform_indices = @transform_2, window_bounds = array<i64: 1, 12544>}, {transform_indices = @transform_3, window_bounds = array<i64: 2, 12544>}]} {
    %c0 = arith.constant 0 : index
    %c0_0 = arith.constant 0 : index
    %0 = vector.load %arg1[%c0, %c0_0] : memref<2x32xbf16, #tpu.memory_space<vmem>>, vector<2x32xbf16>
    %c0_1 = arith.constant 0 : index
    %c0_2 = arith.constant 0 : index
    %1 = vector.load %arg2[%c0_1, %c0_2] : memref<32x12544xbf16, #tpu.memory_space<vmem>>, vector<32x12544xbf16>
    %cst = arith.constant dense<0.000000e+00> : vector<2x12544xf32>
    %2 = tpu.matmul %0, %1, %cst {dimension_numbers = #tpu.dot_dimension_numbers<[1], [0], [0], [1], [0, 0, 1, 1], [], []>} : vector<2x32xbf16>, vector<32x12544xbf16>, vector<2x12544xf32> -> vector<2x12544xf32>
    %c0_3 = arith.constant 0 : index
    %c0_4 = arith.constant 0 : index
    %3 = vector.load %arg3[%c0_3, %c0_4] : memref<1x12544xf32, #tpu.memory_space<vmem>>, vector<1x12544xf32>
    %4 = vector.broadcast %3 : vector<1x12544xf32> to vector<2x12544xf32>
    %5 = arith.addf %2, %4 : vector<2x12544xf32>
    %cst_5 = arith.constant 0.000000e+00 : f32
    %6 = vector.broadcast %cst_5 : f32 to vector<2x12544xf32>
    %7 = arith.maximumf %5, %6 : vector<2x12544xf32>
    %8 = arith.truncf %7 : vector<2x12544xf32> to vector<2x12544xbf16>
    %c0_6 = arith.constant 0 : index
    %c0_7 = arith.constant 0 : index
    %9 = vector.load %arg4[%c0_6, %c0_7] : memref<2x12544xbf16, #tpu.memory_space<vmem>>, vector<2x12544xbf16>
    tpu.vector_store %arg4[%c0_6, %c0_7], %8 {strides = array<i32>} : memref<2x12544xbf16, #tpu.memory_space<vmem>>, vector<2x12544xbf16>,
    return
  }
  func.func @transform_0(%arg0: i32) -> (i32, i32) {
    %c0_i32 = arith.constant 0 : i32
    %c0_i32_0 = arith.constant 0 : i32
    return %arg0, %c0_i32 : i32, i32
  }
  func.func @transform_1(%arg0: i32) -> (i32, i32) {
    %c0_i32 = arith.constant 0 : i32
    %c0_i32_0 = arith.constant 0 : i32
    %c0_i32_1 = arith.constant 0 : i32
    return %c0_i32, %c0_i32_0 : i32, i32
  }
  func.func @transform_2(%arg0: i32) -> (i32, i32) {
    %c0_i32 = arith.constant 0 : i32
    %c0_i32_0 = arith.constant 0 : i32
    %c0_i32_1 = arith.constant 0 : i32
    return %c0_i32, %c0_i32_0 : i32, i32
  }
  func.func @transform_3(%arg0: i32) -> (i32, i32) {
    %c0_i32 = arith.constant 0 : i32
    %c0_i32_0 = arith.constant 0 : i32
    return %arg0, %c0_i32 : i32, i32
  }
}

module attributes {stable_mosaic.version = 11 : i64} {
  func.func @_bn_relu_conv2_fused_kernel(%arg0: i32, %arg1: memref<392x128xf32, #tpu.memory_space<vmem>>, %arg2: memref<1x128xf32, #tpu.memory_space<vmem>>, %arg3: memref<1x128xf32, #tpu.memory_space<vmem>>, %arg4: memref<128x128xbf16, #tpu.memory_space<vmem>>, %arg5: memref<392x128xf32, #tpu.memory_space<vmem>>) attributes {dimension_semantics = [#tpu.dimension_semantics<arbitrary>], iteration_bounds = array<i64: 1>, scalar_prefetch = 0 : i64, scratch_operands = 0 : i64, tpu.core_type = #tpu.core_type<tc>, window_params = [{pipeline_mode = #tpu.pipeline_mode<synchronous>, transform_indices = @transform_0, window_bounds = array<i64: 392, 128>}, {pipeline_mode = #tpu.pipeline_mode<synchronous>, transform_indices = @transform_1, window_bounds = array<i64: 1, 128>}, {pipeline_mode = #tpu.pipeline_mode<synchronous>, transform_indices = @transform_2, window_bounds = array<i64: 1, 128>}, {pipeline_mode = #tpu.pipeline_mode<synchronous>, transform_indices = @transform_3, window_bounds = array<i64: 128, 128>}, {pipeline_mode = #tpu.pipeline_mode<synchronous>, transform_indices = @transform_4, window_bounds = array<i64: 392, 128>}]} {
    %c0 = arith.constant 0 : index
    %c0_0 = arith.constant 0 : index
    %0 = vector.load %arg1[%c0, %c0_0] : memref<392x128xf32, #tpu.memory_space<vmem>>, vector<392x128xf32>
    %cst = arith.constant dense<0.000000e+00> : vector<128xf32>
    %1 = vector.multi_reduction <add>, %0, %cst [0] : vector<392x128xf32> to vector<128xf32>
    %2 = vector.shape_cast %1 : vector<128xf32> to vector<1x128xf32>
    %cst_1 = arith.constant 0.00255102036 : f32
    %3 = vector.broadcast %cst_1 : f32 to vector<1x128xf32>
    %4 = arith.mulf %2, %3 : vector<1x128xf32>
    %5 = arith.mulf %0, %0 : vector<392x128xf32>
    %cst_2 = arith.constant dense<0.000000e+00> : vector<128xf32>
    %6 = vector.multi_reduction <add>, %5, %cst_2 [0] : vector<392x128xf32> to vector<128xf32>
    %7 = vector.shape_cast %6 : vector<128xf32> to vector<1x128xf32>
    %cst_3 = arith.constant 0.00255102036 : f32
    %8 = vector.broadcast %cst_3 : f32 to vector<1x128xf32>
    %9 = arith.mulf %7, %8 : vector<1x128xf32>
    %10 = arith.mulf %4, %4 : vector<1x128xf32>
    %11 = arith.subf %9, %10 : vector<1x128xf32>
    %cst_4 = arith.constant 0.000000e+00 : f32
    %12 = vector.broadcast %cst_4 : f32 to vector<1x128xf32>
    %13 = arith.maximumf %11, %12 : vector<1x128xf32>
    %c0_5 = arith.constant 0 : index
    %c0_6 = arith.constant 0 : index
    %14 = vector.load %arg2[%c0_5, %c0_6] : memref<1x128xf32, #tpu.memory_space<vmem>>, vector<1x128xf32>
    %cst_7 = arith.constant 9.99999974E-6 : f32
    %15 = vector.broadcast %cst_7 : f32 to vector<1x128xf32>
    %16 = arith.addf %13, %15 : vector<1x128xf32>
    %17 = math.rsqrt %16 : vector<1x128xf32>
    %18 = arith.mulf %14, %17 : vector<1x128xf32>
    %c0_8 = arith.constant 0 : index
    %c0_9 = arith.constant 0 : index
    %19 = vector.load %arg3[%c0_8, %c0_9] : memref<1x128xf32, #tpu.memory_space<vmem>>, vector<1x128xf32>
    %20 = arith.mulf %4, %18 : vector<1x128xf32>
    %21 = arith.subf %19, %20 : vector<1x128xf32>
    %22 = vector.broadcast %18 : vector<1x128xf32> to vector<392x128xf32>
    %23 = arith.mulf %0, %22 : vector<392x128xf32>
    %24 = vector.broadcast %21 : vector<1x128xf32> to vector<392x128xf32>
    %25 = arith.addf %23, %24 : vector<392x128xf32>
    %cst_10 = arith.constant 0.000000e+00 : f32
    %26 = vector.broadcast %cst_10 : f32 to vector<392x128xf32>
    %27 = arith.maximumf %25, %26 : vector<392x128xf32>
    %28 = arith.truncf %27 : vector<392x128xf32> to vector<392x128xbf16>
    %c0_11 = arith.constant 0 : index
    %c0_12 = arith.constant 0 : index
    %29 = vector.load %arg4[%c0_11, %c0_12] : memref<128x128xbf16, #tpu.memory_space<vmem>>, vector<128x128xbf16>
    %cst_13 = arith.constant dense<0.000000e+00> : vector<392x128xf32>
    %30 = tpu.matmul %28, %29, %cst_13 {dimension_numbers = #tpu.dot_dimension_numbers<[1], [0], [0], [1], [0, 0, 1, 1], [], []>} : vector<392x128xbf16>, vector<128x128xbf16>, vector<392x128xf32> -> vector<392x128xf32>
    %c0_14 = arith.constant 0 : index
    %c0_15 = arith.constant 0 : index
    %31 = vector.load %arg5[%c0_14, %c0_15] : memref<392x128xf32, #tpu.memory_space<vmem>>, vector<392x128xf32>
    tpu.vector_store %arg5[%c0_14, %c0_15], %30 {strides = array<i32>} : memref<392x128xf32, #tpu.memory_space<vmem>>, vector<392x128xf32>,
    return
  }
  func.func @transform_0(%arg0: i32) -> (i32, i32) {
    %c0_i32 = arith.constant 0 : i32
    %c0_i32_0 = arith.constant 0 : i32
    %c0_i32_1 = arith.constant 0 : i32
    return %c0_i32, %c0_i32_0 : i32, i32
  }
  func.func @transform_1(%arg0: i32) -> (i32, i32) {
    %c0_i32 = arith.constant 0 : i32
    %c0_i32_0 = arith.constant 0 : i32
    %c0_i32_1 = arith.constant 0 : i32
    return %c0_i32, %c0_i32_0 : i32, i32
  }
  func.func @transform_2(%arg0: i32) -> (i32, i32) {
    %c0_i32 = arith.constant 0 : i32
    %c0_i32_0 = arith.constant 0 : i32
    %c0_i32_1 = arith.constant 0 : i32
    return %c0_i32, %c0_i32_0 : i32, i32
  }
  func.func @transform_3(%arg0: i32) -> (i32, i32) {
    %c0_i32 = arith.constant 0 : i32
    %c0_i32_0 = arith.constant 0 : i32
    %c0_i32_1 = arith.constant 0 : i32
    return %c0_i32, %c0_i32_0 : i32, i32
  }
  func.func @transform_4(%arg0: i32) -> (i32, i32) {
    %c0_i32 = arith.constant 0 : i32
    %c0_i32_0 = arith.constant 0 : i32
    %c0_i32_1 = arith.constant 0 : i32
    return %c0_i32, %c0_i32_0 : i32, i32
  }
}

</mosaic_0001>

<llo_original>
// kernel: generator_forward.3
$region0: #{generator_forward.3}
  #allocation0 [shape = 'u32[]', space=smem, size = 0x4, offset = 0x4, fixed_abs, tag = 'smem constant byte address 0x4 - core index']
  #allocation1 [shape = 'u32[72,128]{1,0:T(1,128)}', space=vmem, size = 0x9000, scoped, tag = 'internal scratch']
  %s0 = inlined_call_operand.vmem [shape: bf16[2,32], index: 0, kind: input, shape index: {}]
  %s1 = inlined_call_operand.hbm [shape: bf16[32,12544], index: 1, kind: input, shape index: {}]
  %s2 = inlined_call_operand.hbm [shape: f32[1,12544], index: 2, kind: input, shape index: {}]
  %s3 = inlined_call_operand.vmem [shape: bf16[2,12544], index: 3, kind: output, shape index: {}]
  %s4 = sld [smem:[#allocation0]]
  $region30: #{generator_forward.3} parent=0
    _
  %s6 = ssub.s32 1, %s4
  %s7 = scalar_select 0, %s6, %s4
  $region1: #{generator_forward.3} parent=0
    #allocation2 [shape = 'u8[802816]{0}', space=vmem, size = 0xc4000, scoped, tag = 'input window, operand 1, single buffered']
    #allocation3 [shape = 's32[1]{0}', space=sflag, size = 0x4, scoped, tag = 'scoped memory for generator_forward.3']
    #allocation4 [shape = 'u8[50176]{0}', space=vmem, size = 0xc400, scoped, tag = 'input window, operand 2, single buffered']
    #allocation5 [shape = 's32[1]{0}', space=sflag, size = 0x4, scoped, tag = 'scoped memory for generator_forward.3']
    %8 = vsyncpa [#allocation3], 0
    %9 = vsyncpa [#allocation5], 0
    // Predicated region
    $region2: #{generator_forward.3} parent=1 // pred_check
      _
    $region3: #{generator_forward.3} parent=1 // pred_check_branch
      %11 = sbr.rel (0) target = $region5
    $region4: #{generator_forward.3} parent=1 // pred_region
      _
    $region5: #{generator_forward.3} parent=1 // pred_fallthru
      _
    // Predicated region
    $region6: #{generator_forward.3} parent=1 // pred_check
      _
    $region7: #{generator_forward.3} parent=1 // pred_check_branch
      %13 = sbr.rel (0) target = $region9
    $region8: #{generator_forward.3} parent=1 // pred_region
      %15 = vsyncadd [#allocation3], 0
      %s16 = sshll.u32 %s1, 4
      %s17 = int_to_ptr.hbm [resolvable:$true] %s16
      %s18 = sshll.u32 [#allocation2], 4
      %s19 = int_to_ptr.vmem [resolvable:$true] %s18
      %24 = dma.hbm_to_vmem [thread:$0]  %s17, 25088, %s19, [#allocation3], 6272, 6272, 392
    $region9: #{generator_forward.3} parent=1 // pred_fallthru
      _
    // Predicated region
    $region10: #{generator_forward.3} parent=1 // pred_check
      _
    $region11: #{generator_forward.3} parent=1 // pred_check_branch
      %26 = sbr.rel (0) target = $region13
    $region12: #{generator_forward.3} parent=1 // pred_region
      %28 = vsyncadd [#allocation5], 0
      %s30 = sshll.u32 %s2, 4
      %s31 = int_to_ptr.hbm [resolvable:$true] %s30
      %s32 = sshll.u32 [#allocation4], 4
      %s33 = int_to_ptr.vmem [resolvable:$true] %s32
      %35 = dma.hbm_to_vmem [thread:$0]  %s31, 1568, %s33, [#allocation5]
    $region13: #{generator_forward.3} parent=1 // pred_fallthru
      _
    // Predicated region
    $region14: #{generator_forward.3} parent=1 // pred_check
      _
    $region15: #{generator_forward.3} parent=1 // pred_check_branch
      %37 = sbr.rel (0) target = $region17
    $region16: #{generator_forward.3} parent=1 // pred_region
      %39 = dma.done [#allocation3], 25088
    $region17: #{generator_forward.3} parent=1 // pred_fallthru
      _
    // Predicated region
    $region18: #{generator_forward.3} parent=1 // pred_check
      _
    $region19: #{generator_forward.3} parent=1 // pred_check_branch
      %41 = sbr.rel (0) target = $region21
    $region20: #{generator_forward.3} parent=1 // pred_region
      %43 = dma.done [#allocation5], 1568
    $region21: #{generator_forward.3} parent=1 // pred_fallthru
      _
    %v45 = vld [vmem:[%s0] sm:$0x1]
    %v46 = vld [vmem:[#allocation2] sm:$0xff]
    %v47 = vld [vmem:[#allocation2 + $0x8] sm:$0xff]
    %v48 = vld [vmem:[#allocation2 + $0x10] sm:$0xff]
    %v49 = vld [vmem:[#allocation2 + $0x18] sm:$0xff]
    %v50 = vld [vmem:[#allocation2 + $0x20] sm:$0xff]
    %v51 = vld [vmem:[#allocation2 + $0x28] sm:$0xff]
    %v52 = vld [vmem:[#allocation2 + $0x30] sm:$0xff]
    %v53 = vld [vmem:[#allocation2 + $0x38] sm:$0xff]
    %v54 = vld [vmem:[#allocation2 + $0x40] sm:$0xff]
    %v55 = vld [vmem:[#allocation2 + $0x48] sm:$0xff]
    %v56 = vld [vmem:[#allocation2 + $0x50] sm:$0xff]
    %v57 = vld [vmem:[#allocation2 + $0x58] sm:$0xff]
    %v58 = vld [vmem:[#allocation2 + $0x60] sm:$0xff]
    %v59 = vld [vmem:[#allocation2 + $0x68] sm:$0xff]
    %v60 = vld [vmem:[#allocation2 + $0x70] sm:$0xff]
    %v61 = vld [vmem:[#allocation2 + $0x78] sm:$0xff]
    %v62 = vld [vmem:[#allocation2 + $0x80] sm:$0xff]
    %v63 = vld [vmem:[#allocation2 + $0x88] sm:$0xff]
    %v64 = vld [vmem:[#allocation2 + $0x90] sm:$0xff]
    %v65 = vld [vmem:[#allocation2 + $0x98] sm:$0xff]
    %v66 = vld [vmem:[#allocation2 + $0xa0] sm:$0xff]
    %v67 = vld [vmem:[#allocation2 + $0xa8] sm:$0xff]
    %v68 = vld [vmem:[#allocation2 + $0xb0] sm:$0xff]
    %v69 = vld [vmem:[#allocation2 + $0xb8] sm:$0xff]
    %v70 = vld [vmem:[#allocation2 + $0xc0] sm:$0xff]
    %v71 = vld [vmem:[#allocation2 + $0xc8] sm:$0xff]
    %v72 = vld [vmem:[#allocation2 + $0xd0] sm:$0xff]
    %v73 = vld [vmem:[#allocation2 + $0xd8] sm:$0xff]
    %v74 = vld [vmem:[#allocation2 + $0xe0] sm:$0xff]
    %v75 = vld [vmem:[#allocation2 + $0xe8] sm:$0xff]
    %v76 = vld [vmem:[#allocation2 + $0xf0] sm:$0xff]
    %v77 = vld [vmem:[#allocation2 + $0xf8] sm:$0xff]
    %v78 = vld [vmem:[#allocation2 + $0x100] sm:$0xff]
    %v79 = vld [vmem:[#allocation2 + $0x108] sm:$0xff]
    %v80 = vld [vmem:[#allocation2 + $0x110] sm:$0xff]
    %v81 = vld [vmem:[#allocation2 + $0x118] sm:$0xff]
    %v82 = vld [vmem:[#allocation2 + $0x120] sm:$0xff]
    %v83 = vld [vmem:[#allocation2 + $0x128] sm:$0xff]
    %v84 = vld [vmem:[#allocation2 + $0x130] sm:$0xff]
    %v85 = vld [vmem:[#allocation2 + $0x138] sm:$0xff]
    %v86 = vld [vmem:[#allocation2 + $0x140] sm:$0xff]
    %v87 = vld [vmem:[#allocation2 + $0x148] sm:$0xff]
    %v88 = vld [vmem:[#allocation2 + $0x150] sm:$0xff]
    %v89 = vld [vmem:[#allocation2 + $0x158] sm:$0xff]
    %v90 = vld [vmem:[#allocation2 + $0x160] sm:$0xff]
    %v91 = vld [vmem:[#allocation2 + $0x168] sm:$0xff]
    %v92 = vld [vmem:[#allocation2 + $0x170] sm:$0xff]
    %v93 = vld [vmem:[#allocation2 + $0x178] sm:$0xff]
    %v94 = vld [vmem:[#allocation2 + $0x180] sm:$0xff]
    %v95 = vld [vmem:[#allocation2 + $0x188] sm:$0xff]
    %v96 = vld [vmem:[#allocation2 + $0x190] sm:$0xff]
    %v97 = vld [vmem:[#allocation2 + $0x198] sm:$0xff]
    %v98 = vld [vmem:[#allocation2 + $0x1a0] sm:$0xff]
    %v99 = vld [vmem:[#allocation2 + $0x1a8] sm:$0xff]
    %v100 = vld [vmem:[#allocation2 + $0x1b0] sm:$0xff]
    %v101 = vld [vmem:[#allocation2 + $0x1b8] sm:$0xff]
    %v102 = vld [vmem:[#allocation2 + $0x1c0] sm:$0xff]
    %v103 = vld [vmem:[#allocation2 + $0x1c8] sm:$0xff]
    %v104 = vld [vmem:[#allocation2 + $0x1d0] sm:$0xff]
    %v105 = vld [vmem:[#allocation2 + $0x1d8] sm:$0xff]
    %v106 = vld [vmem:[#allocation2 + $0x1e0] sm:$0xff]
    %v107 = vld [vmem:[#allocation2 + $0x1e8] sm:$0xff]
    %v108 = vld [vmem:[#allocation2 + $0x1f0] sm:$0xff]
    %v109 = vld [vmem:[#allocation2 + $0x1f8] sm:$0xff]
    %v110 = vld [vmem:[#allocation2 + $0x200] sm:$0xff]
    %v111 = vld [vmem:[#allocation2 + $0x208] sm:$0xff]
    %v112 = vld [vmem:[#allocation2 + $0x210] sm:$0xff]
    %v113 = vld [vmem:[#allocation2 + $0x218] sm:$0xff]
    %v114 = vld [vmem:[#allocation2 + $0x220] sm:$0xff]
    %v115 = vld [vmem:[#allocation2 + $0x228] sm:$0xff]
    %v116 = vld [vmem:[#allocation2 + $0x230] sm:$0xff]
    %v117 = vld [vmem:[#allocation2 + $0x238] sm:$0xff]
    %v118 = vld [vmem:[#allocation2 + $0x240] sm:$0xff]
    %v119 = vld [vmem:[#allocation2 + $0x248] sm:$0xff]
    %v120 = vld [vmem:[#allocation2 + $0x250] sm:$0xff]
    %v121 = vld [vmem:[#allocation2 + $0x258] sm:$0xff]
    %v122 = vld [vmem:[#allocation2 + $0x260] sm:$0xff]
    %v123 = vld [vmem:[#allocation2 + $0x268] sm:$0xff]
    %v124 = vld [vmem:[#allocation2 + $0x270] sm:$0xff]
    %v125 = vld [vmem:[#allocation2 + $0x278] sm:$0xff]
    %v126 = vld [vmem:[#allocation2 + $0x280] sm:$0xff]
    %v127 = vld [vmem:[#allocation2 + $0x288] sm:$0xff]
    %v128 = vld [vmem:[#allocation2 + $0x290] sm:$0xff]
    %v129 = vld [vmem:[#allocation2 + $0x298] sm:$0xff]
    %v130 = vld [vmem:[#allocation2 + $0x2a0] sm:$0xff]
    %v131 = vld [vmem:[#allocation2 + $0x2a8] sm:$0xff]
    %v132 = vld [vmem:[#allocation2 + $0x2b0] sm:$0xff]
    %v133 = vld [vmem:[#allocation2 + $0x2b8] sm:$0xff]
    %v134 = vld [vmem:[#allocation2 + $0x2c0] sm:$0xff]
    %v135 = vld [vmem:[#allocation2 + $0x2c8] sm:$0xff]
    %v136 = vld [vmem:[#allocation2 + $0x2d0] sm:$0xff]
    %v137 = vld [vmem:[#allocation2 + $0x2d8] sm:$0xff]
    %v138 = vld [vmem:[#allocation2 + $0x2e0] sm:$0xff]
    %v139 = vld [vmem:[#allocation2 + $0x2e8] sm:$0xff]
    %v140 = vld [vmem:[#allocation2 + $0x2f0] sm:$0xff]
    %v141 = vld [vmem:[#allocation2 + $0x2f8] sm:$0xff]
    %v142 = vld [vmem:[#allocation2 + $0x300] sm:$0xff]
    %v143 = vld [vmem:[#allocation2 + $0x308] sm:$0xff]
    %v144 = vld [vmem:[#allocation2 + $0x310] sm:$0xff]
    %v145 = vld [vmem:[#allocation2 + $0x318] sm:$0xff]
    %v146 = vld [vmem:[#allocation2 + $0x320] sm:$0xff]
    %v147 = vld [vmem:[#allocation2 + $0x328] sm:$0xff]
    %v148 = vld [vmem:[#allocation2 + $0x330] sm:$0xff]
    %v149 = vld [vmem:[#allocation2 + $0x338] sm:$0xff]
    %v150 = vld [vmem:[#allocation2 + $0x340] sm:$0xff]
    %v151 = vld [vmem:[#allocation2 + $0x348] sm:$0xff]
    %v152 = vld [vmem:[#allocation2 + $0x350] sm:$0xff]
    %v153 = vld [vmem:[#allocation2 + $0x358] sm:$0xff]
    %v154 = vld [vmem:[#allocation2 + $0x360] sm:$0xff]
    %v155 = vld [vmem:[#allocation2 + $0x368] sm:$0xff]
    %v156 = vld [vmem:[#allocation2 + $0x370] sm:$0xff]
    %v157 = vld [vmem:[#allocation2 + $0x378] sm:$0xff]
    %v158 = vld [vmem:[#allocation2 + $0x380] sm:$0xff]
    %v159 = vld [vmem:[#allocation2 + $0x388] sm:$0xff]
    %v160 = vld [vmem:[#allocation2 + $0x390] sm:$0xff]
    %v161 = vld [vmem:[#allocation2 + $0x398] sm:$0xff]
    %v162 = vld [vmem:[#allocation2 + $0x3a0] sm:$0xff]
    %v163 = vld [vmem:[#allocation2 + $0x3a8] sm:$0xff]
    %v164 = vld [vmem:[#allocation2 + $0x3b0] sm:$0xff]
    %v165 = vld [vmem:[#allocation2 + $0x3b8] sm:$0xff]
    %v166 = vld [vmem:[#allocation2 + $0x3c0] sm:$0xff]
    %v167 = vld [vmem:[#allocation2 + $0x3c8] sm:$0xff]
    %v168 = vld [vmem:[#allocation2 + $0x3d0] sm:$0xff]
    %v169 = vld [vmem:[#allocation2 + $0x3d8] sm:$0xff]
    %v170 = vld [vmem:[#allocation2 + $0x3e0] sm:$0xff]
    %v171 = vld [vmem:[#allocation2 + $0x3e8] sm:$0xff]
    %v172 = vld [vmem:[#allocation2 + $0x3f0] sm:$0xff]
    %v173 = vld [vmem:[#allocation2 + $0x3f8] sm:$0xff]
    %v174 = vld [vmem:[#allocation2 + $0x400] sm:$0xff]
    %v175 = vld [vmem:[#allocation2 + $0x408] sm:$0xff]
    %v176 = vld [vmem:[#allocation2 + $0x410] sm:$0xff]
    %v177 = vld [vmem:[#allocation2 + $0x418] sm:$0xff]
    %v178 = vld [vmem:[#allocation2 + $0x420] sm:$0xff]
    %v179 = vld [vmem:[#allocation2 + $0x428] sm:$0xff]
    %v180 = vld [vmem:[#allocation2 + $0x430] sm:$0xff]
    %v181 = vld [vmem:[#allocation2 + $0x438] sm:$0xff]
    %v182 = vld [vmem:[#allocation2 + $0x440] sm:$0xff]
    %v183 = vld [vmem:[#allocation2 + $0x448] sm:$0xff]
    %v184 = vld [vmem:[#allocation2 + $0x450] sm:$0xff]
    %v185 = vld [vmem:[#allocation2 + $0x458] sm:$0xff]
    %v186 = vld [vmem:[#allocation2 + $0x460] sm:$0xff]
    %v187 = vld [vmem:[#allocation2 + $0x468] sm:$0xff]
    %v188 = vld [vmem:[#allocation2 + $0x470] sm:$0xff]
    %v189 = vld [vmem:[#allocation2 + $0x478] sm:$0xff]
    %v190 = vld [vmem:[#allocation2 + $0x480] sm:$0xff]
    %v191 = vld [vmem:[#allocation2 + $0x488] sm:$0xff]
    %v192 = vld [vmem:[#allocation2 + $0x490] sm:$0xff]
    %v193 = vld [vmem:[#allocation2 + $0x498] sm:$0xff]
    %v194 = vld [vmem:[#allocation2 + $0x4a0] sm:$0xff]
    %v195 = vld [vmem:[#allocation2 + $0x4a8] sm:$0xff]
    %v196 = vld [vmem:[#allocation2 + $0x4b0] sm:$0xff]
    %v197 = vld [vmem:[#allocation2 + $0x4b8] sm:$0xff]
    %v198 = vld [vmem:[#allocation2 + $0x4c0] sm:$0xff]
    %v199 = vld [vmem:[#allocation2 + $0x4c8] sm:$0xff]
    %v200 = vld [vmem:[#allocation2 + $0x4d0] sm:$0xff]
    %v201 = vld [vmem:[#allocation2 + $0x4d8] sm:$0xff]
    %v202 = vld [vmem:[#allocation2 + $0x4e0] sm:$0xff]
    %v203 = vld [vmem:[#allocation2 + $0x4e8] sm:$0xff]
    %v204 = vld [vmem:[#allocation2 + $0x4f0] sm:$0xff]
    %v205 = vld [vmem:[#allocation2 + $0x4f8] sm:$0xff]
    %v206 = vld [vmem:[#allocation2 + $0x500] sm:$0xff]
    %v207 = vld [vmem:[#allocation2 + $0x508] sm:$0xff]
    %v208 = vld [vmem:[#allocation2 + $0x510] sm:$0xff]
    %v209 = vld [vmem:[#allocation2 + $0x518] sm:$0xff]
    %v210 = vld [vmem:[#allocation2 + $0x520] sm:$0xff]
    %v211 = vld [vmem:[#allocation2 + $0x528] sm:$0xff]
    %v212 = vld [vmem:[#allocation2 + $0x530] sm:$0xff]
    %v213 = vld [vmem:[#allocation2 + $0x538] sm:$0xff]
    %v214 = vld [vmem:[#allocation2 + $0x540] sm:$0xff]
    %v215 = vld [vmem:[#allocation2 + $0x548] sm:$0xff]
    %v216 = vld [vmem:[#allocation2 + $0x550] sm:$0xff]
    %v217 = vld [vmem:[#allocation2 + $0x558] sm:$0xff]
    %v218 = vld [vmem:[#allocation2 + $0x560] sm:$0xff]
    %v219 = vld [vmem:[#allocation2 + $0x568] sm:$0xff]
    %v220 = vld [vmem:[#allocation2 + $0x570] sm:$0xff]
    %v221 = vld [vmem:[#allocation2 + $0x578] sm:$0xff]
    %v222 = vld [vmem:[#allocation2 + $0x580] sm:$0xff]
    %v223 = vld [vmem:[#allocation2 + $0x588] sm:$0xff]
    %v224 = vld [vmem:[#allocation2 + $0x590] sm:$0xff]
    %v225 = vld [vmem:[#allocation2 + $0x598] sm:$0xff]
    %v226 = vld [vmem:[#allocation2 + $0x5a0] sm:$0xff]
    %v227 = vld [vmem:[#allocation2 + $0x5a8] sm:$0xff]
    %v228 = vld [vmem:[#allocation2 + $0x5b0] sm:$0xff]
    %v229 = vld [vmem:[#allocation2 + $0x5b8] sm:$0xff]
    %v230 = vld [vmem:[#allocation2 + $0x5c0] sm:$0xff]
    %v231 = vld [vmem:[#allocation2 + $0x5c8] sm:$0xff]
    %v232 = vld [vmem:[#allocation2 + $0x5d0] sm:$0xff]
    %v233 = vld [vmem:[#allocation2 + $0x5d8] sm:$0xff]
    %v234 = vld [vmem:[#allocation2 + $0x5e0] sm:$0xff]
    %v235 = vld [vmem:[#allocation2 + $0x5e8] sm:$0xff]
    %v236 = vld [vmem:[#allocation2 + $0x5f0] sm:$0xff]
    %v237 = vld [vmem:[#allocation2 + $0x5f8] sm:$0xff]
    %v238 = vld [vmem:[#allocation2 + $0x600] sm:$0xff]
    %v239 = vld [vmem:[#allocation2 + $0x608] sm:$0xff]
    %v240 = vld [vmem:[#allocation2 + $0x610] sm:$0xff]
    %v241 = vld [vmem:[#allocation2 + $0x618] sm:$0xff]
    %v242 = vld [vmem:[#allocation4] sm:$0xff]
    %v243 = vld [vmem:[#allocation4 + $0x8] sm:$0xff]
    %v244 = vld [vmem:[#allocation4 + $0x10] sm:$0xff]
    %v245 = vld [vmem:[#allocation4 + $0x18] sm:$0xff]
    %v246 = vld [vmem:[#allocation4 + $0x20] sm:$0xff]
    %v247 = vld [vmem:[#allocation4 + $0x28] sm:$0xff]
    %v248 = vld [vmem:[#allocation4 + $0x30] sm:$0xff]
    %v249 = vld [vmem:[#allocation4 + $0x38] sm:$0xff]
    %v250 = vld [vmem:[#allocation4 + $0x40] sm:$0xff]
    %v251 = vld [vmem:[#allocation4 + $0x48] sm:$0xff]
    %v252 = vld [vmem:[#allocation4 + $0x50] sm:$0xff]
    %v253 = vld [vmem:[#allocation4 + $0x58] sm:$0xff]
    %v254 = vld [vmem:[#allocation4 + $0x60] sm:$0x3]
    %v268 = vperm.slane %v242, 0
    %v269 = vperm.slane %v242, 1
    %v270 = vperm.slane %v242, 2
    %v271 = vperm.slane %v242, 3
    %v272 = vperm.slane %v242, 4
    %v273 = vperm.slane %v242, 5
    %v274 = vperm.slane %v242, 6
    %v275 = vperm.slane %v242, 7
    %v276 = vperm.slane %v243, 0
    %v277 = vperm.slane %v243, 1
    %v278 = vperm.slane %v243, 2
    %v279 = vperm.slane %v243, 3
    %v280 = vperm.slane %v243, 4
    %v281 = vperm.slane %v243, 5
    %v282 = vperm.slane %v243, 6
    %v283 = vperm.slane %v243, 7
    %v284 = vperm.slane %v244, 0
    %v285 = vperm.slane %v244, 1
    %v286 = vperm.slane %v244, 2
    %v287 = vperm.slane %v244, 3
    %v288 = vperm.slane %v244, 4
    %v289 = vperm.slane %v244, 5
    %v290 = vperm.slane %v244, 6
    %v291 = vperm.slane %v244, 7
    %v292 = vperm.slane %v245, 0
    %v293 = vperm.slane %v245, 1
    %v294 = vperm.slane %v245, 2
    %v295 = vperm.slane %v245, 3
    %v296 = vperm.slane %v245, 4
    %v297 = vperm.slane %v245, 5
    %v298 = vperm.slane %v245, 6
    %v299 = vperm.slane %v245, 7
    %v300 = vperm.slane %v246, 0
    %v301 = vperm.slane %v246, 1
    %v302 = vperm.slane %v246, 2
    %v303 = vperm.slane %v246, 3
    %v304 = vperm.slane %v246, 4
    %v305 = vperm.slane %v246, 5
    %v306 = vperm.slane %v246, 6
    %v307 = vperm.slane %v246, 7
    %v308 = vperm.slane %v247, 0
    %v309 = vperm.slane %v247, 1
    %v310 = vperm.slane %v247, 2
    %v311 = vperm.slane %v247, 3
    %v312 = vperm.slane %v247, 4
    %v313 = vperm.slane %v247, 5
    %v314 = vperm.slane %v247, 6
    %v315 = vperm.slane %v247, 7
    %v316 = vperm.slane %v248, 0
    %v317 = vperm.slane %v248, 1
    %v318 = vperm.slane %v248, 2
    %v319 = vperm.slane %v248, 3
    %v320 = vperm.slane %v248, 4
    %v321 = vperm.slane %v248, 5
    %v322 = vperm.slane %v248, 6
    %v323 = vperm.slane %v248, 7
    %v324 = vperm.slane %v249, 0
    %v325 = vperm.slane %v249, 1
    %v326 = vperm.slane %v249, 2
    %v327 = vperm.slane %v249, 3
    %v328 = vperm.slane %v249, 4
    %v329 = vperm.slane %v249, 5
    %v330 = vperm.slane %v249, 6
    %v331 = vperm.slane %v249, 7
    %v332 = vperm.slane %v250, 0
    %v333 = vperm.slane %v250, 1
    %v334 = vperm.slane %v250, 2
    %v335 = vperm.slane %v250, 3
    %v336 = vperm.slane %v250, 4
    %v337 = vperm.slane %v250, 5
    %v338 = vperm.slane %v250, 6
    %v339 = vperm.slane %v250, 7
    %v340 = vperm.slane %v251, 0
    %v341 = vperm.slane %v251, 1
    %v342 = vperm.slane %v251, 2
    %v343 = vperm.slane %v251, 3
    %v344 = vperm.slane %v251, 4
    %v345 = vperm.slane %v251, 5
    %v346 = vperm.slane %v251, 6
    %v347 = vperm.slane %v251, 7
    %v348 = vperm.slane %v252, 0
    %v349 = vperm.slane %v252, 1
    %v350 = vperm.slane %v252, 2
    %v351 = vperm.slane %v252, 3
    %v352 = vperm.slane %v252, 4
    %v353 = vperm.slane %v252, 5
    %v354 = vperm.slane %v252, 6
    %v355 = vperm.slane %v252, 7
    %v356 = vperm.slane %v253, 0
    %v357 = vperm.slane %v253, 1
    %v358 = vperm.slane %v253, 2
    %v359 = vperm.slane %v253, 3
    %v360 = vperm.slane %v253, 4
    %v361 = vperm.slane %v253, 5
    %v362 = vperm.slane %v253, 6
    %v363 = vperm.slane %v253, 7
    %v364 = vperm.slane %v254, 0
    %v365 = vperm.slane %v254, 1
    %v660 = vunpack.c.l.b16 %v46
    %v661 = vunpack.c.h.b16 %v46
    %v662 = vunpack.c.l.b16 %v47
    %v663 = vunpack.c.h.b16 %v47
    %v664 = vunpack.c.l.b16 %v48
    %v665 = vunpack.c.h.b16 %v48
    %v666 = vunpack.c.l.b16 %v49
    %v667 = vunpack.c.h.b16 %v49
    %v668 = vunpack.c.l.b16 %v50
    %v669 = vunpack.c.h.b16 %v50
    %v670 = vunpack.c.l.b16 %v51
    %v671 = vunpack.c.h.b16 %v51
    %v672 = vunpack.c.l.b16 %v52
    %v673 = vunpack.c.h.b16 %v52
    %v674 = vunpack.c.l.b16 %v53
    %v675 = vunpack.c.h.b16 %v53
    %v676 = vunpack.c.l.b16 %v54
    %v677 = vunpack.c.h.b16 %v54
    %v678 = vunpack.c.l.b16 %v55
    %v679 = vunpack.c.h.b16 %v55
    %v680 = vunpack.c.l.b16 %v56
    %v681 = vunpack.c.h.b16 %v56
    %v682 = vunpack.c.l.b16 %v57
    %v683 = vunpack.c.h.b16 %v57
    %v684 = vunpack.c.l.b16 %v58
    %v685 = vunpack.c.h.b16 %v58
    %v686 = vunpack.c.l.b16 %v59
    %v687 = vunpack.c.h.b16 %v59
    %v688 = vunpack.c.l.b16 %v60
    %v689 = vunpack.c.h.b16 %v60
    %v690 = vunpack.c.l.b16 %v61
    %v691 = vunpack.c.h.b16 %v61
    %v692 = vunpack.c.l.b16 %v62
    %v693 = vunpack.c.h.b16 %v62
    %v694 = vunpack.c.l.b16 %v63
    %v695 = vunpack.c.h.b16 %v63
    %v696 = vunpack.c.l.b16 %v64
    %v697 = vunpack.c.h.b16 %v64
    %v698 = vunpack.c.l.b16 %v65
    %v699 = vunpack.c.h.b16 %v65
    %v700 = vunpack.c.l.b16 %v66
    %v701 = vunpack.c.h.b16 %v66
    %v702 = vunpack.c.l.b16 %v67
    %v703 = vunpack.c.h.b16 %v67
    %v704 = vunpack.c.l.b16 %v68
    %v705 = vunpack.c.h.b16 %v68
    %v706 = vunpack.c.l.b16 %v69
    %v707 = vunpack.c.h.b16 %v69
    %v708 = vunpack.c.l.b16 %v70
    %v709 = vunpack.c.h.b16 %v70
    %v710 = vunpack.c.l.b16 %v71
    %v711 = vunpack.c.h.b16 %v71
    %v712 = vunpack.c.l.b16 %v72
    %v713 = vunpack.c.h.b16 %v72
    %v714 = vunpack.c.l.b16 %v73
    %v715 = vunpack.c.h.b16 %v73
    %v716 = vunpack.c.l.b16 %v74
    %v717 = vunpack.c.h.b16 %v74
    %v718 = vunpack.c.l.b16 %v75
    %v719 = vunpack.c.h.b16 %v75
    %v720 = vunpack.c.l.b16 %v76
    %v721 = vunpack.c.h.b16 %v76
    %v722 = vunpack.c.l.b16 %v77
    %v723 = vunpack.c.h.b16 %v77
    %v724 = vunpack.c.l.b16 %v78
    %v725 = vunpack.c.h.b16 %v78
    %v726 = vunpack.c.l.b16 %v79
    %v727 = vunpack.c.h.b16 %v79
    %v728 = vunpack.c.l.b16 %v80
    %v729 = vunpack.c.h.b16 %v80
    %v730 = vunpack.c.l.b16 %v81
    %v731 = vunpack.c.h.b16 %v81
    %v732 = vunpack.c.l.b16 %v82
    %v733 = vunpack.c.h.b16 %v82
    %v734 = vunpack.c.l.b16 %v83
    %v735 = vunpack.c.h.b16 %v83
    %v736 = vunpack.c.l.b16 %v84
    %v737 = vunpack.c.h.b16 %v84
    %v738 = vunpack.c.l.b16 %v85
    %v739 = vunpack.c.h.b16 %v85
    %v740 = vunpack.c.l.b16 %v86
    %v741 = vunpack.c.h.b16 %v86
    %v742 = vunpack.c.l.b16 %v87
    %v743 = vunpack.c.h.b16 %v87
    %v744 = vunpack.c.l.b16 %v88
    %v745 = vunpack.c.h.b16 %v88
    %v746 = vunpack.c.l.b16 %v89
    %v747 = vunpack.c.h.b16 %v89
    %v748 = vunpack.c.l.b16 %v90
    %v749 = vunpack.c.h.b16 %v90
    %v750 = vunpack.c.l.b16 %v91
    %v751 = vunpack.c.h.b16 %v91
    %v752 = vunpack.c.l.b16 %v92
    %v753 = vunpack.c.h.b16 %v92
    %v754 = vunpack.c.l.b16 %v93
    %v755 = vunpack.c.h.b16 %v93
    %v756 = vunpack.c.l.b16 %v94
    %v757 = vunpack.c.h.b16 %v94
    %v758 = vunpack.c.l.b16 %v95
    %v759 = vunpack.c.h.b16 %v95
    %v760 = vunpack.c.l.b16 %v96
    %v761 = vunpack.c.h.b16 %v96
    %v762 = vunpack.c.l.b16 %v97
    %v763 = vunpack.c.h.b16 %v97
    %v764 = vunpack.c.l.b16 %v98
    %v765 = vunpack.c.h.b16 %v98
    %v766 = vunpack.c.l.b16 %v99
    %v767 = vunpack.c.h.b16 %v99
    %v768 = vunpack.c.l.b16 %v100
    %v769 = vunpack.c.h.b16 %v100
    %v770 = vunpack.c.l.b16 %v101
    %v771 = vunpack.c.h.b16 %v101
    %v772 = vunpack.c.l.b16 %v102
    %v773 = vunpack.c.h.b16 %v102
    %v774 = vunpack.c.l.b16 %v103
    %v775 = vunpack.c.h.b16 %v103
    %v776 = vunpack.c.l.b16 %v104
    %v777 = vunpack.c.h.b16 %v104
    %v778 = vunpack.c.l.b16 %v105
    %v779 = vunpack.c.h.b16 %v105
    %v780 = vunpack.c.l.b16 %v106
    %v781 = vunpack.c.h.b16 %v106
    %v782 = vunpack.c.l.b16 %v107
    %v783 = vunpack.c.h.b16 %v107
    %v784 = vunpack.c.l.b16 %v108
    %v785 = vunpack.c.h.b16 %v108
    %v786 = vunpack.c.l.b16 %v109
    %v787 = vunpack.c.h.b16 %v109
    %v788 = vunpack.c.l.b16 %v110
    %v789 = vunpack.c.h.b16 %v110
    %v790 = vunpack.c.l.b16 %v111
    %v791 = vunpack.c.h.b16 %v111
    %v792 = vunpack.c.l.b16 %v112
    %v793 = vunpack.c.h.b16 %v112
    %v794 = vunpack.c.l.b16 %v113
    %v795 = vunpack.c.h.b16 %v113
    %v796 = vunpack.c.l.b16 %v114
    %v797 = vunpack.c.h.b16 %v114
    %v798 = vunpack.c.l.b16 %v115
    %v799 = vunpack.c.h.b16 %v115
    %v800 = vunpack.c.l.b16 %v116
    %v801 = vunpack.c.h.b16 %v116
    %v802 = vunpack.c.l.b16 %v117
    %v803 = vunpack.c.h.b16 %v117
    %v804 = vunpack.c.l.b16 %v118
    %v805 = vunpack.c.h.b16 %v118
    %v806 = vunpack.c.l.b16 %v119
    %v807 = vunpack.c.h.b16 %v119
    %v808 = vunpack.c.l.b16 %v120
    %v809 = vunpack.c.h.b16 %v120
    %v810 = vunpack.c.l.b16 %v121
    %v811 = vunpack.c.h.b16 %v121
    %v812 = vunpack.c.l.b16 %v122
    %v813 = vunpack.c.h.b16 %v122
    %v814 = vunpack.c.l.b16 %v123
    %v815 = vunpack.c.h.b16 %v123
    %v816 = vunpack.c.l.b16 %v124
    %v817 = vunpack.c.h.b16 %v124
    %v818 = vunpack.c.l.b16 %v125
    %v819 = vunpack.c.h.b16 %v125
    %v820 = vunpack.c.l.b16 %v126
    %v821 = vunpack.c.h.b16 %v126
    %v822 = vunpack.c.l.b16 %v127
    %v823 = vunpack.c.h.b16 %v127
    %v824 = vunpack.c.l.b16 %v128
    %v825 = vunpack.c.h.b16 %v128
    %v826 = vunpack.c.l.b16 %v129
    %v827 = vunpack.c.h.b16 %v129
    %v828 = vunpack.c.l.b16 %v130
    %v829 = vunpack.c.h.b16 %v130
    %v830 = vunpack.c.l.b16 %v131
    %v831 = vunpack.c.h.b16 %v131
    %v832 = vunpack.c.l.b16 %v132
    %v833 = vunpack.c.h.b16 %v132
    %v834 = vunpack.c.l.b16 %v133
    %v835 = vunpack.c.h.b16 %v133
    %v836 = vunpack.c.l.b16 %v134
    %v837 = vunpack.c.h.b16 %v134
    %v838 = vunpack.c.l.b16 %v135
    %v839 = vunpack.c.h.b16 %v135
    %v840 = vunpack.c.l.b16 %v136
    %v841 = vunpack.c.h.b16 %v136
    %v842 = vunpack.c.l.b16 %v137
    %v843 = vunpack.c.h.b16 %v137
    %v844 = vunpack.c.l.b16 %v138
    %v845 = vunpack.c.h.b16 %v138
    %v846 = vunpack.c.l.b16 %v139
    %v847 = vunpack.c.h.b16 %v139
    %v848 = vunpack.c.l.b16 %v140
    %v849 = vunpack.c.h.b16 %v140
    %v850 = vunpack.c.l.b16 %v141
    %v851 = vunpack.c.h.b16 %v141
    %v852 = vunpack.c.l.b16 %v142
    %v853 = vunpack.c.h.b16 %v142
    %v854 = vunpack.c.l.b16 %v143
    %v855 = vunpack.c.h.b16 %v143
    %v856 = vunpack.c.l.b16 %v144
    %v857 = vunpack.c.h.b16 %v144
    %v858 = vunpack.c.l.b16 %v145
    %v859 = vunpack.c.h.b16 %v145
    %v860 = vunpack.c.l.b16 %v146
    %v861 = vunpack.c.h.b16 %v146
    %v862 = vunpack.c.l.b16 %v147
    %v863 = vunpack.c.h.b16 %v147
    %v864 = vunpack.c.l.b16 %v148
    %v865 = vunpack.c.h.b16 %v148
    %v866 = vunpack.c.l.b16 %v149
    %v867 = vunpack.c.h.b16 %v149
    %v868 = vunpack.c.l.b16 %v150
    %v869 = vunpack.c.h.b16 %v150
    %v870 = vunpack.c.l.b16 %v151
    %v871 = vunpack.c.h.b16 %v151
    %v872 = vunpack.c.l.b16 %v152
    %v873 = vunpack.c.h.b16 %v152
    %v874 = vunpack.c.l.b16 %v153
    %v875 = vunpack.c.h.b16 %v153
    %v876 = vunpack.c.l.b16 %v154
    %v877 = vunpack.c.h.b16 %v154
    %v878 = vunpack.c.l.b16 %v155
    %v879 = vunpack.c.h.b16 %v155
    %v880 = vunpack.c.l.b16 %v156
    %v881 = vunpack.c.h.b16 %v156
    %v882 = vunpack.c.l.b16 %v157
    %v883 = vunpack.c.h.b16 %v157
    %v884 = vunpack.c.l.b16 %v158
    %v885 = vunpack.c.h.b16 %v158
    %v886 = vunpack.c.l.b16 %v159
    %v887 = vunpack.c.h.b16 %v159
    %v888 = vunpack.c.l.b16 %v160
    %v889 = vunpack.c.h.b16 %v160
    %v890 = vunpack.c.l.b16 %v161
    %v891 = vunpack.c.h.b16 %v161
    %v892 = vunpack.c.l.b16 %v162
    %v893 = vunpack.c.h.b16 %v162
    %v894 = vunpack.c.l.b16 %v163
    %v895 = vunpack.c.h.b16 %v163
    %v896 = vunpack.c.l.b16 %v164
    %v897 = vunpack.c.h.b16 %v164
    %v898 = vunpack.c.l.b16 %v165
    %v899 = vunpack.c.h.b16 %v165
    %v900 = vunpack.c.l.b16 %v166
    %v901 = vunpack.c.h.b16 %v166
    %v902 = vunpack.c.l.b16 %v167
    %v903 = vunpack.c.h.b16 %v167
    %v904 = vunpack.c.l.b16 %v168
    %v905 = vunpack.c.h.b16 %v168
    %v906 = vunpack.c.l.b16 %v169
    %v907 = vunpack.c.h.b16 %v169
    %v908 = vunpack.c.l.b16 %v170
    %v909 = vunpack.c.h.b16 %v170
    %v910 = vunpack.c.l.b16 %v171
    %v911 = vunpack.c.h.b16 %v171
    %v912 = vunpack.c.l.b16 %v172
    %v913 = vunpack.c.h.b16 %v172
    %v914 = vunpack.c.l.b16 %v173
    %v915 = vunpack.c.h.b16 %v173
    %v916 = vunpack.c.l.b16 %v174
    %v917 = vunpack.c.h.b16 %v174
    %v918 = vunpack.c.l.b16 %v175
    %v919 = vunpack.c.h.b16 %v175
    %v920 = vunpack.c.l.b16 %v176
    %v921 = vunpack.c.h.b16 %v176
    %v922 = vunpack.c.l.b16 %v177
    %v923 = vunpack.c.h.b16 %v177
    %v924 = vunpack.c.l.b16 %v178
    %v925 = vunpack.c.h.b16 %v178
    %v926 = vunpack.c.l.b16 %v179
    %v927 = vunpack.c.h.b16 %v179
    %v928 = vunpack.c.l.b16 %v180
    %v929 = vunpack.c.h.b16 %v180
    %v930 = vunpack.c.l.b16 %v181
    %v931 = vunpack.c.h.b16 %v181
    %v932 = vunpack.c.l.b16 %v182
    %v933 = vunpack.c.h.b16 %v182
    %v934 = vunpack.c.l.b16 %v183
    %v935 = vunpack.c.h.b16 %v183
    %v936 = vunpack.c.l.b16 %v184
    %v937 = vunpack.c.h.b16 %v184
    %v938 = vunpack.c.l.b16 %v185
    %v939 = vunpack.c.h.b16 %v185
    %v940 = vunpack.c.l.b16 %v186
    %v941 = vunpack.c.h.b16 %v186
    %v942 = vunpack.c.l.b16 %v187
    %v943 = vunpack.c.h.b16 %v187
    %v944 = vunpack.c.l.b16 %v188
    %v945 = vunpack.c.h.b16 %v188
    %v946 = vunpack.c.l.b16 %v189
    %v947 = vunpack.c.h.b16 %v189
    %v948 = vunpack.c.l.b16 %v190
    %v949 = vunpack.c.h.b16 %v190
    %v950 = vunpack.c.l.b16 %v191
    %v951 = vunpack.c.h.b16 %v191
    %v952 = vunpack.c.l.b16 %v192
    %v953 = vunpack.c.h.b16 %v192
    %v954 = vunpack.c.l.b16 %v193
    %v955 = vunpack.c.h.b16 %v193
    %v956 = vunpack.c.l.b16 %v194
    %v957 = vunpack.c.h.b16 %v194
    %v958 = vunpack.c.l.b16 %v195
    %v959 = vunpack.c.h.b16 %v195
    %v960 = vunpack.c.l.b16 %v196
    %v961 = vunpack.c.h.b16 %v196
    %v962 = vunpack.c.l.b16 %v197
    %v963 = vunpack.c.h.b16 %v197
    %v964 = vunpack.c.l.b16 %v198
    %v965 = vunpack.c.h.b16 %v198
    %v966 = vunpack.c.l.b16 %v199
    %v967 = vunpack.c.h.b16 %v199
    %v968 = vunpack.c.l.b16 %v200
    %v969 = vunpack.c.h.b16 %v200
    %v970 = vunpack.c.l.b16 %v201
    %v971 = vunpack.c.h.b16 %v201
    %v972 = vunpack.c.l.b16 %v202
    %v973 = vunpack.c.h.b16 %v202
    %v974 = vunpack.c.l.b16 %v203
    %v975 = vunpack.c.h.b16 %v203
    %v976 = vunpack.c.l.b16 %v204
    %v977 = vunpack.c.h.b16 %v204
    %v978 = vunpack.c.l.b16 %v205
    %v979 = vunpack.c.h.b16 %v205
    %v980 = vunpack.c.l.b16 %v206
    %v981 = vunpack.c.h.b16 %v206
    %v982 = vunpack.c.l.b16 %v207
    %v983 = vunpack.c.h.b16 %v207
    %v984 = vunpack.c.l.b16 %v208
    %v985 = vunpack.c.h.b16 %v208
    %v986 = vunpack.c.l.b16 %v209
    %v987 = vunpack.c.h.b16 %v209
    %v988 = vunpack.c.l.b16 %v210
    %v989 = vunpack.c.h.b16 %v210
    %v990 = vunpack.c.l.b16 %v211
    %v991 = vunpack.c.h.b16 %v211
    %v992 = vunpack.c.l.b16 %v212
    %v993 = vunpack.c.h.b16 %v212
    %v994 = vunpack.c.l.b16 %v213
    %v995 = vunpack.c.h.b16 %v213
    %v996 = vunpack.c.l.b16 %v214
    %v997 = vunpack.c.h.b16 %v214
    %v998 = vunpack.c.l.b16 %v215
    %v999 = vunpack.c.h.b16 %v215
    %v1000 = vunpack.c.l.b16 %v216
    %v1001 = vunpack.c.h.b16 %v216
    %v1002 = vunpack.c.l.b16 %v217
    %v1003 = vunpack.c.h.b16 %v217
    %v1004 = vunpack.c.l.b16 %v218
    %v1005 = vunpack.c.h.b16 %v218
    %v1006 = vunpack.c.l.b16 %v219
    %v1007 = vunpack.c.h.b16 %v219
    %v1008 = vunpack.c.l.b16 %v220
    %v1009 = vunpack.c.h.b16 %v220
    %v1010 = vunpack.c.l.b16 %v221
    %v1011 = vunpack.c.h.b16 %v221
    %v1012 = vunpack.c.l.b16 %v222
    %v1013 = vunpack.c.h.b16 %v222
    %v1014 = vunpack.c.l.b16 %v223
    %v1015 = vunpack.c.h.b16 %v223
    %v1016 = vunpack.c.l.b16 %v224
    %v1017 = vunpack.c.h.b16 %v224
    %v1018 = vunpack.c.l.b16 %v225
    %v1019 = vunpack.c.h.b16 %v225
    %v1020 = vunpack.c.l.b16 %v226
    %v1021 = vunpack.c.h.b16 %v226
    %v1022 = vunpack.c.l.b16 %v227
    %v1023 = vunpack.c.h.b16 %v227
    %v1024 = vunpack.c.l.b16 %v228
    %v1025 = vunpack.c.h.b16 %v228
    %v1026 = vunpack.c.l.b16 %v229
    %v1027 = vunpack.c.h.b16 %v229
    %v1028 = vunpack.c.l.b16 %v230
    %v1029 = vunpack.c.h.b16 %v230
    %v1030 = vunpack.c.l.b16 %v231
    %v1031 = vunpack.c.h.b16 %v231
    %v1032 = vunpack.c.l.b16 %v232
    %v1033 = vunpack.c.h.b16 %v232
    %v1034 = vunpack.c.l.b16 %v233
    %v1035 = vunpack.c.h.b16 %v233
    %v1036 = vunpack.c.l.b16 %v234
    %v1037 = vunpack.c.h.b16 %v234
    %v1038 = vunpack.c.l.b16 %v235
    %v1039 = vunpack.c.h.b16 %v235
    %v1040 = vunpack.c.l.b16 %v236
    %v1041 = vunpack.c.h.b16 %v236
    %v1042 = vunpack.c.l.b16 %v237
    %v1043 = vunpack.c.h.b16 %v237
    %v1044 = vunpack.c.l.b16 %v238
    %v1045 = vunpack.c.h.b16 %v238
    %v1046 = vunpack.c.l.b16 %v239
    %v1047 = vunpack.c.h.b16 %v239
    %v1048 = vunpack.c.l.b16 %v240
    %v1049 = vunpack.c.h.b16 %v240
    %v1050 = vunpack.c.l.b16 %v241
    %v1051 = vunpack.c.h.b16 %v241
    %v1052 = vpack.c.b16 %v758, %v660
    %v1053 = vpack.c.b16 %v759, %v661
    %v1054 = vpack.c.b16 %v760, %v662
    %v1055 = vpack.c.b16 %v761, %v663
    %v1056 = vpack.c.b16 %v762, %v664
    %v1057 = vpack.c.b16 %v763, %v665
    %v1058 = vpack.c.b16 %v764, %v666
    %v1059 = vpack.c.b16 %v765, %v667
    %v1060 = vpack.c.b16 %v766, %v668
    %v1061 = vpack.c.b16 %v767, %v669
    %v1062 = vpack.c.b16 %v768, %v670
    %v1063 = vpack.c.b16 %v769, %v671
    %v1064 = vpack.c.b16 %v770, %v672
    %v1065 = vpack.c.b16 %v771, %v673
    %v1066 = vpack.c.b16 %v772, %v674
    %v1067 = vpack.c.b16 %v773, %v675
    %v1068 = vpack.c.b16 %v774, %v676
    %v1069 = vpack.c.b16 %v775, %v677
    %v1070 = vpack.c.b16 %v776, %v678
    %v1071 = vpack.c.b16 %v777, %v679
    %v1072 = vpack.c.b16 %v778, %v680
    %v1073 = vpack.c.b16 %v779, %v681
    %v1074 = vpack.c.b16 %v780, %v682
    %v1075 = vpack.c.b16 %v781, %v683
    %v1076 = vpack.c.b16 %v782, %v684
    %v1077 = vpack.c.b16 %v783, %v685
    %v1078 = vpack.c.b16 %v784, %v686
    %v1079 = vpack.c.b16 %v785, %v687
    %v1080 = vpack.c.b16 %v786, %v688
    %v1081 = vpack.c.b16 %v787, %v689
    %v1082 = vpack.c.b16 %v788, %v690
    %v1083 = vpack.c.b16 %v789, %v691
    %v1084 = vpack.c.b16 %v790, %v692
    %v1085 = vpack.c.b16 %v791, %v693
    %v1086 = vpack.c.b16 %v792, %v694
    %v1087 = vpack.c.b16 %v793, %v695
    %v1088 = vpack.c.b16 %v794, %v696
    %v1089 = vpack.c.b16 %v795, %v697
    %v1090 = vpack.c.b16 %v796, %v698
    %v1091 = vpack.c.b16 %v797, %v699
    %v1092 = vpack.c.b16 %v798, %v700
    %v1093 = vpack.c.b16 %v799, %v701
    %v1094 = vpack.c.b16 %v800, %v702
    %v1095 = vpack.c.b16 %v801, %v703
    %v1096 = vpack.c.b16 %v802, %v704
    %v1097 = vpack.c.b16 %v803, %v705
    %v1098 = vpack.c.b16 %v804, %v706
    %v1099 = vpack.c.b16 %v805, %v707
    %v1100 = vpack.c.b16 %v806, %v708
    %v1101 = vpack.c.b16 %v807, %v709
    %v1102 = vpack.c.b16 %v808, %v710
    %v1103 = vpack.c.b16 %v809, %v711
    %v1104 = vpack.c.b16 %v810, %v712
    %v1105 = vpack.c.b16 %v811, %v713
    %v1106 = vpack.c.b16 %v812, %v714
    %v1107 = vpack.c.b16 %v813, %v715
    %v1108 = vpack.c.b16 %v814, %v716
    %v1109 = vpack.c.b16 %v815, %v717
    %v1110 = vpack.c.b16 %v816, %v718
    %v1111 = vpack.c.b16 %v817, %v719
    %v1112 = vpack.c.b16 %v818, %v720
    %v1113 = vpack.c.b16 %v819, %v721
    %v1114 = vpack.c.b16 %v820, %v722
    %v1115 = vpack.c.b16 %v821, %v723
    %v1116 = vpack.c.b16 %v822, %v724
    %v1117 = vpack.c.b16 %v823, %v725
    %v1118 = vpack.c.b16 %v824, %v726
    %v1119 = vpack.c.b16 %v825, %v727
    %v1120 = vpack.c.b16 %v826, %v728
    %v1121 = vpack.c.b16 %v827, %v729
    %v1122 = vpack.c.b16 %v828, %v730
    %v1123 = vpack.c.b16 %v829, %v731
    %v1124 = vpack.c.b16 %v830, %v732
    %v1125 = vpack.c.b16 %v831, %v733
    %v1126 = vpack.c.b16 %v832, %v734
    %v1127 = vpack.c.b16 %v833, %v735
    %v1128 = vpack.c.b16 %v834, %v736
    %v1129 = vpack.c.b16 %v835, %v737
    %v1130 = vpack.c.b16 %v836, %v738
    %v1131 = vpack.c.b16 %v837, %v739
    %v1132 = vpack.c.b16 %v838, %v740
    %v1133 = vpack.c.b16 %v839, %v741
    %v1134 = vpack.c.b16 %v840, %v742
    %v1135 = vpack.c.b16 %v841, %v743
    %v1136 = vpack.c.b16 %v842, %v744
    %v1137 = vpack.c.b16 %v843, %v745
    %v1138 = vpack.c.b16 %v844, %v746
    %v1139 = vpack.c.b16 %v845, %v747
    %v1140 = vpack.c.b16 %v846, %v748
    %v1141 = vpack.c.b16 %v847, %v749
    %v1142 = vpack.c.b16 %v848, %v750
    %v1143 = vpack.c.b16 %v849, %v751
    %v1144 = vpack.c.b16 %v850, %v752
    %v1145 = vpack.c.b16 %v851, %v753
    %v1146 = vpack.c.b16 %v852, %v754
    %v1147 = vpack.c.b16 %v853, %v755
    %v1148 = vpack.c.b16 %v854, %v756
    %v1149 = vpack.c.b16 %v855, %v757
    %v1150 = vpack.c.b16 %v954, %v856
    %v1151 = vpack.c.b16 %v955, %v857
    %v1152 = vpack.c.b16 %v956, %v858
    %v1153 = vpack.c.b16 %v957, %v859
    %v1154 = vpack.c.b16 %v958, %v860
    %v1155 = vpack.c.b16 %v959, %v861
    %v1156 = vpack.c.b16 %v960, %v862
    %v1157 = vpack.c.b16 %v961, %v863
    %v1158 = vpack.c.b16 %v962, %v864
    %v1159 = vpack.c.b16 %v963, %v865
    %v1160 = vpack.c.b16 %v964, %v866
    %v1161 = vpack.c.b16 %v965, %v867
    %v1162 = vpack.c.b16 %v966, %v868
    %v1163 = vpack.c.b16 %v967, %v869
    %v1164 = vpack.c.b16 %v968, %v870
    %v1165 = vpack.c.b16 %v969, %v871
    %v1166 = vpack.c.b16 %v970, %v872
    %v1167 = vpack.c.b16 %v971, %v873
    %v1168 = vpack.c.b16 %v972, %v874
    %v1169 = vpack.c.b16 %v973, %v875
    %v1170 = vpack.c.b16 %v974, %v876
    %v1171 = vpack.c.b16 %v975, %v877
    %v1172 = vpack.c.b16 %v976, %v878
    %v1173 = vpack.c.b16 %v977, %v879
    %v1174 = vpack.c.b16 %v978, %v880
    %v1175 = vpack.c.b16 %v979, %v881
    %v1176 = vpack.c.b16 %v980, %v882
    %v1177 = vpack.c.b16 %v981, %v883
    %v1178 = vpack.c.b16 %v982, %v884
    %v1179 = vpack.c.b16 %v983, %v885
    %v1180 = vpack.c.b16 %v984, %v886
    %v1181 = vpack.c.b16 %v985, %v887
    %v1182 = vpack.c.b16 %v986, %v888
    %v1183 = vpack.c.b16 %v987, %v889
    %v1184 = vpack.c.b16 %v988, %v890
    %v1185 = vpack.c.b16 %v989, %v891
    %v1186 = vpack.c.b16 %v990, %v892
    %v1187 = vpack.c.b16 %v991, %v893
    %v1188 = vpack.c.b16 %v992, %v894
    %v1189 = vpack.c.b16 %v993, %v895
    %v1190 = vpack.c.b16 %v994, %v896
    %v1191 = vpack.c.b16 %v995, %v897
    %v1192 = vpack.c.b16 %v996, %v898
    %v1193 = vpack.c.b16 %v997, %v899
    %v1194 = vpack.c.b16 %v998, %v900
    %v1195 = vpack.c.b16 %v999, %v901
    %v1196 = vpack.c.b16 %v1000, %v902
    %v1197 = vpack.c.b16 %v1001, %v903
    %v1198 = vpack.c.b16 %v1002, %v904
    %v1199 = vpack.c.b16 %v1003, %v905
    %v1200 = vpack.c.b16 %v1004, %v906
    %v1201 = vpack.c.b16 %v1005, %v907
    %v1202 = vpack.c.b16 %v1006, %v908
    %v1203 = vpack.c.b16 %v1007, %v909
    %v1204 = vpack.c.b16 %v1008, %v910
    %v1205 = vpack.c.b16 %v1009, %v911
    %v1206 = vpack.c.b16 %v1010, %v912
    %v1207 = vpack.c.b16 %v1011, %v913
    %v1208 = vpack.c.b16 %v1012, %v914
    %v1209 = vpack.c.b16 %v1013, %v915
    %v1210 = vpack.c.b16 %v1014, %v916
    %v1211 = vpack.c.b16 %v1015, %v917
    %v1212 = vpack.c.b16 %v1016, %v918
    %v1213 = vpack.c.b16 %v1017, %v919
    %v1214 = vpack.c.b16 %v1018, %v920
    %v1215 = vpack.c.b16 %v1019, %v921
    %v1216 = vpack.c.b16 %v1020, %v922
    %v1217 = vpack.c.b16 %v1021, %v923
    %v1218 = vpack.c.b16 %v1022, %v924
    %v1219 = vpack.c.b16 %v1023, %v925
    %v1220 = vpack.c.b16 %v1024, %v926
    %v1221 = vpack.c.b16 %v1025, %v927
    %v1222 = vpack.c.b16 %v1026, %v928
    %v1223 = vpack.c.b16 %v1027, %v929
    %v1224 = vpack.c.b16 %v1028, %v930
    %v1225 = vpack.c.b16 %v1029, %v931
    %v1226 = vpack.c.b16 %v1030, %v932
    %v1227 = vpack.c.b16 %v1031, %v933
    %v1228 = vpack.c.b16 %v1032, %v934
    %v1229 = vpack.c.b16 %v1033, %v935
    %v1230 = vpack.c.b16 %v1034, %v936
    %v1231 = vpack.c.b16 %v1035, %v937
    %v1232 = vpack.c.b16 %v1036, %v938
    %v1233 = vpack.c.b16 %v1037, %v939
    %v1234 = vpack.c.b16 %v1038, %v940
    %v1235 = vpack.c.b16 %v1039, %v941
    %v1236 = vpack.c.b16 %v1040, %v942
    %v1237 = vpack.c.b16 %v1041, %v943
    %v1238 = vpack.c.b16 %v1042, %v944
    %v1239 = vpack.c.b16 %v1043, %v945
    %v1240 = vpack.c.b16 %v1044, %v946
    %v1241 = vpack.c.b16 %v1045, %v947
    %v1242 = vpack.c.b16 %v1046, %v948
    %v1243 = vpack.c.b16 %v1047, %v949
    %v1244 = vpack.c.b16 %v1048, %v950
    %v1245 = vpack.c.b16 %v1049, %v951
    %v1246 = vpack.c.b16 %v1050, %v952
    %v1247 = vpack.c.b16 %v1051, %v953
    %vm1444 = vcmask 261120
    %v1446 = vsel %vm1444, %v45, 0
    %1448 = vmatpush.bf16.msra.mxu0 0
    %1449 = vmatpush.bf16.msra.mxu0 0
    %1450 = vmatpush.bf16.msra.mxu0 0
    %1451 = vmatpush.bf16.msra.mxu0 0
    %1452 = vmatpush.bf16.msra.mxu0 0
    %1453 = vmatpush.bf16.msra.mxu0 0
    %1454 = vmatpush.bf16.msra.mxu0 %v1150
    %1455 = vmatpush.bf16.msra.mxu0 %v1052
    %1456 = vmatmul.bf16.gmra.mxu0 %v1446
    %v1457 = vpop.f32.mrf.mxu0
    %v1458 = vadd.f32 %v268, %v1457
    %v1459 = vpop.f32.mrf.mxu0
    %1460 = vdwg.mxu0
    %1461 = vmatpush.bf16.msra.mxu0 0
    %1462 = vmatpush.bf16.msra.mxu0 0
    %1463 = vmatpush.bf16.msra.mxu0 0
    %1464 = vmatpush.bf16.msra.mxu0 0
    %1465 = vmatpush.bf16.msra.mxu0 0
    %1466 = vmatpush.bf16.msra.mxu0 0
    %1467 = vmatpush.bf16.msra.mxu0 %v1151
    %1468 = vmatpush.bf16.msra.mxu0 %v1053
    %1469 = vmatmul.bf16.gmra.mxu0 %v1446
    %v1470 = vpop.f32.mrf.mxu0
    %v1471 = vadd.f32 %v269, %v1470
    %v1472 = vpop.f32.mrf.mxu0
    %1473 = vdwg.mxu0
    %1474 = vmatpush.bf16.msra.mxu0 0
    %1475 = vmatpush.bf16.msra.mxu0 0
    %1476 = vmatpush.bf16.msra.mxu0 0
    %1477 = vmatpush.bf16.msra.mxu0 0
    %1478 = vmatpush.bf16.msra.mxu0 0
    %1479 = vmatpush.bf16.msra.mxu0 0
    %1480 = vmatpush.bf16.msra.mxu0 %v1152
    %1481 = vmatpush.bf16.msra.mxu0 %v1054
    %1482 = vmatmul.bf16.gmra.mxu0 %v1446
    %v1483 = vpop.f32.mrf.mxu0
    %v1484 = vadd.f32 %v270, %v1483
    %v1485 = vpop.f32.mrf.mxu0
    %1486 = vdwg.mxu0
    %1487 = vmatpush.bf16.msra.mxu0 0
    %1488 = vmatpush.bf16.msra.mxu0 0
    %1489 = vmatpush.bf16.msra.mxu0 0
    %1490 = vmatpush.bf16.msra.mxu0 0
    %1491 = vmatpush.bf16.msra.mxu0 0
    %1492 = vmatpush.bf16.msra.mxu0 0
    %1493 = vmatpush.bf16.msra.mxu0 %v1153
    %1494 = vmatpush.bf16.msra.mxu0 %v1055
    %1495 = vmatmul.bf16.gmra.mxu0 %v1446
    %v1496 = vpop.f32.mrf.mxu0
    %v1497 = vadd.f32 %v271, %v1496
    %v1498 = vpop.f32.mrf.mxu0
    %1499 = vdwg.mxu0
    %1500 = vmatpush.bf16.msra.mxu0 0
    %1501 = vmatpush.bf16.msra.mxu0 0
    %1502 = vmatpush.bf16.msra.mxu0 0
    %1503 = vmatpush.bf16.msra.mxu0 0
    %1504 = vmatpush.bf16.msra.mxu0 0
    %1505 = vmatpush.bf16.msra.mxu0 0
    %1506 = vmatpush.bf16.msra.mxu0 %v1154
    %1507 = vmatpush.bf16.msra.mxu0 %v1056
    %1508 = vmatmul.bf16.gmra.mxu0 %v1446
    %v1509 = vpop.f32.mrf.mxu0
    %v1510 = vadd.f32 %v272, %v1509
    %v1511 = vpop.f32.mrf.mxu0
    %1512 = vdwg.mxu0
    %1513 = vmatpush.bf16.msra.mxu0 0
    %1514 = vmatpush.bf16.msra.mxu0 0
    %1515 = vmatpush.bf16.msra.mxu0 0
    %1516 = vmatpush.bf16.msra.mxu0 0
    %1517 = vmatpush.bf16.msra.mxu0 0
    %1518 = vmatpush.bf16.msra.mxu0 0
    %1519 = vmatpush.bf16.msra.mxu0 %v1155
    %1520 = vmatpush.bf16.msra.mxu0 %v1057
    %1521 = vmatmul.bf16.gmra.mxu0 %v1446
    %v1522 = vpop.f32.mrf.mxu0
    %v1523 = vadd.f32 %v273, %v1522
    %v1524 = vpop.f32.mrf.mxu0
    %1525 = vdwg.mxu0
    %1526 = vmatpush.bf16.msra.mxu0 0
    %1527 = vmatpush.bf16.msra.mxu0 0
    %1528 = vmatpush.bf16.msra.mxu0 0
    %1529 = vmatpush.bf16.msra.mxu0 0
    %1530 = vmatpush.bf16.msra.mxu0 0
    %1531 = vmatpush.bf16.msra.mxu0 0
    %1532 = vmatpush.bf16.msra.mxu0 %v1156
    %1533 = vmatpush.bf16.msra.mxu0 %v1058
    %1534 = vmatmul.bf16.gmra.mxu0 %v1446
    %v1535 = vpop.f32.mrf.mxu0
    %v1536 = vadd.f32 %v274, %v1535
    %v1537 = vpop.f32.mrf.mxu0
    %1538 = vdwg.mxu0
    %1539 = vmatpush.bf16.msra.mxu0 0
    %1540 = vmatpush.bf16.msra.mxu0 0
    %1541 = vmatpush.bf16.msra.mxu0 0
    %1542 = vmatpush.bf16.msra.mxu0 0
    %1543 = vmatpush.bf16.msra.mxu0 0
    %1544 = vmatpush.bf16.msra.mxu0 0
    %1545 = vmatpush.bf16.msra.mxu0 %v1157
    %1546 = vmatpush.bf16.msra.mxu0 %v1059
    %1547 = vmatmul.bf16.gmra.mxu0 %v1446
    %v1548 = vpop.f32.mrf.mxu0
    %v1549 = vadd.f32 %v275, %v1548
    %v1550 = vpop.f32.mrf.mxu0
    %1551 = vdwg.mxu0
    %1552 = vmatpush.bf16.msra.mxu0 0
    %1553 = vmatpush.bf16.msra.mxu0 0
    %1554 = vmatpush.bf16.msra.mxu0 0
    %1555 = vmatpush.bf16.msra.mxu0 0
    %1556 = vmatpush.bf16.msra.mxu0 0
    %1557 = vmatpush.bf16.msra.mxu0 0
    %1558 = vmatpush.bf16.msra.mxu0 %v1158
    %1559 = vmatpush.bf16.msra.mxu0 %v1060
    %1560 = vmatmul.bf16.gmra.mxu0 %v1446
    %v1561 = vpop.f32.mrf.mxu0
    %v1562 = vadd.f32 %v276, %v1561
    %v1563 = vpop.f32.mrf.mxu0
    %1564 = vdwg.mxu0
    %1565 = vmatpush.bf16.msra.mxu0 0
    %1566 = vmatpush.bf16.msra.mxu0 0
    %1567 = vmatpush.bf16.msra.mxu0 0
    %1568 = vmatpush.bf16.msra.mxu0 0
    %1569 = vmatpush.bf16.msra.mxu0 0
    %1570 = vmatpush.bf16.msra.mxu0 0
    %1571 = vmatpush.bf16.msra.mxu0 %v1159
    %1572 = vmatpush.bf16.msra.mxu0 %v1061
    %1573 = vmatmul.bf16.gmra.mxu0 %v1446
    %v1574 = vpop.f32.mrf.mxu0
    %v1575 = vadd.f32 %v277, %v1574
    %v1576 = vpop.f32.mrf.mxu0
    %1577 = vdwg.mxu0
    %1578 = vmatpush.bf16.msra.mxu0 0
    %1579 = vmatpush.bf16.msra.mxu0 0
    %1580 = vmatpush.bf16.msra.mxu0 0
    %1581 = vmatpush.bf16.msra.mxu0 0
    %1582 = vmatpush.bf16.msra.mxu0 0
    %1583 = vmatpush.bf16.msra.mxu0 0
    %1584 = vmatpush.bf16.msra.mxu0 %v1160
    %1585 = vmatpush.bf16.msra.mxu0 %v1062
    %1586 = vmatmul.bf16.gmra.mxu0 %v1446
    %v1587 = vpop.f32.mrf.mxu0
    %v1588 = vadd.f32 %v278, %v1587
    %v1589 = vpop.f32.mrf.mxu0
    %1590 = vdwg.mxu0
    %1591 = vmatpush.bf16.msra.mxu0 0
    %1592 = vmatpush.bf16.msra.mxu0 0
    %1593 = vmatpush.bf16.msra.mxu0 0
    %1594 = vmatpush.bf16.msra.mxu0 0
    %1595 = vmatpush.bf16.msra.mxu0 0
    %1596 = vmatpush.bf16.msra.mxu0 0
    %1597 = vmatpush.bf16.msra.mxu0 %v1161
    %1598 = vmatpush.bf16.msra.mxu0 %v1063
    %1599 = vmatmul.bf16.gmra.mxu0 %v1446
    %v1600 = vpop.f32.mrf.mxu0
    %v1601 = vadd.f32 %v279, %v1600
    %v1602 = vpop.f32.mrf.mxu0
    %1603 = vdwg.mxu0
    %1604 = vmatpush.bf16.msra.mxu0 0
    %1605 = vmatpush.bf16.msra.mxu0 0
    %1606 = vmatpush.bf16.msra.mxu0 0
    %1607 = vmatpush.bf16.msra.mxu0 0
    %1608 = vmatpush.bf16.msra.mxu0 0
    %1609 = vmatpush.bf16.msra.mxu0 0
    %1610 = vmatpush.bf16.msra.mxu0 %v1162
    %1611 = vmatpush.bf16.msra.mxu0 %v1064
    %1612 = vmatmul.bf16.gmra.mxu0 %v1446
    %v1613 = vpop.f32.mrf.mxu0
    %v1614 = vadd.f32 %v280, %v1613
    %v1615 = vpop.f32.mrf.mxu0
    %1616 = vdwg.mxu0
    %1617 = vmatpush.bf16.msra.mxu0 0
    %1618 = vmatpush.bf16.msra.mxu0 0
    %1619 = vmatpush.bf16.msra.mxu0 0
    %1620 = vmatpush.bf16.msra.mxu0 0
    %1621 = vmatpush.bf16.msra.mxu0 0
    %1622 = vmatpush.bf16.msra.mxu0 0
    %1623 = vmatpush.bf16.msra.mxu0 %v1163
    %1624 = vmatpush.bf16.msra.mxu0 %v1065
    %1625 = vmatmul.bf16.gmra.mxu0 %v1446
    %v1626 = vpop.f32.mrf.mxu0
    %v1627 = vadd.f32 %v281, %v1626
    %v1628 = vpop.f32.mrf.mxu0
    %1629 = vdwg.mxu0
    %1630 = vmatpush.bf16.msra.mxu0 0
    %1631 = vmatpush.bf16.msra.mxu0 0
    %1632 = vmatpush.bf16.msra.mxu0 0
    %1633 = vmatpush.bf16.msra.mxu0 0
    %1634 = vmatpush.bf16.msra.mxu0 0
    %1635 = vmatpush.bf16.msra.mxu0 0
    %1636 = vmatpush.bf16.msra.mxu0 %v1164
    %1637 = vmatpush.bf16.msra.mxu0 %v1066
    %1638 = vmatmul.bf16.gmra.mxu0 %v1446
    %v1639 = vpop.f32.mrf.mxu0
    %v1640 = vadd.f32 %v282, %v1639
    %v1641 = vpop.f32.mrf.mxu0
    %1642 = vdwg.mxu0
    %1643 = vmatpush.bf16.msra.mxu0 0
    %1644 = vmatpush.bf16.msra.mxu0 0
    %1645 = vmatpush.bf16.msra.mxu0 0
    %1646 = vmatpush.bf16.msra.mxu0 0
    %1647 = vmatpush.bf16.msra.mxu0 0
    %1648 = vmatpush.bf16.msra.mxu0 0
    %1649 = vmatpush.bf16.msra.mxu0 %v1165
    %1650 = vmatpush.bf16.msra.mxu0 %v1067
    %1651 = vmatmul.bf16.gmra.mxu0 %v1446
    %v1652 = vpop.f32.mrf.mxu0
    %v1653 = vadd.f32 %v283, %v1652
    %v1654 = vpop.f32.mrf.mxu0
    %1655 = vdwg.mxu0
    %1656 = vmatpush.bf16.msra.mxu0 0
    %1657 = vmatpush.bf16.msra.mxu0 0
    %1658 = vmatpush.bf16.msra.mxu0 0
    %1659 = vmatpush.bf16.msra.mxu0 0
    %1660 = vmatpush.bf16.msra.mxu0 0
    %1661 = vmatpush.bf16.msra.mxu0 0
    %1662 = vmatpush.bf16.msra.mxu0 %v1166
    %1663 = vmatpush.bf16.msra.mxu0 %v1068
    %1664 = vmatmul.bf16.gmra.mxu0 %v1446
    %v1665 = vpop.f32.mrf.mxu0
    %v1666 = vadd.f32 %v284, %v1665
    %v1667 = vpop.f32.mrf.mxu0
    %1668 = vdwg.mxu0
    %1669 = vmatpush.bf16.msra.mxu0 0
    %1670 = vmatpush.bf16.msra.mxu0 0
    %1671 = vmatpush.bf16.msra.mxu0 0
    %1672 = vmatpush.bf16.msra.mxu0 0
    %1673 = vmatpush.bf16.msra.mxu0 0
    %1674 = vmatpush.bf16.msra.mxu0 0
    %1675 = vmatpush.bf16.msra.mxu0 %v1167
    %1676 = vmatpush.bf16.msra.mxu0 %v1069
    %1677 = vmatmul.bf16.gmra.mxu0 %v1446
    %v1678 = vpop.f32.mrf.mxu0
    %v1679 = vadd.f32 %v285, %v1678
    %v1680 = vpop.f32.mrf.mxu0
    %1681 = vdwg.mxu0
    %1682 = vmatpush.bf16.msra.mxu0 0
    %1683 = vmatpush.bf16.msra.mxu0 0
    %1684 = vmatpush.bf16.msra.mxu0 0
    %1685 = vmatpush.bf16.msra.mxu0 0
    %1686 = vmatpush.bf16.msra.mxu0 0
    %1687 = vmatpush.bf16.msra.mxu0 0
    %1688 = vmatpush.bf16.msra.mxu0 %v1168
    %1689 = vmatpush.bf16.msra.mxu0 %v1070
    %1690 = vmatmul.bf16.gmra.mxu0 %v1446
    %v1691 = vpop.f32.mrf.mxu0
    %v1692 = vadd.f32 %v286, %v1691
    %v1693 = vpop.f32.mrf.mxu0
    %1694 = vdwg.mxu0
    %1695 = vmatpush.bf16.msra.mxu0 0
    %1696 = vmatpush.bf16.msra.mxu0 0
    %1697 = vmatpush.bf16.msra.mxu0 0
    %1698 = vmatpush.bf16.msra.mxu0 0
    %1699 = vmatpush.bf16.msra.mxu0 0
    %1700 = vmatpush.bf16.msra.mxu0 0
    %1701 = vmatpush.bf16.msra.mxu0 %v1169
    %1702 = vmatpush.bf16.msra.mxu0 %v1071
    %1703 = vmatmul.bf16.gmra.mxu0 %v1446
    %v1704 = vpop.f32.mrf.mxu0
    %v1705 = vadd.f32 %v287, %v1704
    %v1706 = vpop.f32.mrf.mxu0
    %1707 = vdwg.mxu0
    %1708 = vmatpush.bf16.msra.mxu0 0
    %1709 = vmatpush.bf16.msra.mxu0 0
    %1710 = vmatpush.bf16.msra.mxu0 0
    %1711 = vmatpush.bf16.msra.mxu0 0
    %1712 = vmatpush.bf16.msra.mxu0 0
    %1713 = vmatpush.bf16.msra.mxu0 0
    %1714 = vmatpush.bf16.msra.mxu0 %v1170
    %1715 = vmatpush.bf16.msra.mxu0 %v1072
    %1716 = vmatmul.bf16.gmra.mxu0 %v1446
    %v1717 = vpop.f32.mrf.mxu0
    %v1718 = vadd.f32 %v288, %v1717
    %v1719 = vpop.f32.mrf.mxu0
    %1720 = vdwg.mxu0
    %1721 = vmatpush.bf16.msra.mxu0 0
    %1722 = vmatpush.bf16.msra.mxu0 0
    %1723 = vmatpush.bf16.msra.mxu0 0
    %1724 = vmatpush.bf16.msra.mxu0 0
    %1725 = vmatpush.bf16.msra.mxu0 0
    %1726 = vmatpush.bf16.msra.mxu0 0
    %1727 = vmatpush.bf16.msra.mxu0 %v1171
    %1728 = vmatpush.bf16.msra.mxu0 %v1073
    %1729 = vmatmul.bf16.gmra.mxu0 %v1446
    %v1730 = vpop.f32.mrf.mxu0
    %v1731 = vadd.f32 %v289, %v1730
    %v1732 = vpop.f32.mrf.mxu0
    %1733 = vdwg.mxu0
    %1734 = vmatpush.bf16.msra.mxu0 0
    %1735 = vmatpush.bf16.msra.mxu0 0
    %1736 = vmatpush.bf16.msra.mxu0 0
    %1737 = vmatpush.bf16.msra.mxu0 0
    %1738 = vmatpush.bf16.msra.mxu0 0
    %1739 = vmatpush.bf16.msra.mxu0 0
    %1740 = vmatpush.bf16.msra.mxu0 %v1172
    %1741 = vmatpush.bf16.msra.mxu0 %v1074
    %1742 = vmatmul.bf16.gmra.mxu0 %v1446
    %v1743 = vpop.f32.mrf.mxu0
    %v1744 = vadd.f32 %v290, %v1743
    %v1745 = vpop.f32.mrf.mxu0
    %1746 = vdwg.mxu0
    %1747 = vmatpush.bf16.msra.mxu0 0
    %1748 = vmatpush.bf16.msra.mxu0 0
    %1749 = vmatpush.bf16.msra.mxu0 0
    %1750 = vmatpush.bf16.msra.mxu0 0
    %1751 = vmatpush.bf16.msra.mxu0 0
    %1752 = vmatpush.bf16.msra.mxu0 0
    %1753 = vmatpush.bf16.msra.mxu0 %v1173
    %1754 = vmatpush.bf16.msra.mxu0 %v1075
    %1755 = vmatmul.bf16.gmra.mxu0 %v1446
    %v1756 = vpop.f32.mrf.mxu0
    %v1757 = vadd.f32 %v291, %v1756
    %v1758 = vpop.f32.mrf.mxu0
    %1759 = vdwg.mxu0
    %1760 = vmatpush.bf16.msra.mxu0 0
    %1761 = vmatpush.bf16.msra.mxu0 0
    %1762 = vmatpush.bf16.msra.mxu0 0
    %1763 = vmatpush.bf16.msra.mxu0 0
    %1764 = vmatpush.bf16.msra.mxu0 0
    %1765 = vmatpush.bf16.msra.mxu0 0
    %1766 = vmatpush.bf16.msra.mxu0 %v1174
    %1767 = vmatpush.bf16.msra.mxu0 %v1076
    %1768 = vmatmul.bf16.gmra.mxu0 %v1446
    %v1769 = vpop.f32.mrf.mxu0
    %v1770 = vadd.f32 %v292, %v1769
    %v1771 = vpop.f32.mrf.mxu0
    %1772 = vdwg.mxu0
    %1773 = vmatpush.bf16.msra.mxu0 0
    %1774 = vmatpush.bf16.msra.mxu0 0
    %1775 = vmatpush.bf16.msra.mxu0 0
    %1776 = vmatpush.bf16.msra.mxu0 0
    %1777 = vmatpush.bf16.msra.mxu0 0
    %1778 = vmatpush.bf16.msra.mxu0 0
    %1779 = vmatpush.bf16.msra.mxu0 %v1175
    %1780 = vmatpush.bf16.msra.mxu0 %v1077
    %1781 = vmatmul.bf16.gmra.mxu0 %v1446
    %v1782 = vpop.f32.mrf.mxu0
    %v1783 = vadd.f32 %v293, %v1782
    %v1784 = vpop.f32.mrf.mxu0
    %1785 = vdwg.mxu0
    %1786 = vmatpush.bf16.msra.mxu0 0
    %1787 = vmatpush.bf16.msra.mxu0 0
    %1788 = vmatpush.bf16.msra.mxu0 0
    %1789 = vmatpush.bf16.msra.mxu0 0
    %1790 = vmatpush.bf16.msra.mxu0 0
    %1791 = vmatpush.bf16.msra.mxu0 0
    %1792 = vmatpush.bf16.msra.mxu0 %v1176
    %1793 = vmatpush.bf16.msra.mxu0 %v1078
    %1794 = vmatmul.bf16.gmra.mxu0 %v1446
    %v1795 = vpop.f32.mrf.mxu0
    %v1796 = vadd.f32 %v294, %v1795
    %v1797 = vpop.f32.mrf.mxu0
    %1798 = vdwg.mxu0
    %1799 = vmatpush.bf16.msra.mxu0 0
    %1800 = vmatpush.bf16.msra.mxu0 0
    %1801 = vmatpush.bf16.msra.mxu0 0
    %1802 = vmatpush.bf16.msra.mxu0 0
    %1803 = vmatpush.bf16.msra.mxu0 0
    %1804 = vmatpush.bf16.msra.mxu0 0
    %1805 = vmatpush.bf16.msra.mxu0 %v1177
    %1806 = vmatpush.bf16.msra.mxu0 %v1079
    %1807 = vmatmul.bf16.gmra.mxu0 %v1446
    %v1808 = vpop.f32.mrf.mxu0
    %v1809 = vadd.f32 %v295, %v1808
    %v1810 = vpop.f32.mrf.mxu0
    %1811 = vdwg.mxu0
    %1812 = vmatpush.bf16.msra.mxu0 0
    %1813 = vmatpush.bf16.msra.mxu0 0
    %1814 = vmatpush.bf16.msra.mxu0 0
    %1815 = vmatpush.bf16.msra.mxu0 0
    %1816 = vmatpush.bf16.msra.mxu0 0
    %1817 = vmatpush.bf16.msra.mxu0 0
    %1818 = vmatpush.bf16.msra.mxu0 %v1178
    %1819 = vmatpush.bf16.msra.mxu0 %v1080
    %1820 = vmatmul.bf16.gmra.mxu0 %v1446
    %v1821 = vpop.f32.mrf.mxu0
    %v1822 = vadd.f32 %v296, %v1821
    %v1823 = vpop.f32.mrf.mxu0
    %1824 = vdwg.mxu0
    %1825 = vmatpush.bf16.msra.mxu0 0
    %1826 = vmatpush.bf16.msra.mxu0 0
    %1827 = vmatpush.bf16.msra.mxu0 0
    %1828 = vmatpush.bf16.msra.mxu0 0
    %1829 = vmatpush.bf16.msra.mxu0 0
    %1830 = vmatpush.bf16.msra.mxu0 0
    %1831 = vmatpush.bf16.msra.mxu0 %v1179
    %1832 = vmatpush.bf16.msra.mxu0 %v1081
    %1833 = vmatmul.bf16.gmra.mxu0 %v1446
    %v1834 = vpop.f32.mrf.mxu0
    %v1835 = vadd.f32 %v297, %v1834
    %v1836 = vpop.f32.mrf.mxu0
    %1837 = vdwg.mxu0
    %1838 = vmatpush.bf16.msra.mxu0 0
    %1839 = vmatpush.bf16.msra.mxu0 0
    %1840 = vmatpush.bf16.msra.mxu0 0
    %1841 = vmatpush.bf16.msra.mxu0 0
    %1842 = vmatpush.bf16.msra.mxu0 0
    %1843 = vmatpush.bf16.msra.mxu0 0
    %1844 = vmatpush.bf16.msra.mxu0 %v1180
    %1845 = vmatpush.bf16.msra.mxu0 %v1082
    %1846 = vmatmul.bf16.gmra.mxu0 %v1446
    %v1847 = vpop.f32.mrf.mxu0
    %v1848 = vadd.f32 %v298, %v1847
    %v1849 = vpop.f32.mrf.mxu0
    %1850 = vdwg.mxu0
    %1851 = vmatpush.bf16.msra.mxu0 0
    %1852 = vmatpush.bf16.msra.mxu0 0
    %1853 = vmatpush.bf16.msra.mxu0 0
    %1854 = vmatpush.bf16.msra.mxu0 0
    %1855 = vmatpush.bf16.msra.mxu0 0
    %1856 = vmatpush.bf16.msra.mxu0 0
    %1857 = vmatpush.bf16.msra.mxu0 %v1181
    %1858 = vmatpush.bf16.msra.mxu0 %v1083
    %1859 = vmatmul.bf16.gmra.mxu0 %v1446
    %v1860 = vpop.f32.mrf.mxu0
    %v1861 = vadd.f32 %v299, %v1860
    %v1862 = vpop.f32.mrf.mxu0
    %1863 = vdwg.mxu0
    %1864 = vmatpush.bf16.msra.mxu0 0
    %1865 = vmatpush.bf16.msra.mxu0 0
    %1866 = vmatpush.bf16.msra.mxu0 0
    %1867 = vmatpush.bf16.msra.mxu0 0
    %1868 = vmatpush.bf16.msra.mxu0 0
    %1869 = vmatpush.bf16.msra.mxu0 0
    %1870 = vmatpush.bf16.msra.mxu0 %v1182
    %1871 = vmatpush.bf16.msra.mxu0 %v1084
    %1872 = vmatmul.bf16.gmra.mxu0 %v1446
    %v1873 = vpop.f32.mrf.mxu0
    %v1874 = vadd.f32 %v300, %v1873
    %v1875 = vpop.f32.mrf.mxu0
    %1876 = vdwg.mxu0
    %1877 = vmatpush.bf16.msra.mxu0 0
    %1878 = vmatpush.bf16.msra.mxu0 0
    %1879 = vmatpush.bf16.msra.mxu0 0
    %1880 = vmatpush.bf16.msra.mxu0 0
    %1881 = vmatpush.bf16.msra.mxu0 0
    %1882 = vmatpush.bf16.msra.mxu0 0
    %1883 = vmatpush.bf16.msra.mxu0 %v1183
    %1884 = vmatpush.bf16.msra.mxu0 %v1085
    %1885 = vmatmul.bf16.gmra.mxu0 %v1446
    %v1886 = vpop.f32.mrf.mxu0
    %v1887 = vadd.f32 %v301, %v1886
    %v1888 = vpop.f32.mrf.mxu0
    %1889 = vdwg.mxu0
    %1890 = vmatpush.bf16.msra.mxu0 0
    %1891 = vmatpush.bf16.msra.mxu0 0
    %1892 = vmatpush.bf16.msra.mxu0 0
    %1893 = vmatpush.bf16.msra.mxu0 0
    %1894 = vmatpush.bf16.msra.mxu0 0
    %1895 = vmatpush.bf16.msra.mxu0 0
    %1896 = vmatpush.bf16.msra.mxu0 %v1184
    %1897 = vmatpush.bf16.msra.mxu0 %v1086
    %1898 = vmatmul.bf16.gmra.mxu0 %v1446
    %v1899 = vpop.f32.mrf.mxu0
    %v1900 = vadd.f32 %v302, %v1899
    %v1901 = vpop.f32.mrf.mxu0
    %1902 = vdwg.mxu0
    %1903 = vmatpush.bf16.msra.mxu0 0
    %1904 = vmatpush.bf16.msra.mxu0 0
    %1905 = vmatpush.bf16.msra.mxu0 0
    %1906 = vmatpush.bf16.msra.mxu0 0
    %1907 = vmatpush.bf16.msra.mxu0 0
    %1908 = vmatpush.bf16.msra.mxu0 0
    %1909 = vmatpush.bf16.msra.mxu0 %v1185
    %1910 = vmatpush.bf16.msra.mxu0 %v1087
    %1911 = vmatmul.bf16.gmra.mxu0 %v1446
    %v1912 = vpop.f32.mrf.mxu0
    %v1913 = vadd.f32 %v303, %v1912
    %v1914 = vpop.f32.mrf.mxu0
    %1915 = vdwg.mxu0
    %1916 = vmatpush.bf16.msra.mxu0 0
    %1917 = vmatpush.bf16.msra.mxu0 0
    %1918 = vmatpush.bf16.msra.mxu0 0
    %1919 = vmatpush.bf16.msra.mxu0 0
    %1920 = vmatpush.bf16.msra.mxu0 0
    %1921 = vmatpush.bf16.msra.mxu0 0
    %1922 = vmatpush.bf16.msra.mxu0 %v1186
    %1923 = vmatpush.bf16.msra.mxu0 %v1088
    %1924 = vmatmul.bf16.gmra.mxu0 %v1446
    %v1925 = vpop.f32.mrf.mxu0
    %v1926 = vadd.f32 %v304, %v1925
    %v1927 = vpop.f32.mrf.mxu0
    %1928 = vdwg.mxu0
    %1929 = vmatpush.bf16.msra.mxu0 0
    %1930 = vmatpush.bf16.msra.mxu0 0
    %1931 = vmatpush.bf16.msra.mxu0 0
    %1932 = vmatpush.bf16.msra.mxu0 0
    %1933 = vmatpush.bf16.msra.mxu0 0
    %1934 = vmatpush.bf16.msra.mxu0 0
    %1935 = vmatpush.bf16.msra.mxu0 %v1187
    %1936 = vmatpush.bf16.msra.mxu0 %v1089
    %1937 = vmatmul.bf16.gmra.mxu0 %v1446
    %v1938 = vpop.f32.mrf.mxu0
    %v1939 = vadd.f32 %v305, %v1938
    %v1940 = vpop.f32.mrf.mxu0
    %1941 = vdwg.mxu0
    %1942 = vmatpush.bf16.msra.mxu0 0
    %1943 = vmatpush.bf16.msra.mxu0 0
    %1944 = vmatpush.bf16.msra.mxu0 0
    %1945 = vmatpush.bf16.msra.mxu0 0
    %1946 = vmatpush.bf16.msra.mxu0 0
    %1947 = vmatpush.bf16.msra.mxu0 0
    %1948 = vmatpush.bf16.msra.mxu0 %v1188
    %1949 = vmatpush.bf16.msra.mxu0 %v1090
    %1950 = vmatmul.bf16.gmra.mxu0 %v1446
    %v1951 = vpop.f32.mrf.mxu0
    %v1952 = vadd.f32 %v306, %v1951
    %v1953 = vpop.f32.mrf.mxu0
    %1954 = vdwg.mxu0
    %1955 = vmatpush.bf16.msra.mxu0 0
    %1956 = vmatpush.bf16.msra.mxu0 0
    %1957 = vmatpush.bf16.msra.mxu0 0
    %1958 = vmatpush.bf16.msra.mxu0 0
    %1959 = vmatpush.bf16.msra.mxu0 0
    %1960 = vmatpush.bf16.msra.mxu0 0
    %1961 = vmatpush.bf16.msra.mxu0 %v1189
    %1962 = vmatpush.bf16.msra.mxu0 %v1091
    %1963 = vmatmul.bf16.gmra.mxu0 %v1446
    %v1964 = vpop.f32.mrf.mxu0
    %v1965 = vadd.f32 %v307, %v1964
    %v1966 = vpop.f32.mrf.mxu0
    %1967 = vdwg.mxu0
    %1968 = vmatpush.bf16.msra.mxu0 0
    %1969 = vmatpush.bf16.msra.mxu0 0
    %1970 = vmatpush.bf16.msra.mxu0 0
    %1971 = vmatpush.bf16.msra.mxu0 0
    %1972 = vmatpush.bf16.msra.mxu0 0
    %1973 = vmatpush.bf16.msra.mxu0 0
    %1974 = vmatpush.bf16.msra.mxu0 %v1190
    %1975 = vmatpush.bf16.msra.mxu0 %v1092
    %1976 = vmatmul.bf16.gmra.mxu0 %v1446
    %v1977 = vpop.f32.mrf.mxu0
    %v1978 = vadd.f32 %v308, %v1977
    %v1979 = vpop.f32.mrf.mxu0
    %1980 = vdwg.mxu0
    %1981 = vmatpush.bf16.msra.mxu0 0
    %1982 = vmatpush.bf16.msra.mxu0 0
    %1983 = vmatpush.bf16.msra.mxu0 0
    %1984 = vmatpush.bf16.msra.mxu0 0
    %1985 = vmatpush.bf16.msra.mxu0 0
    %1986 = vmatpush.bf16.msra.mxu0 0
    %1987 = vmatpush.bf16.msra.mxu0 %v1191
    %1988 = vmatpush.bf16.msra.mxu0 %v1093
    %1989 = vmatmul.bf16.gmra.mxu0 %v1446
    %v1990 = vpop.f32.mrf.mxu0
    %v1991 = vadd.f32 %v309, %v1990
    %v1992 = vpop.f32.mrf.mxu0
    %1993 = vdwg.mxu0
    %1994 = vmatpush.bf16.msra.mxu0 0
    %1995 = vmatpush.bf16.msra.mxu0 0
    %1996 = vmatpush.bf16.msra.mxu0 0
    %1997 = vmatpush.bf16.msra.mxu0 0
    %1998 = vmatpush.bf16.msra.mxu0 0
    %1999 = vmatpush.bf16.msra.mxu0 0
    %2000 = vmatpush.bf16.msra.mxu0 %v1192
    %2001 = vmatpush.bf16.msra.mxu0 %v1094
    %2002 = vmatmul.bf16.gmra.mxu0 %v1446
    %v2003 = vpop.f32.mrf.mxu0
    %v2004 = vadd.f32 %v310, %v2003
    %v2005 = vpop.f32.mrf.mxu0
    %2006 = vdwg.mxu0
    %2007 = vmatpush.bf16.msra.mxu0 0
    %2008 = vmatpush.bf16.msra.mxu0 0
    %2009 = vmatpush.bf16.msra.mxu0 0
    %2010 = vmatpush.bf16.msra.mxu0 0
    %2011 = vmatpush.bf16.msra.mxu0 0
    %2012 = vmatpush.bf16.msra.mxu0 0
    %2013 = vmatpush.bf16.msra.mxu0 %v1193
    %2014 = vmatpush.bf16.msra.mxu0 %v1095
    %2015 = vmatmul.bf16.gmra.mxu0 %v1446
    %v2016 = vpop.f32.mrf.mxu0
    %v2017 = vadd.f32 %v311, %v2016
    %v2018 = vpop.f32.mrf.mxu0
    %2019 = vdwg.mxu0
    %2020 = vmatpush.bf16.msra.mxu0 0
    %2021 = vmatpush.bf16.msra.mxu0 0
    %2022 = vmatpush.bf16.msra.mxu0 0
    %2023 = vmatpush.bf16.msra.mxu0 0
    %2024 = vmatpush.bf16.msra.mxu0 0
    %2025 = vmatpush.bf16.msra.mxu0 0
    %2026 = vmatpush.bf16.msra.mxu0 %v1194
    %2027 = vmatpush.bf16.msra.mxu0 %v1096
    %2028 = vmatmul.bf16.gmra.mxu0 %v1446
    %v2029 = vpop.f32.mrf.mxu0
    %v2030 = vadd.f32 %v312, %v2029
    %v2031 = vpop.f32.mrf.mxu0
    %2032 = vdwg.mxu0
    %2033 = vmatpush.bf16.msra.mxu0 0
    %2034 = vmatpush.bf16.msra.mxu0 0
    %2035 = vmatpush.bf16.msra.mxu0 0
    %2036 = vmatpush.bf16.msra.mxu0 0
    %2037 = vmatpush.bf16.msra.mxu0 0
    %2038 = vmatpush.bf16.msra.mxu0 0
    %2039 = vmatpush.bf16.msra.mxu0 %v1195
    %2040 = vmatpush.bf16.msra.mxu0 %v1097
    %2041 = vmatmul.bf16.gmra.mxu0 %v1446
    %v2042 = vpop.f32.mrf.mxu0
    %v2043 = vadd.f32 %v313, %v2042
    %v2044 = vpop.f32.mrf.mxu0
    %2045 = vdwg.mxu0
    %2046 = vmatpush.bf16.msra.mxu0 0
    %2047 = vmatpush.bf16.msra.mxu0 0
    %2048 = vmatpush.bf16.msra.mxu0 0
    %2049 = vmatpush.bf16.msra.mxu0 0
    %2050 = vmatpush.bf16.msra.mxu0 0
    %2051 = vmatpush.bf16.msra.mxu0 0
    %2052 = vmatpush.bf16.msra.mxu0 %v1196
    %2053 = vmatpush.bf16.msra.mxu0 %v1098
    %2054 = vmatmul.bf16.gmra.mxu0 %v1446
    %v2055 = vpop.f32.mrf.mxu0
    %v2056 = vadd.f32 %v314, %v2055
    %v2057 = vpop.f32.mrf.mxu0
    %2058 = vdwg.mxu0
    %2059 = vmatpush.bf16.msra.mxu0 0
    %2060 = vmatpush.bf16.msra.mxu0 0
    %2061 = vmatpush.bf16.msra.mxu0 0
    %2062 = vmatpush.bf16.msra.mxu0 0
    %2063 = vmatpush.bf16.msra.mxu0 0
    %2064 = vmatpush.bf16.msra.mxu0 0
    %2065 = vmatpush.bf16.msra.mxu0 %v1197
    %2066 = vmatpush.bf16.msra.mxu0 %v1099
    %2067 = vmatmul.bf16.gmra.mxu0 %v1446
    %v2068 = vpop.f32.mrf.mxu0
    %v2069 = vadd.f32 %v315, %v2068
    %v2070 = vpop.f32.mrf.mxu0
    %2071 = vdwg.mxu0
    %2072 = vmatpush.bf16.msra.mxu0 0
    %2073 = vmatpush.bf16.msra.mxu0 0
    %2074 = vmatpush.bf16.msra.mxu0 0
    %2075 = vmatpush.bf16.msra.mxu0 0
    %2076 = vmatpush.bf16.msra.mxu0 0
    %2077 = vmatpush.bf16.msra.mxu0 0
    %2078 = vmatpush.bf16.msra.mxu0 %v1198
    %2079 = vmatpush.bf16.msra.mxu0 %v1100
    %2080 = vmatmul.bf16.gmra.mxu0 %v1446
    %v2081 = vpop.f32.mrf.mxu0
    %v2082 = vadd.f32 %v316, %v2081
    %v2083 = vpop.f32.mrf.mxu0
    %2084 = vdwg.mxu0
    %2085 = vmatpush.bf16.msra.mxu0 0
    %2086 = vmatpush.bf16.msra.mxu0 0
    %2087 = vmatpush.bf16.msra.mxu0 0
    %2088 = vmatpush.bf16.msra.mxu0 0
    %2089 = vmatpush.bf16.msra.mxu0 0
    %2090 = vmatpush.bf16.msra.mxu0 0
    %2091 = vmatpush.bf16.msra.mxu0 %v1199
    %2092 = vmatpush.bf16.msra.mxu0 %v1101
    %2093 = vmatmul.bf16.gmra.mxu0 %v1446
    %v2094 = vpop.f32.mrf.mxu0
    %v2095 = vadd.f32 %v317, %v2094
    %v2096 = vpop.f32.mrf.mxu0
    %2097 = vdwg.mxu0
    %2098 = vmatpush.bf16.msra.mxu0 0
    %2099 = vmatpush.bf16.msra.mxu0 0
    %2100 = vmatpush.bf16.msra.mxu0 0
    %2101 = vmatpush.bf16.msra.mxu0 0
    %2102 = vmatpush.bf16.msra.mxu0 0
    %2103 = vmatpush.bf16.msra.mxu0 0
    %2104 = vmatpush.bf16.msra.mxu0 %v1200
    %2105 = vmatpush.bf16.msra.mxu0 %v1102
    %2106 = vmatmul.bf16.gmra.mxu0 %v1446
    %v2107 = vpop.f32.mrf.mxu0
    %v2108 = vadd.f32 %v318, %v2107
    %v2109 = vpop.f32.mrf.mxu0
    %2110 = vdwg.mxu0
    %2111 = vmatpush.bf16.msra.mxu0 0
    %2112 = vmatpush.bf16.msra.mxu0 0
    %2113 = vmatpush.bf16.msra.mxu0 0
    %2114 = vmatpush.bf16.msra.mxu0 0
    %2115 = vmatpush.bf16.msra.mxu0 0
    %2116 = vmatpush.bf16.msra.mxu0 0
    %2117 = vmatpush.bf16.msra.mxu0 %v1201
    %2118 = vmatpush.bf16.msra.mxu0 %v1103
    %2119 = vmatmul.bf16.gmra.mxu0 %v1446
    %v2120 = vpop.f32.mrf.mxu0
    %v2121 = vadd.f32 %v319, %v2120
    %v2122 = vpop.f32.mrf.mxu0
    %2123 = vdwg.mxu0
    %2124 = vmatpush.bf16.msra.mxu0 0
    %2125 = vmatpush.bf16.msra.mxu0 0
    %2126 = vmatpush.bf16.msra.mxu0 0
    %2127 = vmatpush.bf16.msra.mxu0 0
    %2128 = vmatpush.bf16.msra.mxu0 0
    %2129 = vmatpush.bf16.msra.mxu0 0
    %2130 = vmatpush.bf16.msra.mxu0 %v1202
    %2131 = vmatpush.bf16.msra.mxu0 %v1104
    %2132 = vmatmul.bf16.gmra.mxu0 %v1446
    %v2133 = vpop.f32.mrf.mxu0
    %v2134 = vadd.f32 %v320, %v2133
    %v2135 = vpop.f32.mrf.mxu0
    %2136 = vdwg.mxu0
    %2137 = vmatpush.bf16.msra.mxu0 0
    %2138 = vmatpush.bf16.msra.mxu0 0
    %2139 = vmatpush.bf16.msra.mxu0 0
    %2140 = vmatpush.bf16.msra.mxu0 0
    %2141 = vmatpush.bf16.msra.mxu0 0
    %2142 = vmatpush.bf16.msra.mxu0 0
    %2143 = vmatpush.bf16.msra.mxu0 %v1203
    %2144 = vmatpush.bf16.msra.mxu0 %v1105
    %2145 = vmatmul.bf16.gmra.mxu0 %v1446
    %v2146 = vpop.f32.mrf.mxu0
    %v2147 = vadd.f32 %v321, %v2146
    %v2148 = vpop.f32.mrf.mxu0
    %2149 = vdwg.mxu0
    %2150 = vmatpush.bf16.msra.mxu0 0
    %2151 = vmatpush.bf16.msra.mxu0 0
    %2152 = vmatpush.bf16.msra.mxu0 0
    %2153 = vmatpush.bf16.msra.mxu0 0
    %2154 = vmatpush.bf16.msra.mxu0 0
    %2155 = vmatpush.bf16.msra.mxu0 0
    %2156 = vmatpush.bf16.msra.mxu0 %v1204
    %2157 = vmatpush.bf16.msra.mxu0 %v1106
    %2158 = vmatmul.bf16.gmra.mxu0 %v1446
    %v2159 = vpop.f32.mrf.mxu0
    %v2160 = vadd.f32 %v322, %v2159
    %v2161 = vpop.f32.mrf.mxu0
    %2162 = vdwg.mxu0
    %2163 = vmatpush.bf16.msra.mxu0 0
    %2164 = vmatpush.bf16.msra.mxu0 0
    %2165 = vmatpush.bf16.msra.mxu0 0
    %2166 = vmatpush.bf16.msra.mxu0 0
    %2167 = vmatpush.bf16.msra.mxu0 0
    %2168 = vmatpush.bf16.msra.mxu0 0
    %2169 = vmatpush.bf16.msra.mxu0 %v1205
    %2170 = vmatpush.bf16.msra.mxu0 %v1107
    %2171 = vmatmul.bf16.gmra.mxu0 %v1446
    %v2172 = vpop.f32.mrf.mxu0
    %v2173 = vadd.f32 %v323, %v2172
    %v2174 = vpop.f32.mrf.mxu0
    %2175 = vdwg.mxu0
    %2176 = vmatpush.bf16.msra.mxu0 0
    %2177 = vmatpush.bf16.msra.mxu0 0
    %2178 = vmatpush.bf16.msra.mxu0 0
    %2179 = vmatpush.bf16.msra.mxu0 0
    %2180 = vmatpush.bf16.msra.mxu0 0
    %2181 = vmatpush.bf16.msra.mxu0 0
    %2182 = vmatpush.bf16.msra.mxu0 %v1206
    %2183 = vmatpush.bf16.msra.mxu0 %v1108
    %2184 = vmatmul.bf16.gmra.mxu0 %v1446
    %v2185 = vpop.f32.mrf.mxu0
    %v2186 = vadd.f32 %v324, %v2185
    %v2187 = vpop.f32.mrf.mxu0
    %2188 = vdwg.mxu0
    %2189 = vmatpush.bf16.msra.mxu0 0
    %2190 = vmatpush.bf16.msra.mxu0 0
    %2191 = vmatpush.bf16.msra.mxu0 0
    %2192 = vmatpush.bf16.msra.mxu0 0
    %2193 = vmatpush.bf16.msra.mxu0 0
    %2194 = vmatpush.bf16.msra.mxu0 0
    %2195 = vmatpush.bf16.msra.mxu0 %v1207
    %2196 = vmatpush.bf16.msra.mxu0 %v1109
    %2197 = vmatmul.bf16.gmra.mxu0 %v1446
    %v2198 = vpop.f32.mrf.mxu0
    %v2199 = vadd.f32 %v325, %v2198
    %v2200 = vpop.f32.mrf.mxu0
    %2201 = vdwg.mxu0
    %2202 = vmatpush.bf16.msra.mxu0 0
    %2203 = vmatpush.bf16.msra.mxu0 0
    %2204 = vmatpush.bf16.msra.mxu0 0
    %2205 = vmatpush.bf16.msra.mxu0 0
    %2206 = vmatpush.bf16.msra.mxu0 0
    %2207 = vmatpush.bf16.msra.mxu0 0
    %2208 = vmatpush.bf16.msra.mxu0 %v1208
    %2209 = vmatpush.bf16.msra.mxu0 %v1110
    %2210 = vmatmul.bf16.gmra.mxu0 %v1446
    %v2211 = vpop.f32.mrf.mxu0
    %v2212 = vadd.f32 %v326, %v2211
    %v2213 = vpop.f32.mrf.mxu0
    %2214 = vdwg.mxu0
    %2215 = vmatpush.bf16.msra.mxu0 0
    %2216 = vmatpush.bf16.msra.mxu0 0
    %2217 = vmatpush.bf16.msra.mxu0 0
    %2218 = vmatpush.bf16.msra.mxu0 0
    %2219 = vmatpush.bf16.msra.mxu0 0
    %2220 = vmatpush.bf16.msra.mxu0 0
    %2221 = vmatpush.bf16.msra.mxu0 %v1209
    %2222 = vmatpush.bf16.msra.mxu0 %v1111
    %2223 = vmatmul.bf16.gmra.mxu0 %v1446
    %v2224 = vpop.f32.mrf.mxu0
    %v2225 = vadd.f32 %v327, %v2224
    %v2226 = vpop.f32.mrf.mxu0
    %2227 = vdwg.mxu0
    %2228 = vmatpush.bf16.msra.mxu0 0
    %2229 = vmatpush.bf16.msra.mxu0 0
    %2230 = vmatpush.bf16.msra.mxu0 0
    %2231 = vmatpush.bf16.msra.mxu0 0
    %2232 = vmatpush.bf16.msra.mxu0 0
    %2233 = vmatpush.bf16.msra.mxu0 0
    %2234 = vmatpush.bf16.msra.mxu0 %v1210
    %2235 = vmatpush.bf16.msra.mxu0 %v1112
    %2236 = vmatmul.bf16.gmra.mxu0 %v1446
    %v2237 = vpop.f32.mrf.mxu0
    %v2238 = vadd.f32 %v328, %v2237
    %v2239 = vpop.f32.mrf.mxu0
    %2240 = vdwg.mxu0
    %2241 = vmatpush.bf16.msra.mxu0 0
    %2242 = vmatpush.bf16.msra.mxu0 0
    %2243 = vmatpush.bf16.msra.mxu0 0
    %2244 = vmatpush.bf16.msra.mxu0 0
    %2245 = vmatpush.bf16.msra.mxu0 0
    %2246 = vmatpush.bf16.msra.mxu0 0
    %2247 = vmatpush.bf16.msra.mxu0 %v1211
    %2248 = vmatpush.bf16.msra.mxu0 %v1113
    %2249 = vmatmul.bf16.gmra.mxu0 %v1446
    %v2250 = vpop.f32.mrf.mxu0
    %v2251 = vadd.f32 %v329, %v2250
    %v2252 = vpop.f32.mrf.mxu0
    %2253 = vdwg.mxu0
    %2254 = vmatpush.bf16.msra.mxu0 0
    %2255 = vmatpush.bf16.msra.mxu0 0
    %2256 = vmatpush.bf16.msra.mxu0 0
    %2257 = vmatpush.bf16.msra.mxu0 0
    %2258 = vmatpush.bf16.msra.mxu0 0
    %2259 = vmatpush.bf16.msra.mxu0 0
    %2260 = vmatpush.bf16.msra.mxu0 %v1212
    %2261 = vmatpush.bf16.msra.mxu0 %v1114
    %2262 = vmatmul.bf16.gmra.mxu0 %v1446
    %v2263 = vpop.f32.mrf.mxu0
    %v2264 = vadd.f32 %v330, %v2263
    %v2265 = vpop.f32.mrf.mxu0
    %2266 = vdwg.mxu0
    %2267 = vmatpush.bf16.msra.mxu0 0
    %2268 = vmatpush.bf16.msra.mxu0 0
    %2269 = vmatpush.bf16.msra.mxu0 0
    %2270 = vmatpush.bf16.msra.mxu0 0
    %2271 = vmatpush.bf16.msra.mxu0 0
    %2272 = vmatpush.bf16.msra.mxu0 0
    %2273 = vmatpush.bf16.msra.mxu0 %v1213
    %2274 = vmatpush.bf16.msra.mxu0 %v1115
    %2275 = vmatmul.bf16.gmra.mxu0 %v1446
    %v2276 = vpop.f32.mrf.mxu0
    %v2277 = vadd.f32 %v331, %v2276
    %v2278 = vpop.f32.mrf.mxu0
    %2279 = vdwg.mxu0
    %2280 = vmatpush.bf16.msra.mxu0 0
    %2281 = vmatpush.bf16.msra.mxu0 0
    %2282 = vmatpush.bf16.msra.mxu0 0
    %2283 = vmatpush.bf16.msra.mxu0 0
    %2284 = vmatpush.bf16.msra.mxu0 0
    %2285 = vmatpush.bf16.msra.mxu0 0
    %2286 = vmatpush.bf16.msra.mxu0 %v1214
    %2287 = vmatpush.bf16.msra.mxu0 %v1116
    %2288 = vmatmul.bf16.gmra.mxu0 %v1446
    %v2289 = vpop.f32.mrf.mxu0
    %v2290 = vadd.f32 %v332, %v2289
    %v2291 = vpop.f32.mrf.mxu0
    %2292 = vdwg.mxu0
    %2293 = vmatpush.bf16.msra.mxu0 0
    %2294 = vmatpush.bf16.msra.mxu0 0
    %2295 = vmatpush.bf16.msra.mxu0 0
    %2296 = vmatpush.bf16.msra.mxu0 0
    %2297 = vmatpush.bf16.msra.mxu0 0
    %2298 = vmatpush.bf16.msra.mxu0 0
    %2299 = vmatpush.bf16.msra.mxu0 %v1215
    %2300 = vmatpush.bf16.msra.mxu0 %v1117
    %2301 = vmatmul.bf16.gmra.mxu0 %v1446
    %v2302 = vpop.f32.mrf.mxu0
    %v2303 = vadd.f32 %v333, %v2302
    %v2304 = vpop.f32.mrf.mxu0
    %2305 = vdwg.mxu0
    %2306 = vmatpush.bf16.msra.mxu0 0
    %2307 = vmatpush.bf16.msra.mxu0 0
    %2308 = vmatpush.bf16.msra.mxu0 0
    %2309 = vmatpush.bf16.msra.mxu0 0
    %2310 = vmatpush.bf16.msra.mxu0 0
    %2311 = vmatpush.bf16.msra.mxu0 0
    %2312 = vmatpush.bf16.msra.mxu0 %v1216
    %2313 = vmatpush.bf16.msra.mxu0 %v1118
    %2314 = vmatmul.bf16.gmra.mxu0 %v1446
    %v2315 = vpop.f32.mrf.mxu0
    %v2316 = vadd.f32 %v334, %v2315
    %v2317 = vpop.f32.mrf.mxu0
    %2318 = vdwg.mxu0
    %2319 = vmatpush.bf16.msra.mxu0 0
    %2320 = vmatpush.bf16.msra.mxu0 0
    %2321 = vmatpush.bf16.msra.mxu0 0
    %2322 = vmatpush.bf16.msra.mxu0 0
    %2323 = vmatpush.bf16.msra.mxu0 0
    %2324 = vmatpush.bf16.msra.mxu0 0
    %2325 = vmatpush.bf16.msra.mxu0 %v1217
    %2326 = vmatpush.bf16.msra.mxu0 %v1119
    %2327 = vmatmul.bf16.gmra.mxu0 %v1446
    %v2328 = vpop.f32.mrf.mxu0
    %v2329 = vadd.f32 %v335, %v2328
    %v2330 = vpop.f32.mrf.mxu0
    %2331 = vdwg.mxu0
    %2332 = vmatpush.bf16.msra.mxu0 0
    %2333 = vmatpush.bf16.msra.mxu0 0
    %2334 = vmatpush.bf16.msra.mxu0 0
    %2335 = vmatpush.bf16.msra.mxu0 0
    %2336 = vmatpush.bf16.msra.mxu0 0
    %2337 = vmatpush.bf16.msra.mxu0 0
    %2338 = vmatpush.bf16.msra.mxu0 %v1218
    %2339 = vmatpush.bf16.msra.mxu0 %v1120
    %2340 = vmatmul.bf16.gmra.mxu0 %v1446
    %v2341 = vpop.f32.mrf.mxu0
    %v2342 = vadd.f32 %v336, %v2341
    %v2343 = vpop.f32.mrf.mxu0
    %2344 = vdwg.mxu0
    %2345 = vmatpush.bf16.msra.mxu0 0
    %2346 = vmatpush.bf16.msra.mxu0 0
    %2347 = vmatpush.bf16.msra.mxu0 0
    %2348 = vmatpush.bf16.msra.mxu0 0
    %2349 = vmatpush.bf16.msra.mxu0 0
    %2350 = vmatpush.bf16.msra.mxu0 0
    %2351 = vmatpush.bf16.msra.mxu0 %v1219
    %2352 = vmatpush.bf16.msra.mxu0 %v1121
    %2353 = vmatmul.bf16.gmra.mxu0 %v1446
    %v2354 = vpop.f32.mrf.mxu0
    %v2355 = vadd.f32 %v337, %v2354
    %v2356 = vpop.f32.mrf.mxu0
    %2357 = vdwg.mxu0
    %2358 = vmatpush.bf16.msra.mxu0 0
    %2359 = vmatpush.bf16.msra.mxu0 0
    %2360 = vmatpush.bf16.msra.mxu0 0
    %2361 = vmatpush.bf16.msra.mxu0 0
    %2362 = vmatpush.bf16.msra.mxu0 0
    %2363 = vmatpush.bf16.msra.mxu0 0
    %2364 = vmatpush.bf16.msra.mxu0 %v1220
    %2365 = vmatpush.bf16.msra.mxu0 %v1122
    %2366 = vmatmul.bf16.gmra.mxu0 %v1446
    %v2367 = vpop.f32.mrf.mxu0
    %v2368 = vadd.f32 %v338, %v2367
    %v2369 = vpop.f32.mrf.mxu0
    %2370 = vdwg.mxu0
    %2371 = vmatpush.bf16.msra.mxu0 0
    %2372 = vmatpush.bf16.msra.mxu0 0
    %2373 = vmatpush.bf16.msra.mxu0 0
    %2374 = vmatpush.bf16.msra.mxu0 0
    %2375 = vmatpush.bf16.msra.mxu0 0
    %2376 = vmatpush.bf16.msra.mxu0 0
    %2377 = vmatpush.bf16.msra.mxu0 %v1221
    %2378 = vmatpush.bf16.msra.mxu0 %v1123
    %2379 = vmatmul.bf16.gmra.mxu0 %v1446
    %v2380 = vpop.f32.mrf.mxu0
    %v2381 = vadd.f32 %v339, %v2380
    %v2382 = vpop.f32.mrf.mxu0
    %2383 = vdwg.mxu0
    %2384 = vmatpush.bf16.msra.mxu0 0
    %2385 = vmatpush.bf16.msra.mxu0 0
    %2386 = vmatpush.bf16.msra.mxu0 0
    %2387 = vmatpush.bf16.msra.mxu0 0
    %2388 = vmatpush.bf16.msra.mxu0 0
    %2389 = vmatpush.bf16.msra.mxu0 0
    %2390 = vmatpush.bf16.msra.mxu0 %v1222
    %2391 = vmatpush.bf16.msra.mxu0 %v1124
    %2392 = vmatmul.bf16.gmra.mxu0 %v1446
    %v2393 = vpop.f32.mrf.mxu0
    %v2394 = vadd.f32 %v340, %v2393
    %v2395 = vpop.f32.mrf.mxu0
    %2396 = vdwg.mxu0
    %2397 = vmatpush.bf16.msra.mxu0 0
    %2398 = vmatpush.bf16.msra.mxu0 0
    %2399 = vmatpush.bf16.msra.mxu0 0
    %2400 = vmatpush.bf16.msra.mxu0 0
    %2401 = vmatpush.bf16.msra.mxu0 0
    %2402 = vmatpush.bf16.msra.mxu0 0
    %2403 = vmatpush.bf16.msra.mxu0 %v1223
    %2404 = vmatpush.bf16.msra.mxu0 %v1125
    %2405 = vmatmul.bf16.gmra.mxu0 %v1446
    %v2406 = vpop.f32.mrf.mxu0
    %v2407 = vadd.f32 %v341, %v2406
    %v2408 = vpop.f32.mrf.mxu0
    %2409 = vdwg.mxu0
    %2410 = vmatpush.bf16.msra.mxu0 0
    %2411 = vmatpush.bf16.msra.mxu0 0
    %2412 = vmatpush.bf16.msra.mxu0 0
    %2413 = vmatpush.bf16.msra.mxu0 0
    %2414 = vmatpush.bf16.msra.mxu0 0
    %2415 = vmatpush.bf16.msra.mxu0 0
    %2416 = vmatpush.bf16.msra.mxu0 %v1224
    %2417 = vmatpush.bf16.msra.mxu0 %v1126
    %2418 = vmatmul.bf16.gmra.mxu0 %v1446
    %v2419 = vpop.f32.mrf.mxu0
    %v2420 = vadd.f32 %v342, %v2419
    %v2421 = vpop.f32.mrf.mxu0
    %2422 = vdwg.mxu0
    %2423 = vmatpush.bf16.msra.mxu0 0
    %2424 = vmatpush.bf16.msra.mxu0 0
    %2425 = vmatpush.bf16.msra.mxu0 0
    %2426 = vmatpush.bf16.msra.mxu0 0
    %2427 = vmatpush.bf16.msra.mxu0 0
    %2428 = vmatpush.bf16.msra.mxu0 0
    %2429 = vmatpush.bf16.msra.mxu0 %v1225
    %2430 = vmatpush.bf16.msra.mxu0 %v1127
    %2431 = vmatmul.bf16.gmra.mxu0 %v1446
    %v2432 = vpop.f32.mrf.mxu0
    %v2433 = vadd.f32 %v343, %v2432
    %v2434 = vpop.f32.mrf.mxu0
    %2435 = vdwg.mxu0
    %2436 = vmatpush.bf16.msra.mxu0 0
    %2437 = vmatpush.bf16.msra.mxu0 0
    %2438 = vmatpush.bf16.msra.mxu0 0
    %2439 = vmatpush.bf16.msra.mxu0 0
    %2440 = vmatpush.bf16.msra.mxu0 0
    %2441 = vmatpush.bf16.msra.mxu0 0
    %2442 = vmatpush.bf16.msra.mxu0 %v1226
    %2443 = vmatpush.bf16.msra.mxu0 %v1128
    %2444 = vmatmul.bf16.gmra.mxu0 %v1446
    %v2445 = vpop.f32.mrf.mxu0
    %v2446 = vadd.f32 %v344, %v2445
    %v2447 = vpop.f32.mrf.mxu0
    %2448 = vdwg.mxu0
    %2449 = vmatpush.bf16.msra.mxu0 0
    %2450 = vmatpush.bf16.msra.mxu0 0
    %2451 = vmatpush.bf16.msra.mxu0 0
    %2452 = vmatpush.bf16.msra.mxu0 0
    %2453 = vmatpush.bf16.msra.mxu0 0
    %2454 = vmatpush.bf16.msra.mxu0 0
    %2455 = vmatpush.bf16.msra.mxu0 %v1227
    %2456 = vmatpush.bf16.msra.mxu0 %v1129
    %2457 = vmatmul.bf16.gmra.mxu0 %v1446
    %v2458 = vpop.f32.mrf.mxu0
    %v2459 = vadd.f32 %v345, %v2458
    %v2460 = vpop.f32.mrf.mxu0
    %2461 = vdwg.mxu0
    %2462 = vmatpush.bf16.msra.mxu0 0
    %2463 = vmatpush.bf16.msra.mxu0 0
    %2464 = vmatpush.bf16.msra.mxu0 0
    %2465 = vmatpush.bf16.msra.mxu0 0
    %2466 = vmatpush.bf16.msra.mxu0 0
    %2467 = vmatpush.bf16.msra.mxu0 0
    %2468 = vmatpush.bf16.msra.mxu0 %v1228
    %2469 = vmatpush.bf16.msra.mxu0 %v1130
    %2470 = vmatmul.bf16.gmra.mxu0 %v1446
    %v2471 = vpop.f32.mrf.mxu0
    %v2472 = vadd.f32 %v346, %v2471
    %v2473 = vpop.f32.mrf.mxu0
    %2474 = vdwg.mxu0
    %2475 = vmatpush.bf16.msra.mxu0 0
    %2476 = vmatpush.bf16.msra.mxu0 0
    %2477 = vmatpush.bf16.msra.mxu0 0
    %2478 = vmatpush.bf16.msra.mxu0 0
    %2479 = vmatpush.bf16.msra.mxu0 0
    %2480 = vmatpush.bf16.msra.mxu0 0
    %2481 = vmatpush.bf16.msra.mxu0 %v1229
    %2482 = vmatpush.bf16.msra.mxu0 %v1131
    %2483 = vmatmul.bf16.gmra.mxu0 %v1446
    %v2484 = vpop.f32.mrf.mxu0
    %v2485 = vadd.f32 %v347, %v2484
    %v2486 = vpop.f32.mrf.mxu0
    %2487 = vdwg.mxu0
    %2488 = vmatpush.bf16.msra.mxu0 0
    %2489 = vmatpush.bf16.msra.mxu0 0
    %2490 = vmatpush.bf16.msra.mxu0 0
    %2491 = vmatpush.bf16.msra.mxu0 0
    %2492 = vmatpush.bf16.msra.mxu0 0
    %2493 = vmatpush.bf16.msra.mxu0 0
    %2494 = vmatpush.bf16.msra.mxu0 %v1230
    %2495 = vmatpush.bf16.msra.mxu0 %v1132
    %2496 = vmatmul.bf16.gmra.mxu0 %v1446
    %v2497 = vpop.f32.mrf.mxu0
    %v2498 = vadd.f32 %v348, %v2497
    %v2499 = vpop.f32.mrf.mxu0
    %2500 = vdwg.mxu0
    %2501 = vmatpush.bf16.msra.mxu0 0
    %2502 = vmatpush.bf16.msra.mxu0 0
    %2503 = vmatpush.bf16.msra.mxu0 0
    %2504 = vmatpush.bf16.msra.mxu0 0
    %2505 = vmatpush.bf16.msra.mxu0 0
    %2506 = vmatpush.bf16.msra.mxu0 0
    %2507 = vmatpush.bf16.msra.mxu0 %v1231
    %2508 = vmatpush.bf16.msra.mxu0 %v1133
    %2509 = vmatmul.bf16.gmra.mxu0 %v1446
    %v2510 = vpop.f32.mrf.mxu0
    %v2511 = vadd.f32 %v349, %v2510
    %v2512 = vpop.f32.mrf.mxu0
    %2513 = vdwg.mxu0
    %2514 = vmatpush.bf16.msra.mxu0 0
    %2515 = vmatpush.bf16.msra.mxu0 0
    %2516 = vmatpush.bf16.msra.mxu0 0
    %2517 = vmatpush.bf16.msra.mxu0 0
    %2518 = vmatpush.bf16.msra.mxu0 0
    %2519 = vmatpush.bf16.msra.mxu0 0
    %2520 = vmatpush.bf16.msra.mxu0 %v1232
    %2521 = vmatpush.bf16.msra.mxu0 %v1134
    %2522 = vmatmul.bf16.gmra.mxu0 %v1446
    %v2523 = vpop.f32.mrf.mxu0
    %v2524 = vadd.f32 %v350, %v2523
    %v2525 = vpop.f32.mrf.mxu0
    %2526 = vdwg.mxu0
    %2527 = vmatpush.bf16.msra.mxu0 0
    %2528 = vmatpush.bf16.msra.mxu0 0
    %2529 = vmatpush.bf16.msra.mxu0 0
    %2530 = vmatpush.bf16.msra.mxu0 0
    %2531 = vmatpush.bf16.msra.mxu0 0
    %2532 = vmatpush.bf16.msra.mxu0 0
    %2533 = vmatpush.bf16.msra.mxu0 %v1233
    %2534 = vmatpush.bf16.msra.mxu0 %v1135
    %2535 = vmatmul.bf16.gmra.mxu0 %v1446
    %v2536 = vpop.f32.mrf.mxu0
    %v2537 = vadd.f32 %v351, %v2536
    %v2538 = vpop.f32.mrf.mxu0
    %2539 = vdwg.mxu0
    %2540 = vmatpush.bf16.msra.mxu0 0
    %2541 = vmatpush.bf16.msra.mxu0 0
    %2542 = vmatpush.bf16.msra.mxu0 0
    %2543 = vmatpush.bf16.msra.mxu0 0
    %2544 = vmatpush.bf16.msra.mxu0 0
    %2545 = vmatpush.bf16.msra.mxu0 0
    %2546 = vmatpush.bf16.msra.mxu0 %v1234
    %2547 = vmatpush.bf16.msra.mxu0 %v1136
    %2548 = vmatmul.bf16.gmra.mxu0 %v1446
    %v2549 = vpop.f32.mrf.mxu0
    %v2550 = vadd.f32 %v352, %v2549
    %v2551 = vpop.f32.mrf.mxu0
    %2552 = vdwg.mxu0
    %2553 = vmatpush.bf16.msra.mxu0 0
    %2554 = vmatpush.bf16.msra.mxu0 0
    %2555 = vmatpush.bf16.msra.mxu0 0
    %2556 = vmatpush.bf16.msra.mxu0 0
    %2557 = vmatpush.bf16.msra.mxu0 0
    %2558 = vmatpush.bf16.msra.mxu0 0
    %2559 = vmatpush.bf16.msra.mxu0 %v1235
    %2560 = vmatpush.bf16.msra.mxu0 %v1137
    %2561 = vmatmul.bf16.gmra.mxu0 %v1446
    %v2562 = vpop.f32.mrf.mxu0
    %v2563 = vadd.f32 %v353, %v2562
    %v2564 = vpop.f32.mrf.mxu0
    %2565 = vdwg.mxu0
    %2566 = vmatpush.bf16.msra.mxu0 0
    %2567 = vmatpush.bf16.msra.mxu0 0
    %2568 = vmatpush.bf16.msra.mxu0 0
    %2569 = vmatpush.bf16.msra.mxu0 0
    %2570 = vmatpush.bf16.msra.mxu0 0
    %2571 = vmatpush.bf16.msra.mxu0 0
    %2572 = vmatpush.bf16.msra.mxu0 %v1236
    %2573 = vmatpush.bf16.msra.mxu0 %v1138
    %2574 = vmatmul.bf16.gmra.mxu0 %v1446
    %v2575 = vpop.f32.mrf.mxu0
    %v2576 = vadd.f32 %v354, %v2575
    %v2577 = vpop.f32.mrf.mxu0
    %2578 = vdwg.mxu0
    %2579 = vmatpush.bf16.msra.mxu0 0
    %2580 = vmatpush.bf16.msra.mxu0 0
    %2581 = vmatpush.bf16.msra.mxu0 0
    %2582 = vmatpush.bf16.msra.mxu0 0
    %2583 = vmatpush.bf16.msra.mxu0 0
    %2584 = vmatpush.bf16.msra.mxu0 0
    %2585 = vmatpush.bf16.msra.mxu0 %v1237
    %2586 = vmatpush.bf16.msra.mxu0 %v1139
    %2587 = vmatmul.bf16.gmra.mxu0 %v1446
    %v2588 = vpop.f32.mrf.mxu0
    %v2589 = vadd.f32 %v355, %v2588
    %v2590 = vpop.f32.mrf.mxu0
    %2591 = vdwg.mxu0
    %2592 = vmatpush.bf16.msra.mxu0 0
    %2593 = vmatpush.bf16.msra.mxu0 0
    %2594 = vmatpush.bf16.msra.mxu0 0
    %2595 = vmatpush.bf16.msra.mxu0 0
    %2596 = vmatpush.bf16.msra.mxu0 0
    %2597 = vmatpush.bf16.msra.mxu0 0
    %2598 = vmatpush.bf16.msra.mxu0 %v1238
    %2599 = vmatpush.bf16.msra.mxu0 %v1140
    %2600 = vmatmul.bf16.gmra.mxu0 %v1446
    %v2601 = vpop.f32.mrf.mxu0
    %v2602 = vadd.f32 %v356, %v2601
    %v2603 = vpop.f32.mrf.mxu0
    %2604 = vdwg.mxu0
    %2605 = vmatpush.bf16.msra.mxu0 0
    %2606 = vmatpush.bf16.msra.mxu0 0
    %2607 = vmatpush.bf16.msra.mxu0 0
    %2608 = vmatpush.bf16.msra.mxu0 0
    %2609 = vmatpush.bf16.msra.mxu0 0
    %2610 = vmatpush.bf16.msra.mxu0 0
    %2611 = vmatpush.bf16.msra.mxu0 %v1239
    %2612 = vmatpush.bf16.msra.mxu0 %v1141
    %2613 = vmatmul.bf16.gmra.mxu0 %v1446
    %v2614 = vpop.f32.mrf.mxu0
    %v2615 = vadd.f32 %v357, %v2614
    %v2616 = vpop.f32.mrf.mxu0
    %2617 = vdwg.mxu0
    %2618 = vmatpush.bf16.msra.mxu0 0
    %2619 = vmatpush.bf16.msra.mxu0 0
    %2620 = vmatpush.bf16.msra.mxu0 0
    %2621 = vmatpush.bf16.msra.mxu0 0
    %2622 = vmatpush.bf16.msra.mxu0 0
    %2623 = vmatpush.bf16.msra.mxu0 0
    %2624 = vmatpush.bf16.msra.mxu0 %v1240
    %2625 = vmatpush.bf16.msra.mxu0 %v1142
    %2626 = vmatmul.bf16.gmra.mxu0 %v1446
    %v2627 = vpop.f32.mrf.mxu0
    %v2628 = vadd.f32 %v358, %v2627
    %v2629 = vpop.f32.mrf.mxu0
    %2630 = vdwg.mxu0
    %2631 = vmatpush.bf16.msra.mxu0 0
    %2632 = vmatpush.bf16.msra.mxu0 0
    %2633 = vmatpush.bf16.msra.mxu0 0
    %2634 = vmatpush.bf16.msra.mxu0 0
    %2635 = vmatpush.bf16.msra.mxu0 0
    %2636 = vmatpush.bf16.msra.mxu0 0
    %2637 = vmatpush.bf16.msra.mxu0 %v1241
    %2638 = vmatpush.bf16.msra.mxu0 %v1143
    %2639 = vmatmul.bf16.gmra.mxu0 %v1446
    %v2640 = vpop.f32.mrf.mxu0
    %v2641 = vadd.f32 %v359, %v2640
    %v2642 = vpop.f32.mrf.mxu0
    %2643 = vdwg.mxu0
    %2644 = vmatpush.bf16.msra.mxu0 0
    %2645 = vmatpush.bf16.msra.mxu0 0
    %2646 = vmatpush.bf16.msra.mxu0 0
    %2647 = vmatpush.bf16.msra.mxu0 0
    %2648 = vmatpush.bf16.msra.mxu0 0
    %2649 = vmatpush.bf16.msra.mxu0 0
    %2650 = vmatpush.bf16.msra.mxu0 %v1242
    %2651 = vmatpush.bf16.msra.mxu0 %v1144
    %2652 = vmatmul.bf16.gmra.mxu0 %v1446
    %v2653 = vpop.f32.mrf.mxu0
    %v2654 = vadd.f32 %v360, %v2653
    %v2655 = vpop.f32.mrf.mxu0
    %2656 = vdwg.mxu0
    %2657 = vmatpush.bf16.msra.mxu0 0
    %2658 = vmatpush.bf16.msra.mxu0 0
    %2659 = vmatpush.bf16.msra.mxu0 0
    %2660 = vmatpush.bf16.msra.mxu0 0
    %2661 = vmatpush.bf16.msra.mxu0 0
    %2662 = vmatpush.bf16.msra.mxu0 0
    %2663 = vmatpush.bf16.msra.mxu0 %v1243
    %2664 = vmatpush.bf16.msra.mxu0 %v1145
    %2665 = vmatmul.bf16.gmra.mxu0 %v1446
    %v2666 = vpop.f32.mrf.mxu0
    %v2667 = vadd.f32 %v361, %v2666
    %v2668 = vpop.f32.mrf.mxu0
    %2669 = vdwg.mxu0
    %2670 = vmatpush.bf16.msra.mxu0 0
    %2671 = vmatpush.bf16.msra.mxu0 0
    %2672 = vmatpush.bf16.msra.mxu0 0
    %2673 = vmatpush.bf16.msra.mxu0 0
    %2674 = vmatpush.bf16.msra.mxu0 0
    %2675 = vmatpush.bf16.msra.mxu0 0
    %2676 = vmatpush.bf16.msra.mxu0 %v1244
    %2677 = vmatpush.bf16.msra.mxu0 %v1146
    %2678 = vmatmul.bf16.gmra.mxu0 %v1446
    %v2679 = vpop.f32.mrf.mxu0
    %v2680 = vadd.f32 %v362, %v2679
    %v2681 = vpop.f32.mrf.mxu0
    %2682 = vdwg.mxu0
    %2683 = vmatpush.bf16.msra.mxu0 0
    %2684 = vmatpush.bf16.msra.mxu0 0
    %2685 = vmatpush.bf16.msra.mxu0 0
    %2686 = vmatpush.bf16.msra.mxu0 0
    %2687 = vmatpush.bf16.msra.mxu0 0
    %2688 = vmatpush.bf16.msra.mxu0 0
    %2689 = vmatpush.bf16.msra.mxu0 %v1245
    %2690 = vmatpush.bf16.msra.mxu0 %v1147
    %2691 = vmatmul.bf16.gmra.mxu0 %v1446
    %v2692 = vpop.f32.mrf.mxu0
    %v2693 = vadd.f32 %v363, %v2692
    %v2694 = vpop.f32.mrf.mxu0
    %2695 = vdwg.mxu0
    %2696 = vmatpush.bf16.msra.mxu0 0
    %2697 = vmatpush.bf16.msra.mxu0 0
    %2698 = vmatpush.bf16.msra.mxu0 0
    %2699 = vmatpush.bf16.msra.mxu0 0
    %2700 = vmatpush.bf16.msra.mxu0 0
    %2701 = vmatpush.bf16.msra.mxu0 0
    %2702 = vmatpush.bf16.msra.mxu0 %v1246
    %2703 = vmatpush.bf16.msra.mxu0 %v1148
    %2704 = vmatmul.bf16.gmra.mxu0 %v1446
    %v2705 = vpop.f32.mrf.mxu0
    %v2706 = vadd.f32 %v364, %v2705
    %v2707 = vpop.f32.mrf.mxu0
    %2708 = vdwg.mxu0
    %2709 = vmatpush.bf16.msra.mxu0 0
    %2710 = vmatpush.bf16.msra.mxu0 0
    %2711 = vmatpush.bf16.msra.mxu0 0
    %2712 = vmatpush.bf16.msra.mxu0 0
    %2713 = vmatpush.bf16.msra.mxu0 0
    %2714 = vmatpush.bf16.msra.mxu0 0
    %2715 = vmatpush.bf16.msra.mxu0 %v1247
    %2716 = vmatpush.bf16.msra.mxu0 %v1149
    %2717 = vmatmul.bf16.gmra.mxu0 %v1446
    %v2718 = vpop.f32.mrf.mxu0
    %v2719 = vadd.f32 %v365, %v2718
    %v2720 = vpop.f32.mrf.mxu0
    %2721 = vdwg.mxu0
    %v2722 = vmax.f32 %v1458, 0.0
    %v2723 = vmax.f32 %v1471, 0.0
    %v2724 = vmax.f32 %v1484, 0.0
    %v2725 = vmax.f32 %v1497, 0.0
    %v2726 = vmax.f32 %v1510, 0.0
    %v2727 = vmax.f32 %v1523, 0.0
    %v2728 = vmax.f32 %v1536, 0.0
    %v2729 = vmax.f32 %v1549, 0.0
    %v2730 = vmax.f32 %v1562, 0.0
    %v2731 = vmax.f32 %v1575, 0.0
    %v2732 = vmax.f32 %v1588, 0.0
    %v2733 = vmax.f32 %v1601, 0.0
    %v2734 = vmax.f32 %v1614, 0.0
    %v2735 = vmax.f32 %v1627, 0.0
    %v2736 = vmax.f32 %v1640, 0.0
    %v2737 = vmax.f32 %v1653, 0.0
    %v2738 = vmax.f32 %v1666, 0.0
    %v2739 = vmax.f32 %v1679, 0.0
    %v2740 = vmax.f32 %v1692, 0.0
    %v2741 = vmax.f32 %v1705, 0.0
    %v2742 = vmax.f32 %v1718, 0.0
    %v2743 = vmax.f32 %v1731, 0.0
    %v2744 = vmax.f32 %v1744, 0.0
    %v2745 = vmax.f32 %v1757, 0.0
    %v2746 = vmax.f32 %v1770, 0.0
    %v2747 = vmax.f32 %v1783, 0.0
    %v2748 = vmax.f32 %v1796, 0.0
    %v2749 = vmax.f32 %v1809, 0.0
    %v2750 = vmax.f32 %v1822, 0.0
    %v2751 = vmax.f32 %v1835, 0.0
    %v2752 = vmax.f32 %v1848, 0.0
    %v2753 = vmax.f32 %v1861, 0.0
    %v2754 = vmax.f32 %v1874, 0.0
    %v2755 = vmax.f32 %v1887, 0.0
    %v2756 = vmax.f32 %v1900, 0.0
    %v2757 = vmax.f32 %v1913, 0.0
    %v2758 = vmax.f32 %v1926, 0.0
    %v2759 = vmax.f32 %v1939, 0.0
    %v2760 = vmax.f32 %v1952, 0.0
    %v2761 = vmax.f32 %v1965, 0.0
    %v2762 = vmax.f32 %v1978, 0.0
    %v2763 = vmax.f32 %v1991, 0.0
    %v2764 = vmax.f32 %v2004, 0.0
    %v2765 = vmax.f32 %v2017, 0.0
    %v2766 = vmax.f32 %v2030, 0.0
    %v2767 = vmax.f32 %v2043, 0.0
    %v2768 = vmax.f32 %v2056, 0.0
    %v2769 = vmax.f32 %v2069, 0.0
    %v2770 = vmax.f32 %v2082, 0.0
    %v2771 = vmax.f32 %v2095, 0.0
    %v2772 = vmax.f32 %v2108, 0.0
    %v2773 = vmax.f32 %v2121, 0.0
    %v2774 = vmax.f32 %v2134, 0.0
    %v2775 = vmax.f32 %v2147, 0.0
    %v2776 = vmax.f32 %v2160, 0.0
    %v2777 = vmax.f32 %v2173, 0.0
    %v2778 = vmax.f32 %v2186, 0.0
    %v2779 = vmax.f32 %v2199, 0.0
    %v2780 = vmax.f32 %v2212, 0.0
    %v2781 = vmax.f32 %v2225, 0.0
    %v2782 = vmax.f32 %v2238, 0.0
    %v2783 = vmax.f32 %v2251, 0.0
    %v2784 = vmax.f32 %v2264, 0.0
    %v2785 = vmax.f32 %v2277, 0.0
    %v2786 = vmax.f32 %v2290, 0.0
    %v2787 = vmax.f32 %v2303, 0.0
    %v2788 = vmax.f32 %v2316, 0.0
    %v2789 = vmax.f32 %v2329, 0.0
    %v2790 = vmax.f32 %v2342, 0.0
    %v2791 = vmax.f32 %v2355, 0.0
    %v2792 = vmax.f32 %v2368, 0.0
    %v2793 = vmax.f32 %v2381, 0.0
    %v2794 = vmax.f32 %v2394, 0.0
    %v2795 = vmax.f32 %v2407, 0.0
    %v2796 = vmax.f32 %v2420, 0.0
    %v2797 = vmax.f32 %v2433, 0.0
    %v2798 = vmax.f32 %v2446, 0.0
    %v2799 = vmax.f32 %v2459, 0.0
    %v2800 = vmax.f32 %v2472, 0.0
    %v2801 = vmax.f32 %v2485, 0.0
    %v2802 = vmax.f32 %v2498, 0.0
    %v2803 = vmax.f32 %v2511, 0.0
    %v2804 = vmax.f32 %v2524, 0.0
    %v2805 = vmax.f32 %v2537, 0.0
    %v2806 = vmax.f32 %v2550, 0.0
    %v2807 = vmax.f32 %v2563, 0.0
    %v2808 = vmax.f32 %v2576, 0.0
    %v2809 = vmax.f32 %v2589, 0.0
    %v2810 = vmax.f32 %v2602, 0.0
    %v2811 = vmax.f32 %v2615, 0.0
    %v2812 = vmax.f32 %v2628, 0.0
    %v2813 = vmax.f32 %v2641, 0.0
    %v2814 = vmax.f32 %v2654, 0.0
    %v2815 = vmax.f32 %v2667, 0.0
    %v2816 = vmax.f32 %v2680, 0.0
    %v2817 = vmax.f32 %v2693, 0.0
    %v2818 = vmax.f32 %v2706, 0.0
    %v2819 = vmax.f32 %v2719, 0.0
    %v2820 = vpack.c.bf16 %v2723, %v2722
    %v2821 = vpack.c.bf16 %v2725, %v2724
    %v2822 = vpack.c.bf16 %v2727, %v2726
    %v2823 = vpack.c.bf16 %v2729, %v2728
    %v2824 = vpack.c.bf16 %v2731, %v2730
    %v2825 = vpack.c.bf16 %v2733, %v2732
    %v2826 = vpack.c.bf16 %v2735, %v2734
    %v2827 = vpack.c.bf16 %v2737, %v2736
    %v2828 = vpack.c.bf16 %v2739, %v2738
    %v2829 = vpack.c.bf16 %v2741, %v2740
    %v2830 = vpack.c.bf16 %v2743, %v2742
    %v2831 = vpack.c.bf16 %v2745, %v2744
    %v2832 = vpack.c.bf16 %v2747, %v2746
    %v2833 = vpack.c.bf16 %v2749, %v2748
    %v2834 = vpack.c.bf16 %v2751, %v2750
    %v2835 = vpack.c.bf16 %v2753, %v2752
    %v2836 = vpack.c.bf16 %v2755, %v2754
    %v2837 = vpack.c.bf16 %v2757, %v2756
    %v2838 = vpack.c.bf16 %v2759, %v2758
    %v2839 = vpack.c.bf16 %v2761, %v2760
    %v2840 = vpack.c.bf16 %v2763, %v2762
    %v2841 = vpack.c.bf16 %v2765, %v2764
    %v2842 = vpack.c.bf16 %v2767, %v2766
    %v2843 = vpack.c.bf16 %v2769, %v2768
    %v2844 = vpack.c.bf16 %v2771, %v2770
    %v2845 = vpack.c.bf16 %v2773, %v2772
    %v2846 = vpack.c.bf16 %v2775, %v2774
    %v2847 = vpack.c.bf16 %v2777, %v2776
    %v2848 = vpack.c.bf16 %v2779, %v2778
    %v2849 = vpack.c.bf16 %v2781, %v2780
    %v2850 = vpack.c.bf16 %v2783, %v2782
    %v2851 = vpack.c.bf16 %v2785, %v2784
    %v2852 = vpack.c.bf16 %v2787, %v2786
    %v2853 = vpack.c.bf16 %v2789, %v2788
    %v2854 = vpack.c.bf16 %v2791, %v2790
    %v2855 = vpack.c.bf16 %v2793, %v2792
    %v2856 = vpack.c.bf16 %v2795, %v2794
    %v2857 = vpack.c.bf16 %v2797, %v2796
    %v2858 = vpack.c.bf16 %v2799, %v2798
    %v2859 = vpack.c.bf16 %v2801, %v2800
    %v2860 = vpack.c.bf16 %v2803, %v2802
    %v2861 = vpack.c.bf16 %v2805, %v2804
    %v2862 = vpack.c.bf16 %v2807, %v2806
    %v2863 = vpack.c.bf16 %v2809, %v2808
    %v2864 = vpack.c.bf16 %v2811, %v2810
    %v2865 = vpack.c.bf16 %v2813, %v2812
    %v2866 = vpack.c.bf16 %v2815, %v2814
    %v2867 = vpack.c.bf16 %v2817, %v2816
    %v2868 = vpack.c.bf16 %v2819, %v2818
    %v2918 = vrot.slane %v2820, 3
    %v2919 = vrot.slane %v2821, 6
    %v2920 = vrot.slane %v2821, 1
    %v2921 = vrot.slane %v2822, 4
    %v2922 = vrot.slane %v2822, 7
    %v2923 = vrot.slane %v2823, 2
    %v2924 = vrot.slane %v2823, 5
    %v2925 = vrot.slane %v2824, 3
    %v2926 = vrot.slane %v2825, 6
    %v2927 = vrot.slane %v2825, 1
    %v2928 = vrot.slane %v2826, 4
    %v2929 = vrot.slane %v2826, 7
    %v2930 = vrot.slane %v2827, 2
    %v2931 = vrot.slane %v2827, 5
    %v2932 = vrot.slane %v2828, 3
    %v2933 = vrot.slane %v2829, 6
    %v2934 = vrot.slane %v2829, 1
    %v2935 = vrot.slane %v2830, 4
    %v2936 = vrot.slane %v2830, 7
    %v2937 = vrot.slane %v2831, 2
    %v2938 = vrot.slane %v2831, 5
    %v2939 = vrot.slane %v2832, 3
    %v2940 = vrot.slane %v2833, 6
    %v2941 = vrot.slane %v2833, 1
    %v2942 = vrot.slane %v2834, 4
    %v2943 = vrot.slane %v2834, 7
    %v2944 = vrot.slane %v2835, 2
    %v2945 = vrot.slane %v2835, 5
    %v2946 = vrot.slane %v2836, 3
    %v2947 = vrot.slane %v2837, 6
    %v2948 = vrot.slane %v2837, 1
    %v2949 = vrot.slane %v2838, 4
    %v2950 = vrot.slane %v2838, 7
    %v2951 = vrot.slane %v2839, 2
    %v2952 = vrot.slane %v2839, 5
    %v2953 = vrot.slane %v2840, 3
    %v2954 = vrot.slane %v2841, 6
    %v2955 = vrot.slane %v2841, 1
    %v2956 = vrot.slane %v2842, 4
    %v2957 = vrot.slane %v2842, 7
    %v2958 = vrot.slane %v2843, 2
    %v2959 = vrot.slane %v2843, 5
    %v2960 = vrot.slane %v2844, 3
    %v2961 = vrot.slane %v2845, 6
    %v2962 = vrot.slane %v2845, 1
    %v2963 = vrot.slane %v2846, 4
    %v2964 = vrot.slane %v2846, 7
    %v2965 = vrot.slane %v2847, 2
    %v2966 = vrot.slane %v2847, 5
    %v2967 = vrot.slane %v2848, 3
    %v2968 = vrot.slane %v2849, 6
    %v2969 = vrot.slane %v2849, 1
    %v2970 = vrot.slane %v2850, 4
    %v2971 = vrot.slane %v2850, 7
    %v2972 = vrot.slane %v2851, 2
    %v2973 = vrot.slane %v2851, 5
    %v2974 = vrot.slane %v2852, 3
    %v2975 = vrot.slane %v2853, 6
    %v2976 = vrot.slane %v2853, 1
    %v2977 = vrot.slane %v2854, 4
    %v2978 = vrot.slane %v2854, 7
    %v2979 = vrot.slane %v2855, 2
    %v2980 = vrot.slane %v2855, 5
    %v2981 = vrot.slane %v2856, 3
    %v2982 = vrot.slane %v2857, 6
    %v2983 = vrot.slane %v2857, 1
    %v2984 = vrot.slane %v2858, 4
    %v2985 = vrot.slane %v2858, 7
    %v2986 = vrot.slane %v2859, 2
    %v2987 = vrot.slane %v2859, 5
    %v2988 = vrot.slane %v2860, 3
    %v2989 = vrot.slane %v2861, 6
    %v2990 = vrot.slane %v2861, 1
    %v2991 = vrot.slane %v2862, 4
    %v2992 = vrot.slane %v2862, 7
    %v2993 = vrot.slane %v2863, 2
    %v2994 = vrot.slane %v2863, 5
    %v2995 = vrot.slane %v2864, 3
    %v2996 = vrot.slane %v2865, 6
    %v2997 = vrot.slane %v2865, 1
    %v2998 = vrot.slane %v2866, 4
    %v2999 = vrot.slane %v2866, 7
    %v3000 = vrot.slane %v2867, 2
    %v3001 = vrot.slane %v2867, 5
    %v3002 = vrot.slane %v2868, 3
    %vm3003 = vcmask 1040384
    %v3006 = vsel %vm3003, %v2820, %v2918
    %vm3007 = vcmask 1042434
    %v3010 = vsel %vm3007, %v2919, %v2920
    %vm3011 = vcmask 1041408
    %v3012 = vsel %vm3011, %v3006, %v3010
    %vm3013 = vcmask 1044484
    %v3016 = vsel %vm3013, %v2921, %v2922
    %vm3017 = vcmask 1046534
    %v3020 = vsel %vm3017, %v2923, %v2924
    %vm3021 = vcmask 1045508
    %v3022 = vsel %vm3021, %v3016, %v3020
    %vm3023 = vcmask 1043456
    %v3024 = vsel %vm3023, %v3012, %v3022
    %v3027 = vsel %vm3003, %v2824, %v2925
    %v3030 = vsel %vm3007, %v2926, %v2927
    %v3031 = vsel %vm3011, %v3027, %v3030
    %v3034 = vsel %vm3013, %v2928, %v2929
    %v3037 = vsel %vm3017, %v2930, %v2931
    %v3038 = vsel %vm3021, %v3034, %v3037
    %v3039 = vsel %vm3023, %v3031, %v3038
    %v3042 = vsel %vm3003, %v2828, %v2932
    %v3045 = vsel %vm3007, %v2933, %v2934
    %v3046 = vsel %vm3011, %v3042, %v3045
    %v3049 = vsel %vm3013, %v2935, %v2936
    %v3052 = vsel %vm3017, %v2937, %v2938
    %v3053 = vsel %vm3021, %v3049, %v3052
    %v3054 = vsel %vm3023, %v3046, %v3053
    %v3057 = vsel %vm3003, %v2832, %v2939
    %v3060 = vsel %vm3007, %v2940, %v2941
    %v3061 = vsel %vm3011, %v3057, %v3060
    %v3064 = vsel %vm3013, %v2942, %v2943
    %v3067 = vsel %vm3017, %v2944, %v2945
    %v3068 = vsel %vm3021, %v3064, %v3067
    %v3069 = vsel %vm3023, %v3061, %v3068
    %v3072 = vsel %vm3003, %v2836, %v2946
    %v3075 = vsel %vm3007, %v2947, %v2948
    %v3076 = vsel %vm3011, %v3072, %v3075
    %v3079 = vsel %vm3013, %v2949, %v2950
    %v3082 = vsel %vm3017, %v2951, %v2952
    %v3083 = vsel %vm3021, %v3079, %v3082
    %v3084 = vsel %vm3023, %v3076, %v3083
    %v3087 = vsel %vm3003, %v2840, %v2953
    %v3090 = vsel %vm3007, %v2954, %v2955
    %v3091 = vsel %vm3011, %v3087, %v3090
    %v3094 = vsel %vm3013, %v2956, %v2957
    %v3097 = vsel %vm3017, %v2958, %v2959
    %v3098 = vsel %vm3021, %v3094, %v3097
    %v3099 = vsel %vm3023, %v3091, %v3098
    %v3102 = vsel %vm3003, %v2844, %v2960
    %v3105 = vsel %vm3007, %v2961, %v2962
    %v3106 = vsel %vm3011, %v3102, %v3105
    %v3109 = vsel %vm3013, %v2963, %v2964
    %v3112 = vsel %vm3017, %v2965, %v2966
    %v3113 = vsel %vm3021, %v3109, %v3112
    %v3114 = vsel %vm3023, %v3106, %v3113
    %v3117 = vsel %vm3003, %v2848, %v2967
    %v3120 = vsel %vm3007, %v2968, %v2969
    %v3121 = vsel %vm3011, %v3117, %v3120
    %v3124 = vsel %vm3013, %v2970, %v2971
    %v3127 = vsel %vm3017, %v2972, %v2973
    %v3128 = vsel %vm3021, %v3124, %v3127
    %v3129 = vsel %vm3023, %v3121, %v3128
    %v3132 = vsel %vm3003, %v2852, %v2974
    %v3135 = vsel %vm3007, %v2975, %v2976
    %v3136 = vsel %vm3011, %v3132, %v3135
    %v3139 = vsel %vm3013, %v2977, %v2978
    %v3142 = vsel %vm3017, %v2979, %v2980
    %v3143 = vsel %vm3021, %v3139, %v3142
    %v3144 = vsel %vm3023, %v3136, %v3143
    %v3147 = vsel %vm3003, %v2856, %v2981
    %v3150 = vsel %vm3007, %v2982, %v2983
    %v3151 = vsel %vm3011, %v3147, %v3150
    %v3154 = vsel %vm3013, %v2984, %v2985
    %v3157 = vsel %vm3017, %v2986, %v2987
    %v3158 = vsel %vm3021, %v3154, %v3157
    %v3159 = vsel %vm3023, %v3151, %v3158
    %v3162 = vsel %vm3003, %v2860, %v2988
    %v3165 = vsel %vm3007, %v2989, %v2990
    %v3166 = vsel %vm3011, %v3162, %v3165
    %v3169 = vsel %vm3013, %v2991, %v2992
    %v3172 = vsel %vm3017, %v2993, %v2994
    %v3173 = vsel %vm3021, %v3169, %v3172
    %v3174 = vsel %vm3023, %v3166, %v3173
    %v3177 = vsel %vm3003, %v2864, %v2995
    %v3180 = vsel %vm3007, %v2996, %v2997
    %v3181 = vsel %vm3011, %v3177, %v3180
    %v3184 = vsel %vm3013, %v2998, %v2999
    %v3187 = vsel %vm3017, %v3000, %v3001
    %v3188 = vsel %vm3021, %v3184, %v3187
    %v3189 = vsel %vm3023, %v3181, %v3188
    %v3192 = vsel %vm3003, %v2868, %v3002
    %3206 = vst [vmem:[%s3] sm:$0xff] %v3024
    %3207 = vst [vmem:[%s3 + $0x8] sm:$0xff] %v3039
    %3208 = vst [vmem:[%s3 + $0x10] sm:$0xff] %v3054
    %3209 = vst [vmem:[%s3 + $0x18] sm:$0xff] %v3069
    %3210 = vst [vmem:[%s3 + $0x20] sm:$0xff] %v3084
    %3211 = vst [vmem:[%s3 + $0x28] sm:$0xff] %v3099
    %3212 = vst [vmem:[%s3 + $0x30] sm:$0xff] %v3114
    %3213 = vst [vmem:[%s3 + $0x38] sm:$0xff] %v3129
    %3214 = vst [vmem:[%s3 + $0x40] sm:$0xff] %v3144
    %3215 = vst [vmem:[%s3 + $0x48] sm:$0xff] %v3159
    %3216 = vst [vmem:[%s3 + $0x50] sm:$0xff] %v3174
    %3217 = vst [vmem:[%s3 + $0x58] sm:$0xff] %v3189
    %3218 = vst [vmem:[%s3 + $0x60] sm:$0x3] %v3192
    // Predicated region
    $region22: #{generator_forward.3} parent=1 // pred_check
      _
    $region23: #{generator_forward.3} parent=1 // pred_check_branch
      %3220 = sbr.rel (0) target = $region25
    $region24: #{generator_forward.3} parent=1 // pred_region
      _
    $region25: #{generator_forward.3} parent=1 // pred_fallthru
      _
    // Predicated region
    $region26: #{generator_forward.3} parent=1 // pred_check
      _
    $region27: #{generator_forward.3} parent=1 // pred_check_branch
      %3222 = sbr.rel (0) target = $region29
    $region28: #{generator_forward.3} parent=1 // pred_region
      _
    $region29: #{generator_forward.3} parent=1 // pred_fallthru
      _
    %3223 = vsyncpa [#allocation3], 1
    %3224 = vsyncpa [#allocation5], 1

// kernel: generator_forward.4
$region0: #{generator_forward.4}
  #allocation0 [shape = 'u32[]', space=smem, size = 0x4, offset = 0x4, fixed_abs, tag = 'smem constant byte address 0x4 - core index']
  #allocation1 [shape = 'u32[72,128]{1,0:T(1,128)}', space=vmem, size = 0x9000, scoped, tag = 'internal scratch']
  %s0 = inlined_call_operand.vmem [shape: bf16[98,256], index: 0, kind: input, shape index: {}]
  %s1 = inlined_call_operand.hbm [shape: bf16[256,2048], index: 1, kind: input, shape index: {}]
  %s2 = inlined_call_operand.vmem [shape: bf16[98,2048], index: 2, kind: output, shape index: {}]
  %s3 = sld [smem:[#allocation0]]
  $region22: #{generator_forward.4} parent=0
    _
  %s5 = ssub.s32 1, %s3
  %s6 = scalar_select 0, %s5, %s3
  $region1: #{generator_forward.4} parent=0
    #allocation2 [shape = 'u8[1048576]{0}', space=vmem, size = 0x100000, scoped, tag = 'input window, operand 1, single buffered']
    #allocation3 [shape = 's32[1]{0}', space=sflag, size = 0x4, scoped, tag = 'scoped memory for generator_forward.4']
    %7 = vsyncpa [#allocation3], 0
    // Predicated region
    $region2: #{generator_forward.4} parent=1 // pred_check
      _
    $region3: #{generator_forward.4} parent=1 // pred_check_branch
      %9 = sbr.rel (0) target = $region5
    $region4: #{generator_forward.4} parent=1 // pred_region
      _
    $region5: #{generator_forward.4} parent=1 // pred_fallthru
      _
    // Predicated region
    $region6: #{generator_forward.4} parent=1 // pred_check
      _
    $region7: #{generator_forward.4} parent=1 // pred_check_branch
      %11 = sbr.rel (0) target = $region9
    $region8: #{generator_forward.4} parent=1 // pred_region
      %13 = vsyncadd [#allocation3], 0
      %s14 = sshll.u32 %s1, 4
      %s15 = int_to_ptr.hbm [resolvable:$true] %s14
      %s16 = sshll.u32 [#allocation2], 4
      %s17 = int_to_ptr.vmem [resolvable:$true] %s16
      %22 = dma.hbm_to_vmem [thread:$0]  %s15, 32768, %s17, [#allocation3], 1024, 1024, 64
    $region9: #{generator_forward.4} parent=1 // pred_fallthru
      _
    // Predicated region
    $region10: #{generator_forward.4} parent=1 // pred_check
      _
    $region11: #{generator_forward.4} parent=1 // pred_check_branch
      %24 = sbr.rel (0) target = $region13
    $region12: #{generator_forward.4} parent=1 // pred_region
      %26 = dma.done [#allocation3], 32768
    $region13: #{generator_forward.4} parent=1 // pred_fallthru
      _
    %v27 = vld [vmem:[%s0] sm:$0xff]
    %v28 = vld [vmem:[%s0 + $0x8] sm:$0xff]
    %v29 = vld [vmem:[%s0 + $0x10] sm:$0xff]
    %v30 = vld [vmem:[%s0 + $0x18] sm:$0xff]
    %v31 = vld [vmem:[%s0 + $0x20] sm:$0xff]
    %v32 = vld [vmem:[%s0 + $0x28] sm:$0xff]
    %v33 = vld [vmem:[%s0 + $0x30] sm:$0xff]
    %v34 = vld [vmem:[%s0 + $0x38] sm:$0xff]
    %v35 = vld [vmem:[%s0 + $0x40] sm:$0xff]
    %v36 = vld [vmem:[%s0 + $0x48] sm:$0xff]
    %v37 = vld [vmem:[%s0 + $0x50] sm:$0xff]
    %v38 = vld [vmem:[%s0 + $0x58] sm:$0xff]
    %v39 = vld [vmem:[%s0 + $0x60] sm:$0x11]
    %v40 = vld [vmem:[#allocation2] sm:$0xff]
    %v41 = vld [vmem:[#allocation2 + $0x8] sm:$0xff]
    %v42 = vld [vmem:[#allocation2 + $0x10] sm:$0xff]
    %v43 = vld [vmem:[#allocation2 + $0x18] sm:$0xff]
    %v44 = vld [vmem:[#allocation2 + $0x20] sm:$0xff]
    %v45 = vld [vmem:[#allocation2 + $0x28] sm:$0xff]
    %v46 = vld [vmem:[#allocation2 + $0x30] sm:$0xff]
    %v47 = vld [vmem:[#allocation2 + $0x38] sm:$0xff]
    %v48 = vld [vmem:[#allocation2 + $0x40] sm:$0xff]
    %v49 = vld [vmem:[#allocation2 + $0x48] sm:$0xff]
    %v50 = vld [vmem:[#allocation2 + $0x50] sm:$0xff]
    %v51 = vld [vmem:[#allocation2 + $0x58] sm:$0xff]
    %v52 = vld [vmem:[#allocation2 + $0x60] sm:$0xff]
    %v53 = vld [vmem:[#allocation2 + $0x68] sm:$0xff]
    %v54 = vld [vmem:[#allocation2 + $0x70] sm:$0xff]
    %v55 = vld [vmem:[#allocation2 + $0x78] sm:$0xff]
    %v56 = vld [vmem:[#allocation2 + $0x80] sm:$0xff]
    %v57 = vld [vmem:[#allocation2 + $0x88] sm:$0xff]
    %v58 = vld [vmem:[#allocation2 + $0x90] sm:$0xff]
    %v59 = vld [vmem:[#allocation2 + $0x98] sm:$0xff]
    %v60 = vld [vmem:[#allocation2 + $0xa0] sm:$0xff]
    %v61 = vld [vmem:[#allocation2 + $0xa8] sm:$0xff]
    %v62 = vld [vmem:[#allocation2 + $0xb0] sm:$0xff]
    %v63 = vld [vmem:[#allocation2 + $0xb8] sm:$0xff]
    %v64 = vld [vmem:[#allocation2 + $0xc0] sm:$0xff]
    %v65 = vld [vmem:[#allocation2 + $0xc8] sm:$0xff]
    %v66 = vld [vmem:[#allocation2 + $0xd0] sm:$0xff]
    %v67 = vld [vmem:[#allocation2 + $0xd8] sm:$0xff]
    %v68 = vld [vmem:[#allocation2 + $0xe0] sm:$0xff]
    %v69 = vld [vmem:[#allocation2 + $0xe8] sm:$0xff]
    %v70 = vld [vmem:[#allocation2 + $0xf0] sm:$0xff]
    %v71 = vld [vmem:[#allocation2 + $0xf8] sm:$0xff]
    %v72 = vld [vmem:[#allocation2 + $0x100] sm:$0xff]
    %v73 = vld [vmem:[#allocation2 + $0x108] sm:$0xff]
    %v74 = vld [vmem:[#allocation2 + $0x110] sm:$0xff]
    %v75 = vld [vmem:[#allocation2 + $0x118] sm:$0xff]
    %v76 = vld [vmem:[#allocation2 + $0x120] sm:$0xff]
    %v77 = vld [vmem:[#allocation2 + $0x128] sm:$0xff]
    %v78 = vld [vmem:[#allocation2 + $0x130] sm:$0xff]
    %v79 = vld [vmem:[#allocation2 + $0x138] sm:$0xff]
    %v80 = vld [vmem:[#allocation2 + $0x140] sm:$0xff]
    %v81 = vld [vmem:[#allocation2 + $0x148] sm:$0xff]
    %v82 = vld [vmem:[#allocation2 + $0x150] sm:$0xff]
    %v83 = vld [vmem:[#allocation2 + $0x158] sm:$0xff]
    %v84 = vld [vmem:[#allocation2 + $0x160] sm:$0xff]
    %v85 = vld [vmem:[#allocation2 + $0x168] sm:$0xff]
    %v86 = vld [vmem:[#allocation2 + $0x170] sm:$0xff]
    %v87 = vld [vmem:[#allocation2 + $0x178] sm:$0xff]
    %v88 = vld [vmem:[#allocation2 + $0x180] sm:$0xff]
    %v89 = vld [vmem:[#allocation2 + $0x188] sm:$0xff]
    %v90 = vld [vmem:[#allocation2 + $0x190] sm:$0xff]
    %v91 = vld [vmem:[#allocation2 + $0x198] sm:$0xff]
    %v92 = vld [vmem:[#allocation2 + $0x1a0] sm:$0xff]
    %v93 = vld [vmem:[#allocation2 + $0x1a8] sm:$0xff]
    %v94 = vld [vmem:[#allocation2 + $0x1b0] sm:$0xff]
    %v95 = vld [vmem:[#allocation2 + $0x1b8] sm:$0xff]
    %v96 = vld [vmem:[#allocation2 + $0x1c0] sm:$0xff]
    %v97 = vld [vmem:[#allocation2 + $0x1c8] sm:$0xff]
    %v98 = vld [vmem:[#allocation2 + $0x1d0] sm:$0xff]
    %v99 = vld [vmem:[#allocation2 + $0x1d8] sm:$0xff]
    %v100 = vld [vmem:[#allocation2 + $0x1e0] sm:$0xff]
    %v101 = vld [vmem:[#allocation2 + $0x1e8] sm:$0xff]
    %v102 = vld [vmem:[#allocation2 + $0x1f0] sm:$0xff]
    %v103 = vld [vmem:[#allocation2 + $0x1f8] sm:$0xff]
    %v104 = vld [vmem:[#allocation2 + $0x200] sm:$0xff]
    %v105 = vld [vmem:[#allocation2 + $0x208] sm:$0xff]
    %v106 = vld [vmem:[#allocation2 + $0x210] sm:$0xff]
    %v107 = vld [vmem:[#allocation2 + $0x218] sm:$0xff]
    %v108 = vld [vmem:[#allocation2 + $0x220] sm:$0xff]
    %v109 = vld [vmem:[#allocation2 + $0x228] sm:$0xff]
    %v110 = vld [vmem:[#allocation2 + $0x230] sm:$0xff]
    %v111 = vld [vmem:[#allocation2 + $0x238] sm:$0xff]
    %v112 = vld [vmem:[#allocation2 + $0x240] sm:$0xff]
    %v113 = vld [vmem:[#allocation2 + $0x248] sm:$0xff]
    %v114 = vld [vmem:[#allocation2 + $0x250] sm:$0xff]
    %v115 = vld [vmem:[#allocation2 + $0x258] sm:$0xff]
    %v116 = vld [vmem:[#allocation2 + $0x260] sm:$0xff]
    %v117 = vld [vmem:[#allocation2 + $0x268] sm:$0xff]
    %v118 = vld [vmem:[#allocation2 + $0x270] sm:$0xff]
    %v119 = vld [vmem:[#allocation2 + $0x278] sm:$0xff]
    %v120 = vld [vmem:[#allocation2 + $0x280] sm:$0xff]
    %v121 = vld [vmem:[#allocation2 + $0x288] sm:$0xff]
    %v122 = vld [vmem:[#allocation2 + $0x290] sm:$0xff]
    %v123 = vld [vmem:[#allocation2 + $0x298] sm:$0xff]
    %v124 = vld [vmem:[#allocation2 + $0x2a0] sm:$0xff]
    %v125 = vld [vmem:[#allocation2 + $0x2a8] sm:$0xff]
    %v126 = vld [vmem:[#allocation2 + $0x2b0] sm:$0xff]
    %v127 = vld [vmem:[#allocation2 + $0x2b8] sm:$0xff]
    %v128 = vld [vmem:[#allocation2 + $0x2c0] sm:$0xff]
    %v129 = vld [vmem:[#allocation2 + $0x2c8] sm:$0xff]
    %v130 = vld [vmem:[#allocation2 + $0x2d0] sm:$0xff]
    %v131 = vld [vmem:[#allocation2 + $0x2d8] sm:$0xff]
    %v132 = vld [vmem:[#allocation2 + $0x2e0] sm:$0xff]
    %v133 = vld [vmem:[#allocation2 + $0x2e8] sm:$0xff]
    %v134 = vld [vmem:[#allocation2 + $0x2f0] sm:$0xff]
    %v135 = vld [vmem:[#allocation2 + $0x2f8] sm:$0xff]
    %v136 = vld [vmem:[#allocation2 + $0x300] sm:$0xff]
    %v137 = vld [vmem:[#allocation2 + $0x308] sm:$0xff]
    %v138 = vld [vmem:[#allocation2 + $0x310] sm:$0xff]
    %v139 = vld [vmem:[#allocation2 + $0x318] sm:$0xff]
    %v140 = vld [vmem:[#allocation2 + $0x320] sm:$0xff]
    %v141 = vld [vmem:[#allocation2 + $0x328] sm:$0xff]
    %v142 = vld [vmem:[#allocation2 + $0x330] sm:$0xff]
    %v143 = vld [vmem:[#allocation2 + $0x338] sm:$0xff]
    %v144 = vld [vmem:[#allocation2 + $0x340] sm:$0xff]
    %v145 = vld [vmem:[#allocation2 + $0x348] sm:$0xff]
    %v146 = vld [vmem:[#allocation2 + $0x350] sm:$0xff]
    %v147 = vld [vmem:[#allocation2 + $0x358] sm:$0xff]
    %v148 = vld [vmem:[#allocation2 + $0x360] sm:$0xff]
    %v149 = vld [vmem:[#allocation2 + $0x368] sm:$0xff]
    %v150 = vld [vmem:[#allocation2 + $0x370] sm:$0xff]
    %v151 = vld [vmem:[#allocation2 + $0x378] sm:$0xff]
    %v152 = vld [vmem:[#allocation2 + $0x380] sm:$0xff]
    %v153 = vld [vmem:[#allocation2 + $0x388] sm:$0xff]
    %v154 = vld [vmem:[#allocation2 + $0x390] sm:$0xff]
    %v155 = vld [vmem:[#allocation2 + $0x398] sm:$0xff]
    %v156 = vld [vmem:[#allocation2 + $0x3a0] sm:$0xff]
    %v157 = vld [vmem:[#allocation2 + $0x3a8] sm:$0xff]
    %v158 = vld [vmem:[#allocation2 + $0x3b0] sm:$0xff]
    %v159 = vld [vmem:[#allocation2 + $0x3b8] sm:$0xff]
    %v160 = vld [vmem:[#allocation2 + $0x3c0] sm:$0xff]
    %v161 = vld [vmem:[#allocation2 + $0x3c8] sm:$0xff]
    %v162 = vld [vmem:[#allocation2 + $0x3d0] sm:$0xff]
    %v163 = vld [vmem:[#allocation2 + $0x3d8] sm:$0xff]
    %v164 = vld [vmem:[#allocation2 + $0x3e0] sm:$0xff]
    %v165 = vld [vmem:[#allocation2 + $0x3e8] sm:$0xff]
    %v166 = vld [vmem:[#allocation2 + $0x3f0] sm:$0xff]
    %v167 = vld [vmem:[#allocation2 + $0x3f8] sm:$0xff]
    %v168 = vld [vmem:[#allocation2 + $0x400] sm:$0xff]
    %v169 = vld [vmem:[#allocation2 + $0x408] sm:$0xff]
    %v170 = vld [vmem:[#allocation2 + $0x410] sm:$0xff]
    %v171 = vld [vmem:[#allocation2 + $0x418] sm:$0xff]
    %v172 = vld [vmem:[#allocation2 + $0x420] sm:$0xff]
    %v173 = vld [vmem:[#allocation2 + $0x428] sm:$0xff]
    %v174 = vld [vmem:[#allocation2 + $0x430] sm:$0xff]
    %v175 = vld [vmem:[#allocation2 + $0x438] sm:$0xff]
    %v176 = vld [vmem:[#allocation2 + $0x440] sm:$0xff]
    %v177 = vld [vmem:[#allocation2 + $0x448] sm:$0xff]
    %v178 = vld [vmem:[#allocation2 + $0x450] sm:$0xff]
    %v179 = vld [vmem:[#allocation2 + $0x458] sm:$0xff]
    %v180 = vld [vmem:[#allocation2 + $0x460] sm:$0xff]
    %v181 = vld [vmem:[#allocation2 + $0x468] sm:$0xff]
    %v182 = vld [vmem:[#allocation2 + $0x470] sm:$0xff]
    %v183 = vld [vmem:[#allocation2 + $0x478] sm:$0xff]
    %v184 = vld [vmem:[#allocation2 + $0x480] sm:$0xff]
    %v185 = vld [vmem:[#allocation2 + $0x488] sm:$0xff]
    %v186 = vld [vmem:[#allocation2 + $0x490] sm:$0xff]
    %v187 = vld [vmem:[#allocation2 + $0x498] sm:$0xff]
    %v188 = vld [vmem:[#allocation2 + $0x4a0] sm:$0xff]
    %v189 = vld [vmem:[#allocation2 + $0x4a8] sm:$0xff]
    %v190 = vld [vmem:[#allocation2 + $0x4b0] sm:$0xff]
    %v191 = vld [vmem:[#allocation2 + $0x4b8] sm:$0xff]
    %v192 = vld [vmem:[#allocation2 + $0x4c0] sm:$0xff]
    %v193 = vld [vmem:[#allocation2 + $0x4c8] sm:$0xff]
    %v194 = vld [vmem:[#allocation2 + $0x4d0] sm:$0xff]
    %v195 = vld [vmem:[#allocation2 + $0x4d8] sm:$0xff]
    %v196 = vld [vmem:[#allocation2 + $0x4e0] sm:$0xff]
    %v197 = vld [vmem:[#allocation2 + $0x4e8] sm:$0xff]
    %v198 = vld [vmem:[#allocation2 + $0x4f0] sm:$0xff]
    %v199 = vld [vmem:[#allocation2 + $0x4f8] sm:$0xff]
    %v200 = vld [vmem:[#allocation2 + $0x500] sm:$0xff]
    %v201 = vld [vmem:[#allocation2 + $0x508] sm:$0xff]
    %v202 = vld [vmem:[#allocation2 + $0x510] sm:$0xff]
    %v203 = vld [vmem:[#allocation2 + $0x518] sm:$0xff]
    %v204 = vld [vmem:[#allocation2 + $0x520] sm:$0xff]
    %v205 = vld [vmem:[#allocation2 + $0x528] sm:$0xff]
    %v206 = vld [vmem:[#allocation2 + $0x530] sm:$0xff]
    %v207 = vld [vmem:[#allocation2 + $0x538] sm:$0xff]
    %v208 = vld [vmem:[#allocation2 + $0x540] sm:$0xff]
    %v209 = vld [vmem:[#allocation2 + $0x548] sm:$0xff]
    %v210 = vld [vmem:[#allocation2 + $0x550] sm:$0xff]
    %v211 = vld [vmem:[#allocation2 + $0x558] sm:$0xff]
    %v212 = vld [vmem:[#allocation2 + $0x560] sm:$0xff]
    %v213 = vld [vmem:[#allocation2 + $0x568] sm:$0xff]
    %v214 = vld [vmem:[#allocation2 + $0x570] sm:$0xff]
    %v215 = vld [vmem:[#allocation2 + $0x578] sm:$0xff]
    %v216 = vld [vmem:[#allocation2 + $0x580] sm:$0xff]
    %v217 = vld [vmem:[#allocation2 + $0x588] sm:$0xff]
    %v218 = vld [vmem:[#allocation2 + $0x590] sm:$0xff]
    %v219 = vld [vmem:[#allocation2 + $0x598] sm:$0xff]
    %v220 = vld [vmem:[#allocation2 + $0x5a0] sm:$0xff]
    %v221 = vld [vmem:[#allocation2 + $0x5a8] sm:$0xff]
    %v222 = vld [vmem:[#allocation2 + $0x5b0] sm:$0xff]
    %v223 = vld [vmem:[#allocation2 + $0x5b8] sm:$0xff]
    %v224 = vld [vmem:[#allocation2 + $0x5c0] sm:$0xff]
    %v225 = vld [vmem:[#allocation2 + $0x5c8] sm:$0xff]
    %v226 = vld [vmem:[#allocation2 + $0x5d0] sm:$0xff]
    %v227 = vld [vmem:[#allocation2 + $0x5d8] sm:$0xff]
    %v228 = vld [vmem:[#allocation2 + $0x5e0] sm:$0xff]
    %v229 = vld [vmem:[#allocation2 + $0x5e8] sm:$0xff]
    %v230 = vld [vmem:[#allocation2 + $0x5f0] sm:$0xff]
    %v231 = vld [vmem:[#allocation2 + $0x5f8] sm:$0xff]
    %v232 = vld [vmem:[#allocation2 + $0x600] sm:$0xff]
    %v233 = vld [vmem:[#allocation2 + $0x608] sm:$0xff]
    %v234 = vld [vmem:[#allocation2 + $0x610] sm:$0xff]
    %v235 = vld [vmem:[#allocation2 + $0x618] sm:$0xff]
    %v236 = vld [vmem:[#allocation2 + $0x620] sm:$0xff]
    %v237 = vld [vmem:[#allocation2 + $0x628] sm:$0xff]
    %v238 = vld [vmem:[#allocation2 + $0x630] sm:$0xff]
    %v239 = vld [vmem:[#allocation2 + $0x638] sm:$0xff]
    %v240 = vld [vmem:[#allocation2 + $0x640] sm:$0xff]
    %v241 = vld [vmem:[#allocation2 + $0x648] sm:$0xff]
    %v242 = vld [vmem:[#allocation2 + $0x650] sm:$0xff]
    %v243 = vld [vmem:[#allocation2 + $0x658] sm:$0xff]
    %v244 = vld [vmem:[#allocation2 + $0x660] sm:$0xff]
    %v245 = vld [vmem:[#allocation2 + $0x668] sm:$0xff]
    %v246 = vld [vmem:[#allocation2 + $0x670] sm:$0xff]
    %v247 = vld [vmem:[#allocation2 + $0x678] sm:$0xff]
    %v248 = vld [vmem:[#allocation2 + $0x680] sm:$0xff]
    %v249 = vld [vmem:[#allocation2 + $0x688] sm:$0xff]
    %v250 = vld [vmem:[#allocation2 + $0x690] sm:$0xff]
    %v251 = vld [vmem:[#allocation2 + $0x698] sm:$0xff]
    %v252 = vld [vmem:[#allocation2 + $0x6a0] sm:$0xff]
    %v253 = vld [vmem:[#allocation2 + $0x6a8] sm:$0xff]
    %v254 = vld [vmem:[#allocation2 + $0x6b0] sm:$0xff]
    %v255 = vld [vmem:[#allocation2 + $0x6b8] sm:$0xff]
    %v256 = vld [vmem:[#allocation2 + $0x6c0] sm:$0xff]
    %v257 = vld [vmem:[#allocation2 + $0x6c8] sm:$0xff]
    %v258 = vld [vmem:[#allocation2 + $0x6d0] sm:$0xff]
    %v259 = vld [vmem:[#allocation2 + $0x6d8] sm:$0xff]
    %v260 = vld [vmem:[#allocation2 + $0x6e0] sm:$0xff]
    %v261 = vld [vmem:[#allocation2 + $0x6e8] sm:$0xff]
    %v262 = vld [vmem:[#allocation2 + $0x6f0] sm:$0xff]
    %v263 = vld [vmem:[#allocation2 + $0x6f8] sm:$0xff]
    %v264 = vld [vmem:[#allocation2 + $0x700] sm:$0xff]
    %v265 = vld [vmem:[#allocation2 + $0x708] sm:$0xff]
    %v266 = vld [vmem:[#allocation2 + $0x710] sm:$0xff]
    %v267 = vld [vmem:[#allocation2 + $0x718] sm:$0xff]
    %v268 = vld [vmem:[#allocation2 + $0x720] sm:$0xff]
    %v269 = vld [vmem:[#allocation2 + $0x728] sm:$0xff]
    %v270 = vld [vmem:[#allocation2 + $0x730] sm:$0xff]
    %v271 = vld [vmem:[#allocation2 + $0x738] sm:$0xff]
    %v272 = vld [vmem:[#allocation2 + $0x740] sm:$0xff]
    %v273 = vld [vmem:[#allocation2 + $0x748] sm:$0xff]
    %v274 = vld [vmem:[#allocation2 + $0x750] sm:$0xff]
    %v275 = vld [vmem:[#allocation2 + $0x758] sm:$0xff]
    %v276 = vld [vmem:[#allocation2 + $0x760] sm:$0xff]
    %v277 = vld [vmem:[#allocation2 + $0x768] sm:$0xff]
    %v278 = vld [vmem:[#allocation2 + $0x770] sm:$0xff]
    %v279 = vld [vmem:[#allocation2 + $0x778] sm:$0xff]
    %v280 = vld [vmem:[#allocation2 + $0x780] sm:$0xff]
    %v281 = vld [vmem:[#allocation2 + $0x788] sm:$0xff]
    %v282 = vld [vmem:[#allocation2 + $0x790] sm:$0xff]
    %v283 = vld [vmem:[#allocation2 + $0x798] sm:$0xff]
    %v284 = vld [vmem:[#allocation2 + $0x7a0] sm:$0xff]
    %v285 = vld [vmem:[#allocation2 + $0x7a8] sm:$0xff]
    %v286 = vld [vmem:[#allocation2 + $0x7b0] sm:$0xff]
    %v287 = vld [vmem:[#allocation2 + $0x7b8] sm:$0xff]
    %v288 = vld [vmem:[#allocation2 + $0x7c0] sm:$0xff]
    %v289 = vld [vmem:[#allocation2 + $0x7c8] sm:$0xff]
    %v290 = vld [vmem:[#allocation2 + $0x7d0] sm:$0xff]
    %v291 = vld [vmem:[#allocation2 + $0x7d8] sm:$0xff]
    %v292 = vld [vmem:[#allocation2 + $0x7e0] sm:$0xff]
    %v293 = vld [vmem:[#allocation2 + $0x7e8] sm:$0xff]
    %v294 = vld [vmem:[#allocation2 + $0x7f0] sm:$0xff]
    %v295 = vld [vmem:[#allocation2 + $0x7f8] sm:$0xff]
    %v309 = vunpack.c.l.b16 %v27
    %v310 = vunpack.c.h.b16 %v27
    %v311 = vunpack.c.l.b16 %v28
    %v312 = vunpack.c.h.b16 %v28
    %v313 = vunpack.c.l.b16 %v29
    %v314 = vunpack.c.h.b16 %v29
    %v315 = vunpack.c.l.b16 %v30
    %v316 = vunpack.c.h.b16 %v30
    %v317 = vunpack.c.l.b16 %v31
    %v318 = vunpack.c.h.b16 %v31
    %v319 = vunpack.c.l.b16 %v32
    %v320 = vunpack.c.h.b16 %v32
    %v321 = vunpack.c.l.b16 %v33
    %v322 = vunpack.c.h.b16 %v33
    %v323 = vunpack.c.l.b16 %v34
    %v324 = vunpack.c.h.b16 %v34
    %v325 = vunpack.c.l.b16 %v35
    %v326 = vunpack.c.h.b16 %v35
    %v327 = vunpack.c.l.b16 %v36
    %v328 = vunpack.c.h.b16 %v36
    %v329 = vunpack.c.l.b16 %v37
    %v330 = vunpack.c.h.b16 %v37
    %v331 = vunpack.c.l.b16 %v38
    %v332 = vunpack.c.h.b16 %v38
    %v333 = vunpack.c.l.b16 %v39
    %v334 = vunpack.c.h.b16 %v39
    %v335 = vpack.c.b16 %v311, %v309
    %v336 = vpack.c.b16 %v312, %v310
    %v337 = vpack.c.b16 %v315, %v313
    %v338 = vpack.c.b16 %v316, %v314
    %v339 = vpack.c.b16 %v319, %v317
    %v340 = vpack.c.b16 %v320, %v318
    %v341 = vpack.c.b16 %v323, %v321
    %v342 = vpack.c.b16 %v324, %v322
    %v343 = vpack.c.b16 %v327, %v325
    %v344 = vpack.c.b16 %v328, %v326
    %v345 = vpack.c.b16 %v331, %v329
    %v346 = vpack.c.b16 %v332, %v330
    %v347 = vpack.c.b16 %v333, %v333
    %v348 = vpack.c.b16 %v334, %v334
    %v619 = vunpack.c.l.b16 %v40
    %v620 = vunpack.c.h.b16 %v40
    %v621 = vunpack.c.l.b16 %v41
    %v622 = vunpack.c.h.b16 %v41
    %v623 = vunpack.c.l.b16 %v42
    %v624 = vunpack.c.h.b16 %v42
    %v625 = vunpack.c.l.b16 %v43
    %v626 = vunpack.c.h.b16 %v43
    %v627 = vunpack.c.l.b16 %v44
    %v628 = vunpack.c.h.b16 %v44
    %v629 = vunpack.c.l.b16 %v45
    %v630 = vunpack.c.h.b16 %v45
    %v631 = vunpack.c.l.b16 %v46
    %v632 = vunpack.c.h.b16 %v46
    %v633 = vunpack.c.l.b16 %v47
    %v634 = vunpack.c.h.b16 %v47
    %v635 = vunpack.c.l.b16 %v48
    %v636 = vunpack.c.h.b16 %v48
    %v637 = vunpack.c.l.b16 %v49
    %v638 = vunpack.c.h.b16 %v49
    %v639 = vunpack.c.l.b16 %v50
    %v640 = vunpack.c.h.b16 %v50
    %v641 = vunpack.c.l.b16 %v51
    %v642 = vunpack.c.h.b16 %v51
    %v643 = vunpack.c.l.b16 %v52
    %v644 = vunpack.c.h.b16 %v52
    %v645 = vunpack.c.l.b16 %v53
    %v646 = vunpack.c.h.b16 %v53
    %v647 = vunpack.c.l.b16 %v54
    %v648 = vunpack.c.h.b16 %v54
    %v649 = vunpack.c.l.b16 %v55
    %v650 = vunpack.c.h.b16 %v55
    %v651 = vunpack.c.l.b16 %v56
    %v652 = vunpack.c.h.b16 %v56
    %v653 = vunpack.c.l.b16 %v57
    %v654 = vunpack.c.h.b16 %v57
    %v655 = vunpack.c.l.b16 %v58
    %v656 = vunpack.c.h.b16 %v58
    %v657 = vunpack.c.l.b16 %v59
    %v658 = vunpack.c.h.b16 %v59
    %v659 = vunpack.c.l.b16 %v60
    %v660 = vunpack.c.h.b16 %v60
    %v661 = vunpack.c.l.b16 %v61
    %v662 = vunpack.c.h.b16 %v61
    %v663 = vunpack.c.l.b16 %v62
    %v664 = vunpack.c.h.b16 %v62
    %v665 = vunpack.c.l.b16 %v63
    %v666 = vunpack.c.h.b16 %v63
    %v667 = vunpack.c.l.b16 %v64
    %v668 = vunpack.c.h.b16 %v64
    %v669 = vunpack.c.l.b16 %v65
    %v670 = vunpack.c.h.b16 %v65
    %v671 = vunpack.c.l.b16 %v66
    %v672 = vunpack.c.h.b16 %v66
    %v673 = vunpack.c.l.b16 %v67
    %v674 = vunpack.c.h.b16 %v67
    %v675 = vunpack.c.l.b16 %v68
    %v676 = vunpack.c.h.b16 %v68
    %v677 = vunpack.c.l.b16 %v69
    %v678 = vunpack.c.h.b16 %v69
    %v679 = vunpack.c.l.b16 %v70
    %v680 = vunpack.c.h.b16 %v70
    %v681 = vunpack.c.l.b16 %v71
    %v682 = vunpack.c.h.b16 %v71
    %v683 = vunpack.c.l.b16 %v72
    %v684 = vunpack.c.h.b16 %v72
    %v685 = vunpack.c.l.b16 %v73
    %v686 = vunpack.c.h.b16 %v73
    %v687 = vunpack.c.l.b16 %v74
    %v688 = vunpack.c.h.b16 %v74
    %v689 = vunpack.c.l.b16 %v75
    %v690 = vunpack.c.h.b16 %v75
    %v691 = vunpack.c.l.b16 %v76
    %v692 = vunpack.c.h.b16 %v76
    %v693 = vunpack.c.l.b16 %v77
    %v694 = vunpack.c.h.b16 %v77
    %v695 = vunpack.c.l.b16 %v78
    %v696 = vunpack.c.h.b16 %v78
    %v697 = vunpack.c.l.b16 %v79
    %v698 = vunpack.c.h.b16 %v79
    %v699 = vunpack.c.l.b16 %v80
    %v700 = vunpack.c.h.b16 %v80
    %v701 = vunpack.c.l.b16 %v81
    %v702 = vunpack.c.h.b16 %v81
    %v703 = vunpack.c.l.b16 %v82
    %v704 = vunpack.c.h.b16 %v82
    %v705 = vunpack.c.l.b16 %v83
    %v706 = vunpack.c.h.b16 %v83
    %v707 = vunpack.c.l.b16 %v84
    %v708 = vunpack.c.h.b16 %v84
    %v709 = vunpack.c.l.b16 %v85
    %v710 = vunpack.c.h.b16 %v85
    %v711 = vunpack.c.l.b16 %v86
    %v712 = vunpack.c.h.b16 %v86
    %v713 = vunpack.c.l.b16 %v87
    %v714 = vunpack.c.h.b16 %v87
    %v715 = vunpack.c.l.b16 %v88
    %v716 = vunpack.c.h.b16 %v88
    %v717 = vunpack.c.l.b16 %v89
    %v718 = vunpack.c.h.b16 %v89
    %v719 = vunpack.c.l.b16 %v90
    %v720 = vunpack.c.h.b16 %v90
    %v721 = vunpack.c.l.b16 %v91
    %v722 = vunpack.c.h.b16 %v91
    %v723 = vunpack.c.l.b16 %v92
    %v724 = vunpack.c.h.b16 %v92
    %v725 = vunpack.c.l.b16 %v93
    %v726 = vunpack.c.h.b16 %v93
    %v727 = vunpack.c.l.b16 %v94
    %v728 = vunpack.c.h.b16 %v94
    %v729 = vunpack.c.l.b16 %v95
    %v730 = vunpack.c.h.b16 %v95
    %v731 = vunpack.c.l.b16 %v96
    %v732 = vunpack.c.h.b16 %v96
    %v733 = vunpack.c.l.b16 %v97
    %v734 = vunpack.c.h.b16 %v97
    %v735 = vunpack.c.l.b16 %v98
    %v736 = vunpack.c.h.b16 %v98
    %v737 = vunpack.c.l.b16 %v99
    %v738 = vunpack.c.h.b16 %v99
    %v739 = vunpack.c.l.b16 %v100
    %v740 = vunpack.c.h.b16 %v100
    %v741 = vunpack.c.l.b16 %v101
    %v742 = vunpack.c.h.b16 %v101
    %v743 = vunpack.c.l.b16 %v102
    %v744 = vunpack.c.h.b16 %v102
    %v745 = vunpack.c.l.b16 %v103
    %v746 = vunpack.c.h.b16 %v103
    %v747 = vunpack.c.l.b16 %v104
    %v748 = vunpack.c.h.b16 %v104
    %v749 = vunpack.c.l.b16 %v105
    %v750 = vunpack.c.h.b16 %v105
    %v751 = vunpack.c.l.b16 %v106
    %v752 = vunpack.c.h.b16 %v106
    %v753 = vunpack.c.l.b16 %v107
    %v754 = vunpack.c.h.b16 %v107
    %v755 = vunpack.c.l.b16 %v108
    %v756 = vunpack.c.h.b16 %v108
    %v757 = vunpack.c.l.b16 %v109
    %v758 = vunpack.c.h.b16 %v109
    %v759 = vunpack.c.l.b16 %v110
    %v760 = vunpack.c.h.b16 %v110
    %v761 = vunpack.c.l.b16 %v111
    %v762 = vunpack.c.h.b16 %v111
    %v763 = vunpack.c.l.b16 %v112
    %v764 = vunpack.c.h.b16 %v112
    %v765 = vunpack.c.l.b16 %v113
    %v766 = vunpack.c.h.b16 %v113
    %v767 = vunpack.c.l.b16 %v114
    %v768 = vunpack.c.h.b16 %v114
    %v769 = vunpack.c.l.b16 %v115
    %v770 = vunpack.c.h.b16 %v115
    %v771 = vunpack.c.l.b16 %v116
    %v772 = vunpack.c.h.b16 %v116
    %v773 = vunpack.c.l.b16 %v117
    %v774 = vunpack.c.h.b16 %v117
    %v775 = vunpack.c.l.b16 %v118
    %v776 = vunpack.c.h.b16 %v118
    %v777 = vunpack.c.l.b16 %v119
    %v778 = vunpack.c.h.b16 %v119
    %v779 = vunpack.c.l.b16 %v120
    %v780 = vunpack.c.h.b16 %v120
    %v781 = vunpack.c.l.b16 %v121
    %v782 = vunpack.c.h.b16 %v121
    %v783 = vunpack.c.l.b16 %v122
    %v784 = vunpack.c.h.b16 %v122
    %v785 = vunpack.c.l.b16 %v123
    %v786 = vunpack.c.h.b16 %v123
    %v787 = vunpack.c.l.b16 %v124
    %v788 = vunpack.c.h.b16 %v124
    %v789 = vunpack.c.l.b16 %v125
    %v790 = vunpack.c.h.b16 %v125
    %v791 = vunpack.c.l.b16 %v126
    %v792 = vunpack.c.h.b16 %v126
    %v793 = vunpack.c.l.b16 %v127
    %v794 = vunpack.c.h.b16 %v127
    %v795 = vunpack.c.l.b16 %v128
    %v796 = vunpack.c.h.b16 %v128
    %v797 = vunpack.c.l.b16 %v129
    %v798 = vunpack.c.h.b16 %v129
    %v799 = vunpack.c.l.b16 %v130
    %v800 = vunpack.c.h.b16 %v130
    %v801 = vunpack.c.l.b16 %v131
    %v802 = vunpack.c.h.b16 %v131
    %v803 = vunpack.c.l.b16 %v132
    %v804 = vunpack.c.h.b16 %v132
    %v805 = vunpack.c.l.b16 %v133
    %v806 = vunpack.c.h.b16 %v133
    %v807 = vunpack.c.l.b16 %v134
    %v808 = vunpack.c.h.b16 %v134
    %v809 = vunpack.c.l.b16 %v135
    %v810 = vunpack.c.h.b16 %v135
    %v811 = vunpack.c.l.b16 %v136
    %v812 = vunpack.c.h.b16 %v136
    %v813 = vunpack.c.l.b16 %v137
    %v814 = vunpack.c.h.b16 %v137
    %v815 = vunpack.c.l.b16 %v138
    %v816 = vunpack.c.h.b16 %v138
    %v817 = vunpack.c.l.b16 %v139
    %v818 = vunpack.c.h.b16 %v139
    %v819 = vunpack.c.l.b16 %v140
    %v820 = vunpack.c.h.b16 %v140
    %v821 = vunpack.c.l.b16 %v141
    %v822 = vunpack.c.h.b16 %v141
    %v823 = vunpack.c.l.b16 %v142
    %v824 = vunpack.c.h.b16 %v142
    %v825 = vunpack.c.l.b16 %v143
    %v826 = vunpack.c.h.b16 %v143
    %v827 = vunpack.c.l.b16 %v144
    %v828 = vunpack.c.h.b16 %v144
    %v829 = vunpack.c.l.b16 %v145
    %v830 = vunpack.c.h.b16 %v145
    %v831 = vunpack.c.l.b16 %v146
    %v832 = vunpack.c.h.b16 %v146
    %v833 = vunpack.c.l.b16 %v147
    %v834 = vunpack.c.h.b16 %v147
    %v835 = vunpack.c.l.b16 %v148
    %v836 = vunpack.c.h.b16 %v148
    %v837 = vunpack.c.l.b16 %v149
    %v838 = vunpack.c.h.b16 %v149
    %v839 = vunpack.c.l.b16 %v150
    %v840 = vunpack.c.h.b16 %v150
    %v841 = vunpack.c.l.b16 %v151
    %v842 = vunpack.c.h.b16 %v151
    %v843 = vunpack.c.l.b16 %v152
    %v844 = vunpack.c.h.b16 %v152
    %v845 = vunpack.c.l.b16 %v153
    %v846 = vunpack.c.h.b16 %v153
    %v847 = vunpack.c.l.b16 %v154
    %v848 = vunpack.c.h.b16 %v154
    %v849 = vunpack.c.l.b16 %v155
    %v850 = vunpack.c.h.b16 %v155
    %v851 = vunpack.c.l.b16 %v156
    %v852 = vunpack.c.h.b16 %v156
    %v853 = vunpack.c.l.b16 %v157
    %v854 = vunpack.c.h.b16 %v157
    %v855 = vunpack.c.l.b16 %v158
    %v856 = vunpack.c.h.b16 %v158
    %v857 = vunpack.c.l.b16 %v159
    %v858 = vunpack.c.h.b16 %v159
    %v859 = vunpack.c.l.b16 %v160
    %v860 = vunpack.c.h.b16 %v160
    %v861 = vunpack.c.l.b16 %v161
    %v862 = vunpack.c.h.b16 %v161
    %v863 = vunpack.c.l.b16 %v162
    %v864 = vunpack.c.h.b16 %v162
    %v865 = vunpack.c.l.b16 %v163
    %v866 = vunpack.c.h.b16 %v163
    %v867 = vunpack.c.l.b16 %v164
    %v868 = vunpack.c.h.b16 %v164
    %v869 = vunpack.c.l.b16 %v165
    %v870 = vunpack.c.h.b16 %v165
    %v871 = vunpack.c.l.b16 %v166
    %v872 = vunpack.c.h.b16 %v166
    %v873 = vunpack.c.l.b16 %v167
    %v874 = vunpack.c.h.b16 %v167
    %v875 = vunpack.c.l.b16 %v168
    %v876 = vunpack.c.h.b16 %v168
    %v877 = vunpack.c.l.b16 %v169
    %v878 = vunpack.c.h.b16 %v169
    %v879 = vunpack.c.l.b16 %v170
    %v880 = vunpack.c.h.b16 %v170
    %v881 = vunpack.c.l.b16 %v171
    %v882 = vunpack.c.h.b16 %v171
    %v883 = vunpack.c.l.b16 %v172
    %v884 = vunpack.c.h.b16 %v172
    %v885 = vunpack.c.l.b16 %v173
    %v886 = vunpack.c.h.b16 %v173
    %v887 = vunpack.c.l.b16 %v174
    %v888 = vunpack.c.h.b16 %v174
    %v889 = vunpack.c.l.b16 %v175
    %v890 = vunpack.c.h.b16 %v175
    %v891 = vunpack.c.l.b16 %v176
    %v892 = vunpack.c.h.b16 %v176
    %v893 = vunpack.c.l.b16 %v177
    %v894 = vunpack.c.h.b16 %v177
    %v895 = vunpack.c.l.b16 %v178
    %v896 = vunpack.c.h.b16 %v178
    %v897 = vunpack.c.l.b16 %v179
    %v898 = vunpack.c.h.b16 %v179
    %v899 = vunpack.c.l.b16 %v180
    %v900 = vunpack.c.h.b16 %v180
    %v901 = vunpack.c.l.b16 %v181
    %v902 = vunpack.c.h.b16 %v181
    %v903 = vunpack.c.l.b16 %v182
    %v904 = vunpack.c.h.b16 %v182
    %v905 = vunpack.c.l.b16 %v183
    %v906 = vunpack.c.h.b16 %v183
    %v907 = vunpack.c.l.b16 %v184
    %v908 = vunpack.c.h.b16 %v184
    %v909 = vunpack.c.l.b16 %v185
    %v910 = vunpack.c.h.b16 %v185
    %v911 = vunpack.c.l.b16 %v186
    %v912 = vunpack.c.h.b16 %v186
    %v913 = vunpack.c.l.b16 %v187
    %v914 = vunpack.c.h.b16 %v187
    %v915 = vunpack.c.l.b16 %v188
    %v916 = vunpack.c.h.b16 %v188
    %v917 = vunpack.c.l.b16 %v189
    %v918 = vunpack.c.h.b16 %v189
    %v919 = vunpack.c.l.b16 %v190
    %v920 = vunpack.c.h.b16 %v190
    %v921 = vunpack.c.l.b16 %v191
    %v922 = vunpack.c.h.b16 %v191
    %v923 = vunpack.c.l.b16 %v192
    %v924 = vunpack.c.h.b16 %v192
    %v925 = vunpack.c.l.b16 %v193
    %v926 = vunpack.c.h.b16 %v193
    %v927 = vunpack.c.l.b16 %v194
    %v928 = vunpack.c.h.b16 %v194
    %v929 = vunpack.c.l.b16 %v195
    %v930 = vunpack.c.h.b16 %v195
    %v931 = vunpack.c.l.b16 %v196
    %v932 = vunpack.c.h.b16 %v196
    %v933 = vunpack.c.l.b16 %v197
    %v934 = vunpack.c.h.b16 %v197
    %v935 = vunpack.c.l.b16 %v198
    %v936 = vunpack.c.h.b16 %v198
    %v937 = vunpack.c.l.b16 %v199
    %v938 = vunpack.c.h.b16 %v199
    %v939 = vunpack.c.l.b16 %v200
    %v940 = vunpack.c.h.b16 %v200
    %v941 = vunpack.c.l.b16 %v201
    %v942 = vunpack.c.h.b16 %v201
    %v943 = vunpack.c.l.b16 %v202
    %v944 = vunpack.c.h.b16 %v202
    %v945 = vunpack.c.l.b16 %v203
    %v946 = vunpack.c.h.b16 %v203
    %v947 = vunpack.c.l.b16 %v204
    %v948 = vunpack.c.h.b16 %v204
    %v949 = vunpack.c.l.b16 %v205
    %v950 = vunpack.c.h.b16 %v205
    %v951 = vunpack.c.l.b16 %v206
    %v952 = vunpack.c.h.b16 %v206
    %v953 = vunpack.c.l.b16 %v207
    %v954 = vunpack.c.h.b16 %v207
    %v955 = vunpack.c.l.b16 %v208
    %v956 = vunpack.c.h.b16 %v208
    %v957 = vunpack.c.l.b16 %v209
    %v958 = vunpack.c.h.b16 %v209
    %v959 = vunpack.c.l.b16 %v210
    %v960 = vunpack.c.h.b16 %v210
    %v961 = vunpack.c.l.b16 %v211
    %v962 = vunpack.c.h.b16 %v211
    %v963 = vunpack.c.l.b16 %v212
    %v964 = vunpack.c.h.b16 %v212
    %v965 = vunpack.c.l.b16 %v213
    %v966 = vunpack.c.h.b16 %v213
    %v967 = vunpack.c.l.b16 %v214
    %v968 = vunpack.c.h.b16 %v214
    %v969 = vunpack.c.l.b16 %v215
    %v970 = vunpack.c.h.b16 %v215
    %v971 = vunpack.c.l.b16 %v216
    %v972 = vunpack.c.h.b16 %v216
    %v973 = vunpack.c.l.b16 %v217
    %v974 = vunpack.c.h.b16 %v217
    %v975 = vunpack.c.l.b16 %v218
    %v976 = vunpack.c.h.b16 %v218
    %v977 = vunpack.c.l.b16 %v219
    %v978 = vunpack.c.h.b16 %v219
    %v979 = vunpack.c.l.b16 %v220
    %v980 = vunpack.c.h.b16 %v220
    %v981 = vunpack.c.l.b16 %v221
    %v982 = vunpack.c.h.b16 %v221
    %v983 = vunpack.c.l.b16 %v222
    %v984 = vunpack.c.h.b16 %v222
    %v985 = vunpack.c.l.b16 %v223
    %v986 = vunpack.c.h.b16 %v223
    %v987 = vunpack.c.l.b16 %v224
    %v988 = vunpack.c.h.b16 %v224
    %v989 = vunpack.c.l.b16 %v225
    %v990 = vunpack.c.h.b16 %v225
    %v991 = vunpack.c.l.b16 %v226
    %v992 = vunpack.c.h.b16 %v226
    %v993 = vunpack.c.l.b16 %v227
    %v994 = vunpack.c.h.b16 %v227
    %v995 = vunpack.c.l.b16 %v228
    %v996 = vunpack.c.h.b16 %v228
    %v997 = vunpack.c.l.b16 %v229
    %v998 = vunpack.c.h.b16 %v229
    %v999 = vunpack.c.l.b16 %v230
    %v1000 = vunpack.c.h.b16 %v230
    %v1001 = vunpack.c.l.b16 %v231
    %v1002 = vunpack.c.h.b16 %v231
    %v1003 = vunpack.c.l.b16 %v232
    %v1004 = vunpack.c.h.b16 %v232
    %v1005 = vunpack.c.l.b16 %v233
    %v1006 = vunpack.c.h.b16 %v233
    %v1007 = vunpack.c.l.b16 %v234
    %v1008 = vunpack.c.h.b16 %v234
    %v1009 = vunpack.c.l.b16 %v235
    %v1010 = vunpack.c.h.b16 %v235
    %v1011 = vunpack.c.l.b16 %v236
    %v1012 = vunpack.c.h.b16 %v236
    %v1013 = vunpack.c.l.b16 %v237
    %v1014 = vunpack.c.h.b16 %v237
    %v1015 = vunpack.c.l.b16 %v238
    %v1016 = vunpack.c.h.b16 %v238
    %v1017 = vunpack.c.l.b16 %v239
    %v1018 = vunpack.c.h.b16 %v239
    %v1019 = vunpack.c.l.b16 %v240
    %v1020 = vunpack.c.h.b16 %v240
    %v1021 = vunpack.c.l.b16 %v241
    %v1022 = vunpack.c.h.b16 %v241
    %v1023 = vunpack.c.l.b16 %v242
    %v1024 = vunpack.c.h.b16 %v242
    %v1025 = vunpack.c.l.b16 %v243
    %v1026 = vunpack.c.h.b16 %v243
    %v1027 = vunpack.c.l.b16 %v244
    %v1028 = vunpack.c.h.b16 %v244
    %v1029 = vunpack.c.l.b16 %v245
    %v1030 = vunpack.c.h.b16 %v245
    %v1031 = vunpack.c.l.b16 %v246
    %v1032 = vunpack.c.h.b16 %v246
    %v1033 = vunpack.c.l.b16 %v247
    %v1034 = vunpack.c.h.b16 %v247
    %v1035 = vunpack.c.l.b16 %v248
    %v1036 = vunpack.c.h.b16 %v248
    %v1037 = vunpack.c.l.b16 %v249
    %v1038 = vunpack.c.h.b16 %v249
    %v1039 = vunpack.c.l.b16 %v250
    %v1040 = vunpack.c.h.b16 %v250
    %v1041 = vunpack.c.l.b16 %v251
    %v1042 = vunpack.c.h.b16 %v251
    %v1043 = vunpack.c.l.b16 %v252
    %v1044 = vunpack.c.h.b16 %v252
    %v1045 = vunpack.c.l.b16 %v253
    %v1046 = vunpack.c.h.b16 %v253
    %v1047 = vunpack.c.l.b16 %v254
    %v1048 = vunpack.c.h.b16 %v254
    %v1049 = vunpack.c.l.b16 %v255
    %v1050 = vunpack.c.h.b16 %v255
    %v1051 = vunpack.c.l.b16 %v256
    %v1052 = vunpack.c.h.b16 %v256
    %v1053 = vunpack.c.l.b16 %v257
    %v1054 = vunpack.c.h.b16 %v257
    %v1055 = vunpack.c.l.b16 %v258
    %v1056 = vunpack.c.h.b16 %v258
    %v1057 = vunpack.c.l.b16 %v259
    %v1058 = vunpack.c.h.b16 %v259
    %v1059 = vunpack.c.l.b16 %v260
    %v1060 = vunpack.c.h.b16 %v260
    %v1061 = vunpack.c.l.b16 %v261
    %v1062 = vunpack.c.h.b16 %v261
    %v1063 = vunpack.c.l.b16 %v262
    %v1064 = vunpack.c.h.b16 %v262
    %v1065 = vunpack.c.l.b16 %v263
    %v1066 = vunpack.c.h.b16 %v263
    %v1067 = vunpack.c.l.b16 %v264
    %v1068 = vunpack.c.h.b16 %v264
    %v1069 = vunpack.c.l.b16 %v265
    %v1070 = vunpack.c.h.b16 %v265
    %v1071 = vunpack.c.l.b16 %v266
    %v1072 = vunpack.c.h.b16 %v266
    %v1073 = vunpack.c.l.b16 %v267
    %v1074 = vunpack.c.h.b16 %v267
    %v1075 = vunpack.c.l.b16 %v268
    %v1076 = vunpack.c.h.b16 %v268
    %v1077 = vunpack.c.l.b16 %v269
    %v1078 = vunpack.c.h.b16 %v269
    %v1079 = vunpack.c.l.b16 %v270
    %v1080 = vunpack.c.h.b16 %v270
    %v1081 = vunpack.c.l.b16 %v271
    %v1082 = vunpack.c.h.b16 %v271
    %v1083 = vunpack.c.l.b16 %v272
    %v1084 = vunpack.c.h.b16 %v272
    %v1085 = vunpack.c.l.b16 %v273
    %v1086 = vunpack.c.h.b16 %v273
    %v1087 = vunpack.c.l.b16 %v274
    %v1088 = vunpack.c.h.b16 %v274
    %v1089 = vunpack.c.l.b16 %v275
    %v1090 = vunpack.c.h.b16 %v275
    %v1091 = vunpack.c.l.b16 %v276
    %v1092 = vunpack.c.h.b16 %v276
    %v1093 = vunpack.c.l.b16 %v277
    %v1094 = vunpack.c.h.b16 %v277
    %v1095 = vunpack.c.l.b16 %v278
    %v1096 = vunpack.c.h.b16 %v278
    %v1097 = vunpack.c.l.b16 %v279
    %v1098 = vunpack.c.h.b16 %v279
    %v1099 = vunpack.c.l.b16 %v280
    %v1100 = vunpack.c.h.b16 %v280
    %v1101 = vunpack.c.l.b16 %v281
    %v1102 = vunpack.c.h.b16 %v281
    %v1103 = vunpack.c.l.b16 %v282
    %v1104 = vunpack.c.h.b16 %v282
    %v1105 = vunpack.c.l.b16 %v283
    %v1106 = vunpack.c.h.b16 %v283
    %v1107 = vunpack.c.l.b16 %v284
    %v1108 = vunpack.c.h.b16 %v284
    %v1109 = vunpack.c.l.b16 %v285
    %v1110 = vunpack.c.h.b16 %v285
    %v1111 = vunpack.c.l.b16 %v286
    %v1112 = vunpack.c.h.b16 %v286
    %v1113 = vunpack.c.l.b16 %v287
    %v1114 = vunpack.c.h.b16 %v287
    %v1115 = vunpack.c.l.b16 %v288
    %v1116 = vunpack.c.h.b16 %v288
    %v1117 = vunpack.c.l.b16 %v289
    %v1118 = vunpack.c.h.b16 %v289
    %v1119 = vunpack.c.l.b16 %v290
    %v1120 = vunpack.c.h.b16 %v290
    %v1121 = vunpack.c.l.b16 %v291
    %v1122 = vunpack.c.h.b16 %v291
    %v1123 = vunpack.c.l.b16 %v292
    %v1124 = vunpack.c.h.b16 %v292
    %v1125 = vunpack.c.l.b16 %v293
    %v1126 = vunpack.c.h.b16 %v293
    %v1127 = vunpack.c.l.b16 %v294
    %v1128 = vunpack.c.h.b16 %v294
    %v1129 = vunpack.c.l.b16 %v295
    %v1130 = vunpack.c.h.b16 %v295
    %v1131 = vpack.c.b16 %v635, %v619
    %v1132 = vpack.c.b16 %v636, %v620
    %v1133 = vpack.c.b16 %v637, %v621
    %v1134 = vpack.c.b16 %v638, %v622
    %v1135 = vpack.c.b16 %v639, %v623
    %v1136 = vpack.c.b16 %v640, %v624
    %v1137 = vpack.c.b16 %v641, %v625
    %v1138 = vpack.c.b16 %v642, %v626
    %v1139 = vpack.c.b16 %v643, %v627
    %v1140 = vpack.c.b16 %v644, %v628
    %v1141 = vpack.c.b16 %v645, %v629
    %v1142 = vpack.c.b16 %v646, %v630
    %v1143 = vpack.c.b16 %v647, %v631
    %v1144 = vpack.c.b16 %v648, %v632
    %v1145 = vpack.c.b16 %v649, %v633
    %v1146 = vpack.c.b16 %v650, %v634
    %v1147 = vpack.c.b16 %v667, %v651
    %v1148 = vpack.c.b16 %v668, %v652
    %v1149 = vpack.c.b16 %v669, %v653
    %v1150 = vpack.c.b16 %v670, %v654
    %v1151 = vpack.c.b16 %v671, %v655
    %v1152 = vpack.c.b16 %v672, %v656
    %v1153 = vpack.c.b16 %v673, %v657
    %v1154 = vpack.c.b16 %v674, %v658
    %v1155 = vpack.c.b16 %v675, %v659
    %v1156 = vpack.c.b16 %v676, %v660
    %v1157 = vpack.c.b16 %v677, %v661
    %v1158 = vpack.c.b16 %v678, %v662
    %v1159 = vpack.c.b16 %v679, %v663
    %v1160 = vpack.c.b16 %v680, %v664
    %v1161 = vpack.c.b16 %v681, %v665
    %v1162 = vpack.c.b16 %v682, %v666
    %v1163 = vpack.c.b16 %v699, %v683
    %v1164 = vpack.c.b16 %v700, %v684
    %v1165 = vpack.c.b16 %v701, %v685
    %v1166 = vpack.c.b16 %v702, %v686
    %v1167 = vpack.c.b16 %v703, %v687
    %v1168 = vpack.c.b16 %v704, %v688
    %v1169 = vpack.c.b16 %v705, %v689
    %v1170 = vpack.c.b16 %v706, %v690
    %v1171 = vpack.c.b16 %v707, %v691
    %v1172 = vpack.c.b16 %v708, %v692
    %v1173 = vpack.c.b16 %v709, %v693
    %v1174 = vpack.c.b16 %v710, %v694
    %v1175 = vpack.c.b16 %v711, %v695
    %v1176 = vpack.c.b16 %v712, %v696
    %v1177 = vpack.c.b16 %v713, %v697
    %v1178 = vpack.c.b16 %v714, %v698
    %v1179 = vpack.c.b16 %v731, %v715
    %v1180 = vpack.c.b16 %v732, %v716
    %v1181 = vpack.c.b16 %v733, %v717
    %v1182 = vpack.c.b16 %v734, %v718
    %v1183 = vpack.c.b16 %v735, %v719
    %v1184 = vpack.c.b16 %v736, %v720
    %v1185 = vpack.c.b16 %v737, %v721
    %v1186 = vpack.c.b16 %v738, %v722
    %v1187 = vpack.c.b16 %v739, %v723
    %v1188 = vpack.c.b16 %v740, %v724
    %v1189 = vpack.c.b16 %v741, %v725
    %v1190 = vpack.c.b16 %v742, %v726
    %v1191 = vpack.c.b16 %v743, %v727
    %v1192 = vpack.c.b16 %v744, %v728
    %v1193 = vpack.c.b16 %v745, %v729
    %v1194 = vpack.c.b16 %v746, %v730
    %v1195 = vpack.c.b16 %v763, %v747
    %v1196 = vpack.c.b16 %v764, %v748
    %v1197 = vpack.c.b16 %v765, %v749
    %v1198 = vpack.c.b16 %v766, %v750
    %v1199 = vpack.c.b16 %v767, %v751
    %v1200 = vpack.c.b16 %v768, %v752
    %v1201 = vpack.c.b16 %v769, %v753
    %v1202 = vpack.c.b16 %v770, %v754
    %v1203 = vpack.c.b16 %v771, %v755
    %v1204 = vpack.c.b16 %v772, %v756
    %v1205 = vpack.c.b16 %v773, %v757
    %v1206 = vpack.c.b16 %v774, %v758
    %v1207 = vpack.c.b16 %v775, %v759
    %v1208 = vpack.c.b16 %v776, %v760
    %v1209 = vpack.c.b16 %v777, %v761
    %v1210 = vpack.c.b16 %v778, %v762
    %v1211 = vpack.c.b16 %v795, %v779
    %v1212 = vpack.c.b16 %v796, %v780
    %v1213 = vpack.c.b16 %v797, %v781
    %v1214 = vpack.c.b16 %v798, %v782
    %v1215 = vpack.c.b16 %v799, %v783
    %v1216 = vpack.c.b16 %v800, %v784
    %v1217 = vpack.c.b16 %v801, %v785
    %v1218 = vpack.c.b16 %v802, %v786
    %v1219 = vpack.c.b16 %v803, %v787
    %v1220 = vpack.c.b16 %v804, %v788
    %v1221 = vpack.c.b16 %v805, %v789
    %v1222 = vpack.c.b16 %v806, %v790
    %v1223 = vpack.c.b16 %v807, %v791
    %v1224 = vpack.c.b16 %v808, %v792
    %v1225 = vpack.c.b16 %v809, %v793
    %v1226 = vpack.c.b16 %v810, %v794
    %v1227 = vpack.c.b16 %v827, %v811
    %v1228 = vpack.c.b16 %v828, %v812
    %v1229 = vpack.c.b16 %v829, %v813
    %v1230 = vpack.c.b16 %v830, %v814
    %v1231 = vpack.c.b16 %v831, %v815
    %v1232 = vpack.c.b16 %v832, %v816
    %v1233 = vpack.c.b16 %v833, %v817
    %v1234 = vpack.c.b16 %v834, %v818
    %v1235 = vpack.c.b16 %v835, %v819
    %v1236 = vpack.c.b16 %v836, %v820
    %v1237 = vpack.c.b16 %v837, %v821
    %v1238 = vpack.c.b16 %v838, %v822
    %v1239 = vpack.c.b16 %v839, %v823
    %v1240 = vpack.c.b16 %v840, %v824
    %v1241 = vpack.c.b16 %v841, %v825
    %v1242 = vpack.c.b16 %v842, %v826
    %v1243 = vpack.c.b16 %v859, %v843
    %v1244 = vpack.c.b16 %v860, %v844
    %v1245 = vpack.c.b16 %v861, %v845
    %v1246 = vpack.c.b16 %v862, %v846
    %v1247 = vpack.c.b16 %v863, %v847
    %v1248 = vpack.c.b16 %v864, %v848
    %v1249 = vpack.c.b16 %v865, %v849
    %v1250 = vpack.c.b16 %v866, %v850
    %v1251 = vpack.c.b16 %v867, %v851
    %v1252 = vpack.c.b16 %v868, %v852
    %v1253 = vpack.c.b16 %v869, %v853
    %v1254 = vpack.c.b16 %v870, %v854
    %v1255 = vpack.c.b16 %v871, %v855
    %v1256 = vpack.c.b16 %v872, %v856
    %v1257 = vpack.c.b16 %v873, %v857
    %v1258 = vpack.c.b16 %v874, %v858
    %v1259 = vpack.c.b16 %v891, %v875
    %v1260 = vpack.c.b16 %v892, %v876
    %v1261 = vpack.c.b16 %v893, %v877
    %v1262 = vpack.c.b16 %v894, %v878
    %v1263 = vpack.c.b16 %v895, %v879
    %v1264 = vpack.c.b16 %v896, %v880
    %v1265 = vpack.c.b16 %v897, %v881
    %v1266 = vpack.c.b16 %v898, %v882
    %v1267 = vpack.c.b16 %v899, %v883
    %v1268 = vpack.c.b16 %v900, %v884
    %v1269 = vpack.c.b16 %v901, %v885
    %v1270 = vpack.c.b16 %v902, %v886
    %v1271 = vpack.c.b16 %v903, %v887
    %v1272 = vpack.c.b16 %v904, %v888
    %v1273 = vpack.c.b16 %v905, %v889
    %v1274 = vpack.c.b16 %v906, %v890
    %v1275 = vpack.c.b16 %v923, %v907
    %v1276 = vpack.c.b16 %v924, %v908
    %v1277 = vpack.c.b16 %v925, %v909
    %v1278 = vpack.c.b16 %v926, %v910
    %v1279 = vpack.c.b16 %v927, %v911
    %v1280 = vpack.c.b16 %v928, %v912
    %v1281 = vpack.c.b16 %v929, %v913
    %v1282 = vpack.c.b16 %v930, %v914
    %v1283 = vpack.c.b16 %v931, %v915
    %v1284 = vpack.c.b16 %v932, %v916
    %v1285 = vpack.c.b16 %v933, %v917
    %v1286 = vpack.c.b16 %v934, %v918
    %v1287 = vpack.c.b16 %v935, %v919
    %v1288 = vpack.c.b16 %v936, %v920
    %v1289 = vpack.c.b16 %v937, %v921
    %v1290 = vpack.c.b16 %v938, %v922
    %v1291 = vpack.c.b16 %v955, %v939
    %v1292 = vpack.c.b16 %v956, %v940
    %v1293 = vpack.c.b16 %v957, %v941
    %v1294 = vpack.c.b16 %v958, %v942
    %v1295 = vpack.c.b16 %v959, %v943
    %v1296 = vpack.c.b16 %v960, %v944
    %v1297 = vpack.c.b16 %v961, %v945
    %v1298 = vpack.c.b16 %v962, %v946
    %v1299 = vpack.c.b16 %v963, %v947
    %v1300 = vpack.c.b16 %v964, %v948
    %v1301 = vpack.c.b16 %v965, %v949
    %v1302 = vpack.c.b16 %v966, %v950
    %v1303 = vpack.c.b16 %v967, %v951
    %v1304 = vpack.c.b16 %v968, %v952
    %v1305 = vpack.c.b16 %v969, %v953
    %v1306 = vpack.c.b16 %v970, %v954
    %v1307 = vpack.c.b16 %v987, %v971
    %v1308 = vpack.c.b16 %v988, %v972
    %v1309 = vpack.c.b16 %v989, %v973
    %v1310 = vpack.c.b16 %v990, %v974
    %v1311 = vpack.c.b16 %v991, %v975
    %v1312 = vpack.c.b16 %v992, %v976
    %v1313 = vpack.c.b16 %v993, %v977
    %v1314 = vpack.c.b16 %v994, %v978
    %v1315 = vpack.c.b16 %v995, %v979
    %v1316 = vpack.c.b16 %v996, %v980
    %v1317 = vpack.c.b16 %v997, %v981
    %v1318 = vpack.c.b16 %v998, %v982
    %v1319 = vpack.c.b16 %v999, %v983
    %v1320 = vpack.c.b16 %v1000, %v984
    %v1321 = vpack.c.b16 %v1001, %v985
    %v1322 = vpack.c.b16 %v1002, %v986
    %v1323 = vpack.c.b16 %v1019, %v1003
    %v1324 = vpack.c.b16 %v1020, %v1004
    %v1325 = vpack.c.b16 %v1021, %v1005
    %v1326 = vpack.c.b16 %v1022, %v1006
    %v1327 = vpack.c.b16 %v1023, %v1007
    %v1328 = vpack.c.b16 %v1024, %v1008
    %v1329 = vpack.c.b16 %v1025, %v1009
    %v1330 = vpack.c.b16 %v1026, %v1010
    %v1331 = vpack.c.b16 %v1027, %v1011
    %v1332 = vpack.c.b16 %v1028, %v1012
    %v1333 = vpack.c.b16 %v1029, %v1013
    %v1334 = vpack.c.b16 %v1030, %v1014
    %v1335 = vpack.c.b16 %v1031, %v1015
    %v1336 = vpack.c.b16 %v1032, %v1016
    %v1337 = vpack.c.b16 %v1033, %v1017
    %v1338 = vpack.c.b16 %v1034, %v1018
    %v1339 = vpack.c.b16 %v1051, %v1035
    %v1340 = vpack.c.b16 %v1052, %v1036
    %v1341 = vpack.c.b16 %v1053, %v1037
    %v1342 = vpack.c.b16 %v1054, %v1038
    %v1343 = vpack.c.b16 %v1055, %v1039
    %v1344 = vpack.c.b16 %v1056, %v1040
    %v1345 = vpack.c.b16 %v1057, %v1041
    %v1346 = vpack.c.b16 %v1058, %v1042
    %v1347 = vpack.c.b16 %v1059, %v1043
    %v1348 = vpack.c.b16 %v1060, %v1044
    %v1349 = vpack.c.b16 %v1061, %v1045
    %v1350 = vpack.c.b16 %v1062, %v1046
    %v1351 = vpack.c.b16 %v1063, %v1047
    %v1352 = vpack.c.b16 %v1064, %v1048
    %v1353 = vpack.c.b16 %v1065, %v1049
    %v1354 = vpack.c.b16 %v1066, %v1050
    %v1355 = vpack.c.b16 %v1083, %v1067
    %v1356 = vpack.c.b16 %v1084, %v1068
    %v1357 = vpack.c.b16 %v1085, %v1069
    %v1358 = vpack.c.b16 %v1086, %v1070
    %v1359 = vpack.c.b16 %v1087, %v1071
    %v1360 = vpack.c.b16 %v1088, %v1072
    %v1361 = vpack.c.b16 %v1089, %v1073
    %v1362 = vpack.c.b16 %v1090, %v1074
    %v1363 = vpack.c.b16 %v1091, %v1075
    %v1364 = vpack.c.b16 %v1092, %v1076
    %v1365 = vpack.c.b16 %v1093, %v1077
    %v1366 = vpack.c.b16 %v1094, %v1078
    %v1367 = vpack.c.b16 %v1095, %v1079
    %v1368 = vpack.c.b16 %v1096, %v1080
    %v1369 = vpack.c.b16 %v1097, %v1081
    %v1370 = vpack.c.b16 %v1098, %v1082
    %v1371 = vpack.c.b16 %v1115, %v1099
    %v1372 = vpack.c.b16 %v1116, %v1100
    %v1373 = vpack.c.b16 %v1117, %v1101
    %v1374 = vpack.c.b16 %v1118, %v1102
    %v1375 = vpack.c.b16 %v1119, %v1103
    %v1376 = vpack.c.b16 %v1120, %v1104
    %v1377 = vpack.c.b16 %v1121, %v1105
    %v1378 = vpack.c.b16 %v1122, %v1106
    %v1379 = vpack.c.b16 %v1123, %v1107
    %v1380 = vpack.c.b16 %v1124, %v1108
    %v1381 = vpack.c.b16 %v1125, %v1109
    %v1382 = vpack.c.b16 %v1126, %v1110
    %v1383 = vpack.c.b16 %v1127, %v1111
    %v1384 = vpack.c.b16 %v1128, %v1112
    %v1385 = vpack.c.b16 %v1129, %v1113
    %v1386 = vpack.c.b16 %v1130, %v1114
    %1643 = vmatpush.bf16.msra.mxu0 %v1243
    %1644 = vmatpush.bf16.msra.mxu0 %v1227
    %1645 = vmatpush.bf16.msra.mxu0 %v1211
    %1646 = vmatpush.bf16.msra.mxu0 %v1195
    %1647 = vmatpush.bf16.msra.mxu0 %v1179
    %1648 = vmatpush.bf16.msra.mxu0 %v1163
    %1649 = vmatpush.bf16.msra.mxu0 %v1147
    %1650 = vmatpush.bf16.msra.mxu0 %v1131
    %1651 = vmatmul.bf16.gmra.mxu0 %v335
    %v1652 = vpop.f32.mrf.mxu0
    %v1653 = vadd.f32 0.0, %v1652
    %v1654 = vpop.f32.mrf.mxu0
    %v1655 = vadd.f32 0.0, %v1654
    %1656 = vmatmul.bf16.gmra.mxu0 %v337
    %v1657 = vpop.f32.mrf.mxu0
    %v1658 = vadd.f32 0.0, %v1657
    %v1659 = vpop.f32.mrf.mxu0
    %v1660 = vadd.f32 0.0, %v1659
    %1661 = vmatmul.bf16.gmra.mxu0 %v339
    %v1662 = vpop.f32.mrf.mxu0
    %v1663 = vadd.f32 0.0, %v1662
    %v1664 = vpop.f32.mrf.mxu0
    %v1665 = vadd.f32 0.0, %v1664
    %1666 = vmatmul.bf16.gmra.mxu0 %v341
    %v1667 = vpop.f32.mrf.mxu0
    %v1668 = vadd.f32 0.0, %v1667
    %v1669 = vpop.f32.mrf.mxu0
    %v1670 = vadd.f32 0.0, %v1669
    %1671 = vmatmul.bf16.gmra.mxu0 %v343
    %v1672 = vpop.f32.mrf.mxu0
    %v1673 = vadd.f32 0.0, %v1672
    %v1674 = vpop.f32.mrf.mxu0
    %v1675 = vadd.f32 0.0, %v1674
    %1676 = vmatmul.bf16.gmra.mxu0 %v345
    %v1677 = vpop.f32.mrf.mxu0
    %v1678 = vadd.f32 0.0, %v1677
    %v1679 = vpop.f32.mrf.mxu0
    %v1680 = vadd.f32 0.0, %v1679
    %1681 = vmatmul.bf16.gmra.mxu0 %v347
    %v1682 = vpop.f32.mrf.mxu0
    %v1683 = vadd.f32 0.0, %v1682
    %v1684 = vpop.f32.mrf.mxu0
    %1685 = vdwg.mxu0
    %1686 = vmatpush.bf16.msra.mxu0 %v1371
    %1687 = vmatpush.bf16.msra.mxu0 %v1355
    %1688 = vmatpush.bf16.msra.mxu0 %v1339
    %1689 = vmatpush.bf16.msra.mxu0 %v1323
    %1690 = vmatpush.bf16.msra.mxu0 %v1307
    %1691 = vmatpush.bf16.msra.mxu0 %v1291
    %1692 = vmatpush.bf16.msra.mxu0 %v1275
    %1693 = vmatpush.bf16.msra.mxu0 %v1259
    %1694 = vmatmul.bf16.gmra.mxu0 %v336
    %v1695 = vpop.f32.mrf.mxu0
    %v1696 = vadd.f32 %v1653, %v1695
    %v1697 = vpop.f32.mrf.mxu0
    %v1698 = vadd.f32 %v1655, %v1697
    %1699 = vmatmul.bf16.gmra.mxu0 %v338
    %v1700 = vpop.f32.mrf.mxu0
    %v1701 = vadd.f32 %v1658, %v1700
    %v1702 = vpop.f32.mrf.mxu0
    %v1703 = vadd.f32 %v1660, %v1702
    %1704 = vmatmul.bf16.gmra.mxu0 %v340
    %v1705 = vpop.f32.mrf.mxu0
    %v1706 = vadd.f32 %v1663, %v1705
    %v1707 = vpop.f32.mrf.mxu0
    %v1708 = vadd.f32 %v1665, %v1707
    %1709 = vmatmul.bf16.gmra.mxu0 %v342
    %v1710 = vpop.f32.mrf.mxu0
    %v1711 = vadd.f32 %v1668, %v1710
    %v1712 = vpop.f32.mrf.mxu0
    %v1713 = vadd.f32 %v1670, %v1712
    %1714 = vmatmul.bf16.gmra.mxu0 %v344
    %v1715 = vpop.f32.mrf.mxu0
    %v1716 = vadd.f32 %v1673, %v1715
    %v1717 = vpop.f32.mrf.mxu0
    %v1718 = vadd.f32 %v1675, %v1717
    %1719 = vmatmul.bf16.gmra.mxu0 %v346
    %v1720 = vpop.f32.mrf.mxu0
    %v1721 = vadd.f32 %v1678, %v1720
    %v1722 = vpop.f32.mrf.mxu0
    %v1723 = vadd.f32 %v1680, %v1722
    %1724 = vmatmul.bf16.gmra.mxu0 %v348
    %v1725 = vpop.f32.mrf.mxu0
    %v1726 = vadd.f32 %v1683, %v1725
    %v1727 = vpop.f32.mrf.mxu0
    %1728 = vdwg.mxu0
    %1729 = vmatpush.bf16.msra.mxu0 %v1244
    %1730 = vmatpush.bf16.msra.mxu0 %v1228
    %1731 = vmatpush.bf16.msra.mxu0 %v1212
    %1732 = vmatpush.bf16.msra.mxu0 %v1196
    %1733 = vmatpush.bf16.msra.mxu0 %v1180
    %1734 = vmatpush.bf16.msra.mxu0 %v1164
    %1735 = vmatpush.bf16.msra.mxu0 %v1148
    %1736 = vmatpush.bf16.msra.mxu0 %v1132
    %1737 = vmatmul.bf16.gmra.mxu0 %v335
    %v1738 = vpop.f32.mrf.mxu0
    %v1739 = vadd.f32 0.0, %v1738
    %v1740 = vpop.f32.mrf.mxu0
    %v1741 = vadd.f32 0.0, %v1740
    %1742 = vmatmul.bf16.gmra.mxu0 %v337
    %v1743 = vpop.f32.mrf.mxu0
    %v1744 = vadd.f32 0.0, %v1743
    %v1745 = vpop.f32.mrf.mxu0
    %v1746 = vadd.f32 0.0, %v1745
    %1747 = vmatmul.bf16.gmra.mxu0 %v339
    %v1748 = vpop.f32.mrf.mxu0
    %v1749 = vadd.f32 0.0, %v1748
    %v1750 = vpop.f32.mrf.mxu0
    %v1751 = vadd.f32 0.0, %v1750
    %1752 = vmatmul.bf16.gmra.mxu0 %v341
    %v1753 = vpop.f32.mrf.mxu0
    %v1754 = vadd.f32 0.0, %v1753
    %v1755 = vpop.f32.mrf.mxu0
    %v1756 = vadd.f32 0.0, %v1755
    %1757 = vmatmul.bf16.gmra.mxu0 %v343
    %v1758 = vpop.f32.mrf.mxu0
    %v1759 = vadd.f32 0.0, %v1758
    %v1760 = vpop.f32.mrf.mxu0
    %v1761 = vadd.f32 0.0, %v1760
    %1762 = vmatmul.bf16.gmra.mxu0 %v345
    %v1763 = vpop.f32.mrf.mxu0
    %v1764 = vadd.f32 0.0, %v1763
    %v1765 = vpop.f32.mrf.mxu0
    %v1766 = vadd.f32 0.0, %v1765
    %1767 = vmatmul.bf16.gmra.mxu0 %v347
    %v1768 = vpop.f32.mrf.mxu0
    %v1769 = vadd.f32 0.0, %v1768
    %v1770 = vpop.f32.mrf.mxu0
    %1771 = vdwg.mxu0
    %1772 = vmatpush.bf16.msra.mxu0 %v1372
    %1773 = vmatpush.bf16.msra.mxu0 %v1356
    %1774 = vmatpush.bf16.msra.mxu0 %v1340
    %1775 = vmatpush.bf16.msra.mxu0 %v1324
    %1776 = vmatpush.bf16.msra.mxu0 %v1308
    %1777 = vmatpush.bf16.msra.mxu0 %v1292
    %1778 = vmatpush.bf16.msra.mxu0 %v1276
    %1779 = vmatpush.bf16.msra.mxu0 %v1260
    %1780 = vmatmul.bf16.gmra.mxu0 %v336
    %v1781 = vpop.f32.mrf.mxu0
    %v1782 = vadd.f32 %v1739, %v1781
    %v1783 = vpop.f32.mrf.mxu0
    %v1784 = vadd.f32 %v1741, %v1783
    %1785 = vmatmul.bf16.gmra.mxu0 %v338
    %v1786 = vpop.f32.mrf.mxu0
    %v1787 = vadd.f32 %v1744, %v1786
    %v1788 = vpop.f32.mrf.mxu0
    %v1789 = vadd.f32 %v1746, %v1788
    %1790 = vmatmul.bf16.gmra.mxu0 %v340
    %v1791 = vpop.f32.mrf.mxu0
    %v1792 = vadd.f32 %v1749, %v1791
    %v1793 = vpop.f32.mrf.mxu0
    %v1794 = vadd.f32 %v1751, %v1793
    %1795 = vmatmul.bf16.gmra.mxu0 %v342
    %v1796 = vpop.f32.mrf.mxu0
    %v1797 = vadd.f32 %v1754, %v1796
    %v1798 = vpop.f32.mrf.mxu0
    %v1799 = vadd.f32 %v1756, %v1798
    %1800 = vmatmul.bf16.gmra.mxu0 %v344
    %v1801 = vpop.f32.mrf.mxu0
    %v1802 = vadd.f32 %v1759, %v1801
    %v1803 = vpop.f32.mrf.mxu0
    %v1804 = vadd.f32 %v1761, %v1803
    %1805 = vmatmul.bf16.gmra.mxu0 %v346
    %v1806 = vpop.f32.mrf.mxu0
    %v1807 = vadd.f32 %v1764, %v1806
    %v1808 = vpop.f32.mrf.mxu0
    %v1809 = vadd.f32 %v1766, %v1808
    %1810 = vmatmul.bf16.gmra.mxu0 %v348
    %v1811 = vpop.f32.mrf.mxu0
    %v1812 = vadd.f32 %v1769, %v1811
    %v1813 = vpop.f32.mrf.mxu0
    %1814 = vdwg.mxu0
    %1815 = vmatpush.bf16.msra.mxu0 %v1245
    %1816 = vmatpush.bf16.msra.mxu0 %v1229
    %1817 = vmatpush.bf16.msra.mxu0 %v1213
    %1818 = vmatpush.bf16.msra.mxu0 %v1197
    %1819 = vmatpush.bf16.msra.mxu0 %v1181
    %1820 = vmatpush.bf16.msra.mxu0 %v1165
    %1821 = vmatpush.bf16.msra.mxu0 %v1149
    %1822 = vmatpush.bf16.msra.mxu0 %v1133
    %1823 = vmatmul.bf16.gmra.mxu0 %v335
    %v1824 = vpop.f32.mrf.mxu0
    %v1825 = vadd.f32 0.0, %v1824
    %v1826 = vpop.f32.mrf.mxu0
    %v1827 = vadd.f32 0.0, %v1826
    %1828 = vmatmul.bf16.gmra.mxu0 %v337
    %v1829 = vpop.f32.mrf.mxu0
    %v1830 = vadd.f32 0.0, %v1829
    %v1831 = vpop.f32.mrf.mxu0
    %v1832 = vadd.f32 0.0, %v1831
    %1833 = vmatmul.bf16.gmra.mxu0 %v339
    %v1834 = vpop.f32.mrf.mxu0
    %v1835 = vadd.f32 0.0, %v1834
    %v1836 = vpop.f32.mrf.mxu0
    %v1837 = vadd.f32 0.0, %v1836
    %1838 = vmatmul.bf16.gmra.mxu0 %v341
    %v1839 = vpop.f32.mrf.mxu0
    %v1840 = vadd.f32 0.0, %v1839
    %v1841 = vpop.f32.mrf.mxu0
    %v1842 = vadd.f32 0.0, %v1841
    %1843 = vmatmul.bf16.gmra.mxu0 %v343
    %v1844 = vpop.f32.mrf.mxu0
    %v1845 = vadd.f32 0.0, %v1844
    %v1846 = vpop.f32.mrf.mxu0
    %v1847 = vadd.f32 0.0, %v1846
    %1848 = vmatmul.bf16.gmra.mxu0 %v345
    %v1849 = vpop.f32.mrf.mxu0
    %v1850 = vadd.f32 0.0, %v1849
    %v1851 = vpop.f32.mrf.mxu0
    %v1852 = vadd.f32 0.0, %v1851
    %1853 = vmatmul.bf16.gmra.mxu0 %v347
    %v1854 = vpop.f32.mrf.mxu0
    %v1855 = vadd.f32 0.0, %v1854
    %v1856 = vpop.f32.mrf.mxu0
    %1857 = vdwg.mxu0
    %1858 = vmatpush.bf16.msra.mxu0 %v1373
    %1859 = vmatpush.bf16.msra.mxu0 %v1357
    %1860 = vmatpush.bf16.msra.mxu0 %v1341
    %1861 = vmatpush.bf16.msra.mxu0 %v1325
    %1862 = vmatpush.bf16.msra.mxu0 %v1309
    %1863 = vmatpush.bf16.msra.mxu0 %v1293
    %1864 = vmatpush.bf16.msra.mxu0 %v1277
    %1865 = vmatpush.bf16.msra.mxu0 %v1261
    %1866 = vmatmul.bf16.gmra.mxu0 %v336
    %v1867 = vpop.f32.mrf.mxu0
    %v1868 = vadd.f32 %v1825, %v1867
    %v1869 = vpop.f32.mrf.mxu0
    %v1870 = vadd.f32 %v1827, %v1869
    %1871 = vmatmul.bf16.gmra.mxu0 %v338
    %v1872 = vpop.f32.mrf.mxu0
    %v1873 = vadd.f32 %v1830, %v1872
    %v1874 = vpop.f32.mrf.mxu0
    %v1875 = vadd.f32 %v1832, %v1874
    %1876 = vmatmul.bf16.gmra.mxu0 %v340
    %v1877 = vpop.f32.mrf.mxu0
    %v1878 = vadd.f32 %v1835, %v1877
    %v1879 = vpop.f32.mrf.mxu0
    %v1880 = vadd.f32 %v1837, %v1879
    %1881 = vmatmul.bf16.gmra.mxu0 %v342
    %v1882 = vpop.f32.mrf.mxu0
    %v1883 = vadd.f32 %v1840, %v1882
    %v1884 = vpop.f32.mrf.mxu0
    %v1885 = vadd.f32 %v1842, %v1884
    %1886 = vmatmul.bf16.gmra.mxu0 %v344
    %v1887 = vpop.f32.mrf.mxu0
    %v1888 = vadd.f32 %v1845, %v1887
    %v1889 = vpop.f32.mrf.mxu0
    %v1890 = vadd.f32 %v1847, %v1889
    %1891 = vmatmul.bf16.gmra.mxu0 %v346
    %v1892 = vpop.f32.mrf.mxu0
    %v1893 = vadd.f32 %v1850, %v1892
    %v1894 = vpop.f32.mrf.mxu0
    %v1895 = vadd.f32 %v1852, %v1894
    %1896 = vmatmul.bf16.gmra.mxu0 %v348
    %v1897 = vpop.f32.mrf.mxu0
    %v1898 = vadd.f32 %v1855, %v1897
    %v1899 = vpop.f32.mrf.mxu0
    %1900 = vdwg.mxu0
    %1901 = vmatpush.bf16.msra.mxu0 %v1246
    %1902 = vmatpush.bf16.msra.mxu0 %v1230
    %1903 = vmatpush.bf16.msra.mxu0 %v1214
    %1904 = vmatpush.bf16.msra.mxu0 %v1198
    %1905 = vmatpush.bf16.msra.mxu0 %v1182
    %1906 = vmatpush.bf16.msra.mxu0 %v1166
    %1907 = vmatpush.bf16.msra.mxu0 %v1150
    %1908 = vmatpush.bf16.msra.mxu0 %v1134
    %1909 = vmatmul.bf16.gmra.mxu0 %v335
    %v1910 = vpop.f32.mrf.mxu0
    %v1911 = vadd.f32 0.0, %v1910
    %v1912 = vpop.f32.mrf.mxu0
    %v1913 = vadd.f32 0.0, %v1912
    %1914 = vmatmul.bf16.gmra.mxu0 %v337
    %v1915 = vpop.f32.mrf.mxu0
    %v1916 = vadd.f32 0.0, %v1915
    %v1917 = vpop.f32.mrf.mxu0
    %v1918 = vadd.f32 0.0, %v1917
    %1919 = vmatmul.bf16.gmra.mxu0 %v339
    %v1920 = vpop.f32.mrf.mxu0
    %v1921 = vadd.f32 0.0, %v1920
    %v1922 = vpop.f32.mrf.mxu0
    %v1923 = vadd.f32 0.0, %v1922
    %1924 = vmatmul.bf16.gmra.mxu0 %v341
    %v1925 = vpop.f32.mrf.mxu0
    %v1926 = vadd.f32 0.0, %v1925
    %v1927 = vpop.f32.mrf.mxu0
    %v1928 = vadd.f32 0.0, %v1927
    %1929 = vmatmul.bf16.gmra.mxu0 %v343
    %v1930 = vpop.f32.mrf.mxu0
    %v1931 = vadd.f32 0.0, %v1930
    %v1932 = vpop.f32.mrf.mxu0
    %v1933 = vadd.f32 0.0, %v1932
    %1934 = vmatmul.bf16.gmra.mxu0 %v345
    %v1935 = vpop.f32.mrf.mxu0
    %v1936 = vadd.f32 0.0, %v1935
    %v1937 = vpop.f32.mrf.mxu0
    %v1938 = vadd.f32 0.0, %v1937
    %1939 = vmatmul.bf16.gmra.mxu0 %v347
    %v1940 = vpop.f32.mrf.mxu0
    %v1941 = vadd.f32 0.0, %v1940
    %v1942 = vpop.f32.mrf.mxu0
    %1943 = vdwg.mxu0
    %1944 = vmatpush.bf16.msra.mxu0 %v1374
    %1945 = vmatpush.bf16.msra.mxu0 %v1358
    %1946 = vmatpush.bf16.msra.mxu0 %v1342
    %1947 = vmatpush.bf16.msra.mxu0 %v1326
    %1948 = vmatpush.bf16.msra.mxu0 %v1310
    %1949 = vmatpush.bf16.msra.mxu0 %v1294
    %1950 = vmatpush.bf16.msra.mxu0 %v1278
    %1951 = vmatpush.bf16.msra.mxu0 %v1262
    %1952 = vmatmul.bf16.gmra.mxu0 %v336
    %v1953 = vpop.f32.mrf.mxu0
    %v1954 = vadd.f32 %v1911, %v1953
    %v1955 = vpop.f32.mrf.mxu0
    %v1956 = vadd.f32 %v1913, %v1955
    %1957 = vmatmul.bf16.gmra.mxu0 %v338
    %v1958 = vpop.f32.mrf.mxu0
    %v1959 = vadd.f32 %v1916, %v1958
    %v1960 = vpop.f32.mrf.mxu0
    %v1961 = vadd.f32 %v1918, %v1960
    %1962 = vmatmul.bf16.gmra.mxu0 %v340
    %v1963 = vpop.f32.mrf.mxu0
    %v1964 = vadd.f32 %v1921, %v1963
    %v1965 = vpop.f32.mrf.mxu0
    %v1966 = vadd.f32 %v1923, %v1965
    %1967 = vmatmul.bf16.gmra.mxu0 %v342
    %v1968 = vpop.f32.mrf.mxu0
    %v1969 = vadd.f32 %v1926, %v1968
    %v1970 = vpop.f32.mrf.mxu0
    %v1971 = vadd.f32 %v1928, %v1970
    %1972 = vmatmul.bf16.gmra.mxu0 %v344
    %v1973 = vpop.f32.mrf.mxu0
    %v1974 = vadd.f32 %v1931, %v1973
    %v1975 = vpop.f32.mrf.mxu0
    %v1976 = vadd.f32 %v1933, %v1975
    %1977 = vmatmul.bf16.gmra.mxu0 %v346
    %v1978 = vpop.f32.mrf.mxu0
    %v1979 = vadd.f32 %v1936, %v1978
    %v1980 = vpop.f32.mrf.mxu0
    %v1981 = vadd.f32 %v1938, %v1980
    %1982 = vmatmul.bf16.gmra.mxu0 %v348
    %v1983 = vpop.f32.mrf.mxu0
    %v1984 = vadd.f32 %v1941, %v1983
    %v1985 = vpop.f32.mrf.mxu0
    %1986 = vdwg.mxu0
    %1987 = vmatpush.bf16.msra.mxu0 %v1247
    %1988 = vmatpush.bf16.msra.mxu0 %v1231
    %1989 = vmatpush.bf16.msra.mxu0 %v1215
    %1990 = vmatpush.bf16.msra.mxu0 %v1199
    %1991 = vmatpush.bf16.msra.mxu0 %v1183
    %1992 = vmatpush.bf16.msra.mxu0 %v1167
    %1993 = vmatpush.bf16.msra.mxu0 %v1151
    %1994 = vmatpush.bf16.msra.mxu0 %v1135
    %1995 = vmatmul.bf16.gmra.mxu0 %v335
    %v1996 = vpop.f32.mrf.mxu0
    %v1997 = vadd.f32 0.0, %v1996
    %v1998 = vpop.f32.mrf.mxu0
    %v1999 = vadd.f32 0.0, %v1998
    %2000 = vmatmul.bf16.gmra.mxu0 %v337
    %v2001 = vpop.f32.mrf.mxu0
    %v2002 = vadd.f32 0.0, %v2001
    %v2003 = vpop.f32.mrf.mxu0
    %v2004 = vadd.f32 0.0, %v2003
    %2005 = vmatmul.bf16.gmra.mxu0 %v339
    %v2006 = vpop.f32.mrf.mxu0
    %v2007 = vadd.f32 0.0, %v2006
    %v2008 = vpop.f32.mrf.mxu0
    %v2009 = vadd.f32 0.0, %v2008
    %2010 = vmatmul.bf16.gmra.mxu0 %v341
    %v2011 = vpop.f32.mrf.mxu0
    %v2012 = vadd.f32 0.0, %v2011
    %v2013 = vpop.f32.mrf.mxu0
    %v2014 = vadd.f32 0.0, %v2013
    %2015 = vmatmul.bf16.gmra.mxu0 %v343
    %v2016 = vpop.f32.mrf.mxu0
    %v2017 = vadd.f32 0.0, %v2016
    %v2018 = vpop.f32.mrf.mxu0
    %v2019 = vadd.f32 0.0, %v2018
    %2020 = vmatmul.bf16.gmra.mxu0 %v345
    %v2021 = vpop.f32.mrf.mxu0
    %v2022 = vadd.f32 0.0, %v2021
    %v2023 = vpop.f32.mrf.mxu0
    %v2024 = vadd.f32 0.0, %v2023
    %2025 = vmatmul.bf16.gmra.mxu0 %v347
    %v2026 = vpop.f32.mrf.mxu0
    %v2027 = vadd.f32 0.0, %v2026
    %v2028 = vpop.f32.mrf.mxu0
    %2029 = vdwg.mxu0
    %2030 = vmatpush.bf16.msra.mxu0 %v1375
    %2031 = vmatpush.bf16.msra.mxu0 %v1359
    %2032 = vmatpush.bf16.msra.mxu0 %v1343
    %2033 = vmatpush.bf16.msra.mxu0 %v1327
    %2034 = vmatpush.bf16.msra.mxu0 %v1311
    %2035 = vmatpush.bf16.msra.mxu0 %v1295
    %2036 = vmatpush.bf16.msra.mxu0 %v1279
    %2037 = vmatpush.bf16.msra.mxu0 %v1263
    %2038 = vmatmul.bf16.gmra.mxu0 %v336
    %v2039 = vpop.f32.mrf.mxu0
    %v2040 = vadd.f32 %v1997, %v2039
    %v2041 = vpop.f32.mrf.mxu0
    %v2042 = vadd.f32 %v1999, %v2041
    %2043 = vmatmul.bf16.gmra.mxu0 %v338
    %v2044 = vpop.f32.mrf.mxu0
    %v2045 = vadd.f32 %v2002, %v2044
    %v2046 = vpop.f32.mrf.mxu0
    %v2047 = vadd.f32 %v2004, %v2046
    %2048 = vmatmul.bf16.gmra.mxu0 %v340
    %v2049 = vpop.f32.mrf.mxu0
    %v2050 = vadd.f32 %v2007, %v2049
    %v2051 = vpop.f32.mrf.mxu0
    %v2052 = vadd.f32 %v2009, %v2051
    %2053 = vmatmul.bf16.gmra.mxu0 %v342
    %v2054 = vpop.f32.mrf.mxu0
    %v2055 = vadd.f32 %v2012, %v2054
    %v2056 = vpop.f32.mrf.mxu0
    %v2057 = vadd.f32 %v2014, %v2056
    %2058 = vmatmul.bf16.gmra.mxu0 %v344
    %v2059 = vpop.f32.mrf.mxu0
    %v2060 = vadd.f32 %v2017, %v2059
    %v2061 = vpop.f32.mrf.mxu0
    %v2062 = vadd.f32 %v2019, %v2061
    %2063 = vmatmul.bf16.gmra.mxu0 %v346
    %v2064 = vpop.f32.mrf.mxu0
    %v2065 = vadd.f32 %v2022, %v2064
    %v2066 = vpop.f32.mrf.mxu0
    %v2067 = vadd.f32 %v2024, %v2066
    %2068 = vmatmul.bf16.gmra.mxu0 %v348
    %v2069 = vpop.f32.mrf.mxu0
    %v2070 = vadd.f32 %v2027, %v2069
    %v2071 = vpop.f32.mrf.mxu0
    %2072 = vdwg.mxu0
    %2073 = vmatpush.bf16.msra.mxu0 %v1248
    %2074 = vmatpush.bf16.msra.mxu0 %v1232
    %2075 = vmatpush.bf16.msra.mxu0 %v1216
    %2076 = vmatpush.bf16.msra.mxu0 %v1200
    %2077 = vmatpush.bf16.msra.mxu0 %v1184
    %2078 = vmatpush.bf16.msra.mxu0 %v1168
    %2079 = vmatpush.bf16.msra.mxu0 %v1152
    %2080 = vmatpush.bf16.msra.mxu0 %v1136
    %2081 = vmatmul.bf16.gmra.mxu0 %v335
    %v2082 = vpop.f32.mrf.mxu0
    %v2083 = vadd.f32 0.0, %v2082
    %v2084 = vpop.f32.mrf.mxu0
    %v2085 = vadd.f32 0.0, %v2084
    %2086 = vmatmul.bf16.gmra.mxu0 %v337
    %v2087 = vpop.f32.mrf.mxu0
    %v2088 = vadd.f32 0.0, %v2087
    %v2089 = vpop.f32.mrf.mxu0
    %v2090 = vadd.f32 0.0, %v2089
    %2091 = vmatmul.bf16.gmra.mxu0 %v339
    %v2092 = vpop.f32.mrf.mxu0
    %v2093 = vadd.f32 0.0, %v2092
    %v2094 = vpop.f32.mrf.mxu0
    %v2095 = vadd.f32 0.0, %v2094
    %2096 = vmatmul.bf16.gmra.mxu0 %v341
    %v2097 = vpop.f32.mrf.mxu0
    %v2098 = vadd.f32 0.0, %v2097
    %v2099 = vpop.f32.mrf.mxu0
    %v2100 = vadd.f32 0.0, %v2099
    %2101 = vmatmul.bf16.gmra.mxu0 %v343
    %v2102 = vpop.f32.mrf.mxu0
    %v2103 = vadd.f32 0.0, %v2102
    %v2104 = vpop.f32.mrf.mxu0
    %v2105 = vadd.f32 0.0, %v2104
    %2106 = vmatmul.bf16.gmra.mxu0 %v345
    %v2107 = vpop.f32.mrf.mxu0
    %v2108 = vadd.f32 0.0, %v2107
    %v2109 = vpop.f32.mrf.mxu0
    %v2110 = vadd.f32 0.0, %v2109
    %2111 = vmatmul.bf16.gmra.mxu0 %v347
    %v2112 = vpop.f32.mrf.mxu0
    %v2113 = vadd.f32 0.0, %v2112
    %v2114 = vpop.f32.mrf.mxu0
    %2115 = vdwg.mxu0
    %2116 = vmatpush.bf16.msra.mxu0 %v1376
    %2117 = vmatpush.bf16.msra.mxu0 %v1360
    %2118 = vmatpush.bf16.msra.mxu0 %v1344
    %2119 = vmatpush.bf16.msra.mxu0 %v1328
    %2120 = vmatpush.bf16.msra.mxu0 %v1312
    %2121 = vmatpush.bf16.msra.mxu0 %v1296
    %2122 = vmatpush.bf16.msra.mxu0 %v1280
    %2123 = vmatpush.bf16.msra.mxu0 %v1264
    %2124 = vmatmul.bf16.gmra.mxu0 %v336
    %v2125 = vpop.f32.mrf.mxu0
    %v2126 = vadd.f32 %v2083, %v2125
    %v2127 = vpop.f32.mrf.mxu0
    %v2128 = vadd.f32 %v2085, %v2127
    %2129 = vmatmul.bf16.gmra.mxu0 %v338
    %v2130 = vpop.f32.mrf.mxu0
    %v2131 = vadd.f32 %v2088, %v2130
    %v2132 = vpop.f32.mrf.mxu0
    %v2133 = vadd.f32 %v2090, %v2132
    %2134 = vmatmul.bf16.gmra.mxu0 %v340
    %v2135 = vpop.f32.mrf.mxu0
    %v2136 = vadd.f32 %v2093, %v2135
    %v2137 = vpop.f32.mrf.mxu0
    %v2138 = vadd.f32 %v2095, %v2137
    %2139 = vmatmul.bf16.gmra.mxu0 %v342
    %v2140 = vpop.f32.mrf.mxu0
    %v2141 = vadd.f32 %v2098, %v2140
    %v2142 = vpop.f32.mrf.mxu0
    %v2143 = vadd.f32 %v2100, %v2142
    %2144 = vmatmul.bf16.gmra.mxu0 %v344
    %v2145 = vpop.f32.mrf.mxu0
    %v2146 = vadd.f32 %v2103, %v2145
    %v2147 = vpop.f32.mrf.mxu0
    %v2148 = vadd.f32 %v2105, %v2147
    %2149 = vmatmul.bf16.gmra.mxu0 %v346
    %v2150 = vpop.f32.mrf.mxu0
    %v2151 = vadd.f32 %v2108, %v2150
    %v2152 = vpop.f32.mrf.mxu0
    %v2153 = vadd.f32 %v2110, %v2152
    %2154 = vmatmul.bf16.gmra.mxu0 %v348
    %v2155 = vpop.f32.mrf.mxu0
    %v2156 = vadd.f32 %v2113, %v2155
    %v2157 = vpop.f32.mrf.mxu0
    %2158 = vdwg.mxu0
    %2159 = vmatpush.bf16.msra.mxu0 %v1249
    %2160 = vmatpush.bf16.msra.mxu0 %v1233
    %2161 = vmatpush.bf16.msra.mxu0 %v1217
    %2162 = vmatpush.bf16.msra.mxu0 %v1201
    %2163 = vmatpush.bf16.msra.mxu0 %v1185
    %2164 = vmatpush.bf16.msra.mxu0 %v1169
    %2165 = vmatpush.bf16.msra.mxu0 %v1153
    %2166 = vmatpush.bf16.msra.mxu0 %v1137
    %2167 = vmatmul.bf16.gmra.mxu0 %v335
    %v2168 = vpop.f32.mrf.mxu0
    %v2169 = vadd.f32 0.0, %v2168
    %v2170 = vpop.f32.mrf.mxu0
    %v2171 = vadd.f32 0.0, %v2170
    %2172 = vmatmul.bf16.gmra.mxu0 %v337
    %v2173 = vpop.f32.mrf.mxu0
    %v2174 = vadd.f32 0.0, %v2173
    %v2175 = vpop.f32.mrf.mxu0
    %v2176 = vadd.f32 0.0, %v2175
    %2177 = vmatmul.bf16.gmra.mxu0 %v339
    %v2178 = vpop.f32.mrf.mxu0
    %v2179 = vadd.f32 0.0, %v2178
    %v2180 = vpop.f32.mrf.mxu0
    %v2181 = vadd.f32 0.0, %v2180
    %2182 = vmatmul.bf16.gmra.mxu0 %v341
    %v2183 = vpop.f32.mrf.mxu0
    %v2184 = vadd.f32 0.0, %v2183
    %v2185 = vpop.f32.mrf.mxu0
    %v2186 = vadd.f32 0.0, %v2185
    %2187 = vmatmul.bf16.gmra.mxu0 %v343
    %v2188 = vpop.f32.mrf.mxu0
    %v2189 = vadd.f32 0.0, %v2188
    %v2190 = vpop.f32.mrf.mxu0
    %v2191 = vadd.f32 0.0, %v2190
    %2192 = vmatmul.bf16.gmra.mxu0 %v345
    %v2193 = vpop.f32.mrf.mxu0
    %v2194 = vadd.f32 0.0, %v2193
    %v2195 = vpop.f32.mrf.mxu0
    %v2196 = vadd.f32 0.0, %v2195
    %2197 = vmatmul.bf16.gmra.mxu0 %v347
    %v2198 = vpop.f32.mrf.mxu0
    %v2199 = vadd.f32 0.0, %v2198
    %v2200 = vpop.f32.mrf.mxu0
    %2201 = vdwg.mxu0
    %2202 = vmatpush.bf16.msra.mxu0 %v1377
    %2203 = vmatpush.bf16.msra.mxu0 %v1361
    %2204 = vmatpush.bf16.msra.mxu0 %v1345
    %2205 = vmatpush.bf16.msra.mxu0 %v1329
    %2206 = vmatpush.bf16.msra.mxu0 %v1313
    %2207 = vmatpush.bf16.msra.mxu0 %v1297
    %2208 = vmatpush.bf16.msra.mxu0 %v1281
    %2209 = vmatpush.bf16.msra.mxu0 %v1265
    %2210 = vmatmul.bf16.gmra.mxu0 %v336
    %v2211 = vpop.f32.mrf.mxu0
    %v2212 = vadd.f32 %v2169, %v2211
    %v2213 = vpop.f32.mrf.mxu0
    %v2214 = vadd.f32 %v2171, %v2213
    %2215 = vmatmul.bf16.gmra.mxu0 %v338
    %v2216 = vpop.f32.mrf.mxu0
    %v2217 = vadd.f32 %v2174, %v2216
    %v2218 = vpop.f32.mrf.mxu0
    %v2219 = vadd.f32 %v2176, %v2218
    %2220 = vmatmul.bf16.gmra.mxu0 %v340
    %v2221 = vpop.f32.mrf.mxu0
    %v2222 = vadd.f32 %v2179, %v2221
    %v2223 = vpop.f32.mrf.mxu0
    %v2224 = vadd.f32 %v2181, %v2223
    %2225 = vmatmul.bf16.gmra.mxu0 %v342
    %v2226 = vpop.f32.mrf.mxu0
    %v2227 = vadd.f32 %v2184, %v2226
    %v2228 = vpop.f32.mrf.mxu0
    %v2229 = vadd.f32 %v2186, %v2228
    %2230 = vmatmul.bf16.gmra.mxu0 %v344
    %v2231 = vpop.f32.mrf.mxu0
    %v2232 = vadd.f32 %v2189, %v2231
    %v2233 = vpop.f32.mrf.mxu0
    %v2234 = vadd.f32 %v2191, %v2233
    %2235 = vmatmul.bf16.gmra.mxu0 %v346
    %v2236 = vpop.f32.mrf.mxu0
    %v2237 = vadd.f32 %v2194, %v2236
    %v2238 = vpop.f32.mrf.mxu0
    %v2239 = vadd.f32 %v2196, %v2238
    %2240 = vmatmul.bf16.gmra.mxu0 %v348
    %v2241 = vpop.f32.mrf.mxu0
    %v2242 = vadd.f32 %v2199, %v2241
    %v2243 = vpop.f32.mrf.mxu0
    %2244 = vdwg.mxu0
    %2245 = vmatpush.bf16.msra.mxu0 %v1250
    %2246 = vmatpush.bf16.msra.mxu0 %v1234
    %2247 = vmatpush.bf16.msra.mxu0 %v1218
    %2248 = vmatpush.bf16.msra.mxu0 %v1202
    %2249 = vmatpush.bf16.msra.mxu0 %v1186
    %2250 = vmatpush.bf16.msra.mxu0 %v1170
    %2251 = vmatpush.bf16.msra.mxu0 %v1154
    %2252 = vmatpush.bf16.msra.mxu0 %v1138
    %2253 = vmatmul.bf16.gmra.mxu0 %v335
    %v2254 = vpop.f32.mrf.mxu0
    %v2255 = vadd.f32 0.0, %v2254
    %v2256 = vpop.f32.mrf.mxu0
    %v2257 = vadd.f32 0.0, %v2256
    %2258 = vmatmul.bf16.gmra.mxu0 %v337
    %v2259 = vpop.f32.mrf.mxu0
    %v2260 = vadd.f32 0.0, %v2259
    %v2261 = vpop.f32.mrf.mxu0
    %v2262 = vadd.f32 0.0, %v2261
    %2263 = vmatmul.bf16.gmra.mxu0 %v339
    %v2264 = vpop.f32.mrf.mxu0
    %v2265 = vadd.f32 0.0, %v2264
    %v2266 = vpop.f32.mrf.mxu0
    %v2267 = vadd.f32 0.0, %v2266
    %2268 = vmatmul.bf16.gmra.mxu0 %v341
    %v2269 = vpop.f32.mrf.mxu0
    %v2270 = vadd.f32 0.0, %v2269
    %v2271 = vpop.f32.mrf.mxu0
    %v2272 = vadd.f32 0.0, %v2271
    %2273 = vmatmul.bf16.gmra.mxu0 %v343
    %v2274 = vpop.f32.mrf.mxu0
    %v2275 = vadd.f32 0.0, %v2274
    %v2276 = vpop.f32.mrf.mxu0
    %v2277 = vadd.f32 0.0, %v2276
    %2278 = vmatmul.bf16.gmra.mxu0 %v345
    %v2279 = vpop.f32.mrf.mxu0
    %v2280 = vadd.f32 0.0, %v2279
    %v2281 = vpop.f32.mrf.mxu0
    %v2282 = vadd.f32 0.0, %v2281
    %2283 = vmatmul.bf16.gmra.mxu0 %v347
    %v2284 = vpop.f32.mrf.mxu0
    %v2285 = vadd.f32 0.0, %v2284
    %v2286 = vpop.f32.mrf.mxu0
    %2287 = vdwg.mxu0
    %2288 = vmatpush.bf16.msra.mxu0 %v1378
    %2289 = vmatpush.bf16.msra.mxu0 %v1362
    %2290 = vmatpush.bf16.msra.mxu0 %v1346
    %2291 = vmatpush.bf16.msra.mxu0 %v1330
    %2292 = vmatpush.bf16.msra.mxu0 %v1314
    %2293 = vmatpush.bf16.msra.mxu0 %v1298
    %2294 = vmatpush.bf16.msra.mxu0 %v1282
    %2295 = vmatpush.bf16.msra.mxu0 %v1266
    %2296 = vmatmul.bf16.gmra.mxu0 %v336
    %v2297 = vpop.f32.mrf.mxu0
    %v2298 = vadd.f32 %v2255, %v2297
    %v2299 = vpop.f32.mrf.mxu0
    %v2300 = vadd.f32 %v2257, %v2299
    %2301 = vmatmul.bf16.gmra.mxu0 %v338
    %v2302 = vpop.f32.mrf.mxu0
    %v2303 = vadd.f32 %v2260, %v2302
    %v2304 = vpop.f32.mrf.mxu0
    %v2305 = vadd.f32 %v2262, %v2304
    %2306 = vmatmul.bf16.gmra.mxu0 %v340
    %v2307 = vpop.f32.mrf.mxu0
    %v2308 = vadd.f32 %v2265, %v2307
    %v2309 = vpop.f32.mrf.mxu0
    %v2310 = vadd.f32 %v2267, %v2309
    %2311 = vmatmul.bf16.gmra.mxu0 %v342
    %v2312 = vpop.f32.mrf.mxu0
    %v2313 = vadd.f32 %v2270, %v2312
    %v2314 = vpop.f32.mrf.mxu0
    %v2315 = vadd.f32 %v2272, %v2314
    %2316 = vmatmul.bf16.gmra.mxu0 %v344
    %v2317 = vpop.f32.mrf.mxu0
    %v2318 = vadd.f32 %v2275, %v2317
    %v2319 = vpop.f32.mrf.mxu0
    %v2320 = vadd.f32 %v2277, %v2319
    %2321 = vmatmul.bf16.gmra.mxu0 %v346
    %v2322 = vpop.f32.mrf.mxu0
    %v2323 = vadd.f32 %v2280, %v2322
    %v2324 = vpop.f32.mrf.mxu0
    %v2325 = vadd.f32 %v2282, %v2324
    %2326 = vmatmul.bf16.gmra.mxu0 %v348
    %v2327 = vpop.f32.mrf.mxu0
    %v2328 = vadd.f32 %v2285, %v2327
    %v2329 = vpop.f32.mrf.mxu0
    %2330 = vdwg.mxu0
    %2331 = vmatpush.bf16.msra.mxu0 %v1251
    %2332 = vmatpush.bf16.msra.mxu0 %v1235
    %2333 = vmatpush.bf16.msra.mxu0 %v1219
    %2334 = vmatpush.bf16.msra.mxu0 %v1203
    %2335 = vmatpush.bf16.msra.mxu0 %v1187
    %2336 = vmatpush.bf16.msra.mxu0 %v1171
    %2337 = vmatpush.bf16.msra.mxu0 %v1155
    %2338 = vmatpush.bf16.msra.mxu0 %v1139
    %2339 = vmatmul.bf16.gmra.mxu0 %v335
    %v2340 = vpop.f32.mrf.mxu0
    %v2341 = vadd.f32 0.0, %v2340
    %v2342 = vpop.f32.mrf.mxu0
    %v2343 = vadd.f32 0.0, %v2342
    %2344 = vmatmul.bf16.gmra.mxu0 %v337
    %v2345 = vpop.f32.mrf.mxu0
    %v2346 = vadd.f32 0.0, %v2345
    %v2347 = vpop.f32.mrf.mxu0
    %v2348 = vadd.f32 0.0, %v2347
    %2349 = vmatmul.bf16.gmra.mxu0 %v339
    %v2350 = vpop.f32.mrf.mxu0
    %v2351 = vadd.f32 0.0, %v2350
    %v2352 = vpop.f32.mrf.mxu0
    %v2353 = vadd.f32 0.0, %v2352
    %2354 = vmatmul.bf16.gmra.mxu0 %v341
    %v2355 = vpop.f32.mrf.mxu0
    %v2356 = vadd.f32 0.0, %v2355
    %v2357 = vpop.f32.mrf.mxu0
    %v2358 = vadd.f32 0.0, %v2357
    %2359 = vmatmul.bf16.gmra.mxu0 %v343
    %v2360 = vpop.f32.mrf.mxu0
    %v2361 = vadd.f32 0.0, %v2360
    %v2362 = vpop.f32.mrf.mxu0
    %v2363 = vadd.f32 0.0, %v2362
    %2364 = vmatmul.bf16.gmra.mxu0 %v345
    %v2365 = vpop.f32.mrf.mxu0
    %v2366 = vadd.f32 0.0, %v2365
    %v2367 = vpop.f32.mrf.mxu0
    %v2368 = vadd.f32 0.0, %v2367
    %2369 = vmatmul.bf16.gmra.mxu0 %v347
    %v2370 = vpop.f32.mrf.mxu0
    %v2371 = vadd.f32 0.0, %v2370
    %v2372 = vpop.f32.mrf.mxu0
    %2373 = vdwg.mxu0
    %2374 = vmatpush.bf16.msra.mxu0 %v1379
    %2375 = vmatpush.bf16.msra.mxu0 %v1363
    %2376 = vmatpush.bf16.msra.mxu0 %v1347
    %2377 = vmatpush.bf16.msra.mxu0 %v1331
    %2378 = vmatpush.bf16.msra.mxu0 %v1315
    %2379 = vmatpush.bf16.msra.mxu0 %v1299
    %2380 = vmatpush.bf16.msra.mxu0 %v1283
    %2381 = vmatpush.bf16.msra.mxu0 %v1267
    %2382 = vmatmul.bf16.gmra.mxu0 %v336
    %v2383 = vpop.f32.mrf.mxu0
    %v2384 = vadd.f32 %v2341, %v2383
    %v2385 = vpop.f32.mrf.mxu0
    %v2386 = vadd.f32 %v2343, %v2385
    %2387 = vmatmul.bf16.gmra.mxu0 %v338
    %v2388 = vpop.f32.mrf.mxu0
    %v2389 = vadd.f32 %v2346, %v2388
    %v2390 = vpop.f32.mrf.mxu0
    %v2391 = vadd.f32 %v2348, %v2390
    %2392 = vmatmul.bf16.gmra.mxu0 %v340
    %v2393 = vpop.f32.mrf.mxu0
    %v2394 = vadd.f32 %v2351, %v2393
    %v2395 = vpop.f32.mrf.mxu0
    %v2396 = vadd.f32 %v2353, %v2395
    %2397 = vmatmul.bf16.gmra.mxu0 %v342
    %v2398 = vpop.f32.mrf.mxu0
    %v2399 = vadd.f32 %v2356, %v2398
    %v2400 = vpop.f32.mrf.mxu0
    %v2401 = vadd.f32 %v2358, %v2400
    %2402 = vmatmul.bf16.gmra.mxu0 %v344
    %v2403 = vpop.f32.mrf.mxu0
    %v2404 = vadd.f32 %v2361, %v2403
    %v2405 = vpop.f32.mrf.mxu0
    %v2406 = vadd.f32 %v2363, %v2405
    %2407 = vmatmul.bf16.gmra.mxu0 %v346
    %v2408 = vpop.f32.mrf.mxu0
    %v2409 = vadd.f32 %v2366, %v2408
    %v2410 = vpop.f32.mrf.mxu0
    %v2411 = vadd.f32 %v2368, %v2410
    %2412 = vmatmul.bf16.gmra.mxu0 %v348
    %v2413 = vpop.f32.mrf.mxu0
    %v2414 = vadd.f32 %v2371, %v2413
    %v2415 = vpop.f32.mrf.mxu0
    %2416 = vdwg.mxu0
    %2417 = vmatpush.bf16.msra.mxu0 %v1252
    %2418 = vmatpush.bf16.msra.mxu0 %v1236
    %2419 = vmatpush.bf16.msra.mxu0 %v1220
    %2420 = vmatpush.bf16.msra.mxu0 %v1204
    %2421 = vmatpush.bf16.msra.mxu0 %v1188
    %2422 = vmatpush.bf16.msra.mxu0 %v1172
    %2423 = vmatpush.bf16.msra.mxu0 %v1156
    %2424 = vmatpush.bf16.msra.mxu0 %v1140
    %2425 = vmatmul.bf16.gmra.mxu0 %v335
    %v2426 = vpop.f32.mrf.mxu0
    %v2427 = vadd.f32 0.0, %v2426
    %v2428 = vpop.f32.mrf.mxu0
    %v2429 = vadd.f32 0.0, %v2428
    %2430 = vmatmul.bf16.gmra.mxu0 %v337
    %v2431 = vpop.f32.mrf.mxu0
    %v2432 = vadd.f32 0.0, %v2431
    %v2433 = vpop.f32.mrf.mxu0
    %v2434 = vadd.f32 0.0, %v2433
    %2435 = vmatmul.bf16.gmra.mxu0 %v339
    %v2436 = vpop.f32.mrf.mxu0
    %v2437 = vadd.f32 0.0, %v2436
    %v2438 = vpop.f32.mrf.mxu0
    %v2439 = vadd.f32 0.0, %v2438
    %2440 = vmatmul.bf16.gmra.mxu0 %v341
    %v2441 = vpop.f32.mrf.mxu0
    %v2442 = vadd.f32 0.0, %v2441
    %v2443 = vpop.f32.mrf.mxu0
    %v2444 = vadd.f32 0.0, %v2443
    %2445 = vmatmul.bf16.gmra.mxu0 %v343
    %v2446 = vpop.f32.mrf.mxu0
    %v2447 = vadd.f32 0.0, %v2446
    %v2448 = vpop.f32.mrf.mxu0
    %v2449 = vadd.f32 0.0, %v2448
    %2450 = vmatmul.bf16.gmra.mxu0 %v345
    %v2451 = vpop.f32.mrf.mxu0
    %v2452 = vadd.f32 0.0, %v2451
    %v2453 = vpop.f32.mrf.mxu0
    %v2454 = vadd.f32 0.0, %v2453
    %2455 = vmatmul.bf16.gmra.mxu0 %v347
    %v2456 = vpop.f32.mrf.mxu0
    %v2457 = vadd.f32 0.0, %v2456
    %v2458 = vpop.f32.mrf.mxu0
    %2459 = vdwg.mxu0
    %2460 = vmatpush.bf16.msra.mxu0 %v1380
    %2461 = vmatpush.bf16.msra.mxu0 %v1364
    %2462 = vmatpush.bf16.msra.mxu0 %v1348
    %2463 = vmatpush.bf16.msra.mxu0 %v1332
    %2464 = vmatpush.bf16.msra.mxu0 %v1316
    %2465 = vmatpush.bf16.msra.mxu0 %v1300
    %2466 = vmatpush.bf16.msra.mxu0 %v1284
    %2467 = vmatpush.bf16.msra.mxu0 %v1268
    %2468 = vmatmul.bf16.gmra.mxu0 %v336
    %v2469 = vpop.f32.mrf.mxu0
    %v2470 = vadd.f32 %v2427, %v2469
    %v2471 = vpop.f32.mrf.mxu0
    %v2472 = vadd.f32 %v2429, %v2471
    %2473 = vmatmul.bf16.gmra.mxu0 %v338
    %v2474 = vpop.f32.mrf.mxu0
    %v2475 = vadd.f32 %v2432, %v2474
    %v2476 = vpop.f32.mrf.mxu0
    %v2477 = vadd.f32 %v2434, %v2476
    %2478 = vmatmul.bf16.gmra.mxu0 %v340
    %v2479 = vpop.f32.mrf.mxu0
    %v2480 = vadd.f32 %v2437, %v2479
    %v2481 = vpop.f32.mrf.mxu0
    %v2482 = vadd.f32 %v2439, %v2481
    %2483 = vmatmul.bf16.gmra.mxu0 %v342
    %v2484 = vpop.f32.mrf.mxu0
    %v2485 = vadd.f32 %v2442, %v2484
    %v2486 = vpop.f32.mrf.mxu0
    %v2487 = vadd.f32 %v2444, %v2486
    %2488 = vmatmul.bf16.gmra.mxu0 %v344
    %v2489 = vpop.f32.mrf.mxu0
    %v2490 = vadd.f32 %v2447, %v2489
    %v2491 = vpop.f32.mrf.mxu0
    %v2492 = vadd.f32 %v2449, %v2491
    %2493 = vmatmul.bf16.gmra.mxu0 %v346
    %v2494 = vpop.f32.mrf.mxu0
    %v2495 = vadd.f32 %v2452, %v2494
    %v2496 = vpop.f32.mrf.mxu0
    %v2497 = vadd.f32 %v2454, %v2496
    %2498 = vmatmul.bf16.gmra.mxu0 %v348
    %v2499 = vpop.f32.mrf.mxu0
    %v2500 = vadd.f32 %v2457, %v2499
    %v2501 = vpop.f32.mrf.mxu0
    %2502 = vdwg.mxu0
    %2503 = vmatpush.bf16.msra.mxu0 %v1253
    %2504 = vmatpush.bf16.msra.mxu0 %v1237
    %2505 = vmatpush.bf16.msra.mxu0 %v1221
    %2506 = vmatpush.bf16.msra.mxu0 %v1205
    %2507 = vmatpush.bf16.msra.mxu0 %v1189
    %2508 = vmatpush.bf16.msra.mxu0 %v1173
    %2509 = vmatpush.bf16.msra.mxu0 %v1157
    %2510 = vmatpush.bf16.msra.mxu0 %v1141
    %2511 = vmatmul.bf16.gmra.mxu0 %v335
    %v2512 = vpop.f32.mrf.mxu0
    %v2513 = vadd.f32 0.0, %v2512
    %v2514 = vpop.f32.mrf.mxu0
    %v2515 = vadd.f32 0.0, %v2514
    %2516 = vmatmul.bf16.gmra.mxu0 %v337
    %v2517 = vpop.f32.mrf.mxu0
    %v2518 = vadd.f32 0.0, %v2517
    %v2519 = vpop.f32.mrf.mxu0
    %v2520 = vadd.f32 0.0, %v2519
    %2521 = vmatmul.bf16.gmra.mxu0 %v339
    %v2522 = vpop.f32.mrf.mxu0
    %v2523 = vadd.f32 0.0, %v2522
    %v2524 = vpop.f32.mrf.mxu0
    %v2525 = vadd.f32 0.0, %v2524
    %2526 = vmatmul.bf16.gmra.mxu0 %v341
    %v2527 = vpop.f32.mrf.mxu0
    %v2528 = vadd.f32 0.0, %v2527
    %v2529 = vpop.f32.mrf.mxu0
    %v2530 = vadd.f32 0.0, %v2529
    %2531 = vmatmul.bf16.gmra.mxu0 %v343
    %v2532 = vpop.f32.mrf.mxu0
    %v2533 = vadd.f32 0.0, %v2532
    %v2534 = vpop.f32.mrf.mxu0
    %v2535 = vadd.f32 0.0, %v2534
    %2536 = vmatmul.bf16.gmra.mxu0 %v345
    %v2537 = vpop.f32.mrf.mxu0
    %v2538 = vadd.f32 0.0, %v2537
    %v2539 = vpop.f32.mrf.mxu0
    %v2540 = vadd.f32 0.0, %v2539
    %2541 = vmatmul.bf16.gmra.mxu0 %v347
    %v2542 = vpop.f32.mrf.mxu0
    %v2543 = vadd.f32 0.0, %v2542
    %v2544 = vpop.f32.mrf.mxu0
    %2545 = vdwg.mxu0
    %2546 = vmatpush.bf16.msra.mxu0 %v1381
    %2547 = vmatpush.bf16.msra.mxu0 %v1365
    %2548 = vmatpush.bf16.msra.mxu0 %v1349
    %2549 = vmatpush.bf16.msra.mxu0 %v1333
    %2550 = vmatpush.bf16.msra.mxu0 %v1317
    %2551 = vmatpush.bf16.msra.mxu0 %v1301
    %2552 = vmatpush.bf16.msra.mxu0 %v1285
    %2553 = vmatpush.bf16.msra.mxu0 %v1269
    %2554 = vmatmul.bf16.gmra.mxu0 %v336
    %v2555 = vpop.f32.mrf.mxu0
    %v2556 = vadd.f32 %v2513, %v2555
    %v2557 = vpop.f32.mrf.mxu0
    %v2558 = vadd.f32 %v2515, %v2557
    %2559 = vmatmul.bf16.gmra.mxu0 %v338
    %v2560 = vpop.f32.mrf.mxu0
    %v2561 = vadd.f32 %v2518, %v2560
    %v2562 = vpop.f32.mrf.mxu0
    %v2563 = vadd.f32 %v2520, %v2562
    %2564 = vmatmul.bf16.gmra.mxu0 %v340
    %v2565 = vpop.f32.mrf.mxu0
    %v2566 = vadd.f32 %v2523, %v2565
    %v2567 = vpop.f32.mrf.mxu0
    %v2568 = vadd.f32 %v2525, %v2567
    %2569 = vmatmul.bf16.gmra.mxu0 %v342
    %v2570 = vpop.f32.mrf.mxu0
    %v2571 = vadd.f32 %v2528, %v2570
    %v2572 = vpop.f32.mrf.mxu0
    %v2573 = vadd.f32 %v2530, %v2572
    %2574 = vmatmul.bf16.gmra.mxu0 %v344
    %v2575 = vpop.f32.mrf.mxu0
    %v2576 = vadd.f32 %v2533, %v2575
    %v2577 = vpop.f32.mrf.mxu0
    %v2578 = vadd.f32 %v2535, %v2577
    %2579 = vmatmul.bf16.gmra.mxu0 %v346
    %v2580 = vpop.f32.mrf.mxu0
    %v2581 = vadd.f32 %v2538, %v2580
    %v2582 = vpop.f32.mrf.mxu0
    %v2583 = vadd.f32 %v2540, %v2582
    %2584 = vmatmul.bf16.gmra.mxu0 %v348
    %v2585 = vpop.f32.mrf.mxu0
    %v2586 = vadd.f32 %v2543, %v2585
    %v2587 = vpop.f32.mrf.mxu0
    %2588 = vdwg.mxu0
    %2589 = vmatpush.bf16.msra.mxu0 %v1254
    %2590 = vmatpush.bf16.msra.mxu0 %v1238
    %2591 = vmatpush.bf16.msra.mxu0 %v1222
    %2592 = vmatpush.bf16.msra.mxu0 %v1206
    %2593 = vmatpush.bf16.msra.mxu0 %v1190
    %2594 = vmatpush.bf16.msra.mxu0 %v1174
    %2595 = vmatpush.bf16.msra.mxu0 %v1158
    %2596 = vmatpush.bf16.msra.mxu0 %v1142
    %2597 = vmatmul.bf16.gmra.mxu0 %v335
    %v2598 = vpop.f32.mrf.mxu0
    %v2599 = vadd.f32 0.0, %v2598
    %v2600 = vpop.f32.mrf.mxu0
    %v2601 = vadd.f32 0.0, %v2600
    %2602 = vmatmul.bf16.gmra.mxu0 %v337
    %v2603 = vpop.f32.mrf.mxu0
    %v2604 = vadd.f32 0.0, %v2603
    %v2605 = vpop.f32.mrf.mxu0
    %v2606 = vadd.f32 0.0, %v2605
    %2607 = vmatmul.bf16.gmra.mxu0 %v339
    %v2608 = vpop.f32.mrf.mxu0
    %v2609 = vadd.f32 0.0, %v2608
    %v2610 = vpop.f32.mrf.mxu0
    %v2611 = vadd.f32 0.0, %v2610
    %2612 = vmatmul.bf16.gmra.mxu0 %v341
    %v2613 = vpop.f32.mrf.mxu0
    %v2614 = vadd.f32 0.0, %v2613
    %v2615 = vpop.f32.mrf.mxu0
    %v2616 = vadd.f32 0.0, %v2615
    %2617 = vmatmul.bf16.gmra.mxu0 %v343
    %v2618 = vpop.f32.mrf.mxu0
    %v2619 = vadd.f32 0.0, %v2618
    %v2620 = vpop.f32.mrf.mxu0
    %v2621 = vadd.f32 0.0, %v2620
    %2622 = vmatmul.bf16.gmra.mxu0 %v345
    %v2623 = vpop.f32.mrf.mxu0
    %v2624 = vadd.f32 0.0, %v2623
    %v2625 = vpop.f32.mrf.mxu0
    %v2626 = vadd.f32 0.0, %v2625
    %2627 = vmatmul.bf16.gmra.mxu0 %v347
    %v2628 = vpop.f32.mrf.mxu0
    %v2629 = vadd.f32 0.0, %v2628
    %v2630 = vpop.f32.mrf.mxu0
    %2631 = vdwg.mxu0
    %2632 = vmatpush.bf16.msra.mxu0 %v1382
    %2633 = vmatpush.bf16.msra.mxu0 %v1366
    %2634 = vmatpush.bf16.msra.mxu0 %v1350
    %2635 = vmatpush.bf16.msra.mxu0 %v1334
    %2636 = vmatpush.bf16.msra.mxu0 %v1318
    %2637 = vmatpush.bf16.msra.mxu0 %v1302
    %2638 = vmatpush.bf16.msra.mxu0 %v1286
    %2639 = vmatpush.bf16.msra.mxu0 %v1270
    %2640 = vmatmul.bf16.gmra.mxu0 %v336
    %v2641 = vpop.f32.mrf.mxu0
    %v2642 = vadd.f32 %v2599, %v2641
    %v2643 = vpop.f32.mrf.mxu0
    %v2644 = vadd.f32 %v2601, %v2643
    %2645 = vmatmul.bf16.gmra.mxu0 %v338
    %v2646 = vpop.f32.mrf.mxu0
    %v2647 = vadd.f32 %v2604, %v2646
    %v2648 = vpop.f32.mrf.mxu0
    %v2649 = vadd.f32 %v2606, %v2648
    %2650 = vmatmul.bf16.gmra.mxu0 %v340
    %v2651 = vpop.f32.mrf.mxu0
    %v2652 = vadd.f32 %v2609, %v2651
    %v2653 = vpop.f32.mrf.mxu0
    %v2654 = vadd.f32 %v2611, %v2653
    %2655 = vmatmul.bf16.gmra.mxu0 %v342
    %v2656 = vpop.f32.mrf.mxu0
    %v2657 = vadd.f32 %v2614, %v2656
    %v2658 = vpop.f32.mrf.mxu0
    %v2659 = vadd.f32 %v2616, %v2658
    %2660 = vmatmul.bf16.gmra.mxu0 %v344
    %v2661 = vpop.f32.mrf.mxu0
    %v2662 = vadd.f32 %v2619, %v2661
    %v2663 = vpop.f32.mrf.mxu0
    %v2664 = vadd.f32 %v2621, %v2663
    %2665 = vmatmul.bf16.gmra.mxu0 %v346
    %v2666 = vpop.f32.mrf.mxu0
    %v2667 = vadd.f32 %v2624, %v2666
    %v2668 = vpop.f32.mrf.mxu0
    %v2669 = vadd.f32 %v2626, %v2668
    %2670 = vmatmul.bf16.gmra.mxu0 %v348
    %v2671 = vpop.f32.mrf.mxu0
    %v2672 = vadd.f32 %v2629, %v2671
    %v2673 = vpop.f32.mrf.mxu0
    %2674 = vdwg.mxu0
    %2675 = vmatpush.bf16.msra.mxu0 %v1255
    %2676 = vmatpush.bf16.msra.mxu0 %v1239
    %2677 = vmatpush.bf16.msra.mxu0 %v1223
    %2678 = vmatpush.bf16.msra.mxu0 %v1207
    %2679 = vmatpush.bf16.msra.mxu0 %v1191
    %2680 = vmatpush.bf16.msra.mxu0 %v1175
    %2681 = vmatpush.bf16.msra.mxu0 %v1159
    %2682 = vmatpush.bf16.msra.mxu0 %v1143
    %2683 = vmatmul.bf16.gmra.mxu0 %v335
    %v2684 = vpop.f32.mrf.mxu0
    %v2685 = vadd.f32 0.0, %v2684
    %v2686 = vpop.f32.mrf.mxu0
    %v2687 = vadd.f32 0.0, %v2686
    %2688 = vmatmul.bf16.gmra.mxu0 %v337
    %v2689 = vpop.f32.mrf.mxu0
    %v2690 = vadd.f32 0.0, %v2689
    %v2691 = vpop.f32.mrf.mxu0
    %v2692 = vadd.f32 0.0, %v2691
    %2693 = vmatmul.bf16.gmra.mxu0 %v339
    %v2694 = vpop.f32.mrf.mxu0
    %v2695 = vadd.f32 0.0, %v2694
    %v2696 = vpop.f32.mrf.mxu0
    %v2697 = vadd.f32 0.0, %v2696
    %2698 = vmatmul.bf16.gmra.mxu0 %v341
    %v2699 = vpop.f32.mrf.mxu0
    %v2700 = vadd.f32 0.0, %v2699
    %v2701 = vpop.f32.mrf.mxu0
    %v2702 = vadd.f32 0.0, %v2701
    %2703 = vmatmul.bf16.gmra.mxu0 %v343
    %v2704 = vpop.f32.mrf.mxu0
    %v2705 = vadd.f32 0.0, %v2704
    %v2706 = vpop.f32.mrf.mxu0
    %v2707 = vadd.f32 0.0, %v2706
    %2708 = vmatmul.bf16.gmra.mxu0 %v345
    %v2709 = vpop.f32.mrf.mxu0
    %v2710 = vadd.f32 0.0, %v2709
    %v2711 = vpop.f32.mrf.mxu0
    %v2712 = vadd.f32 0.0, %v2711
    %2713 = vmatmul.bf16.gmra.mxu0 %v347
    %v2714 = vpop.f32.mrf.mxu0
    %v2715 = vadd.f32 0.0, %v2714
    %v2716 = vpop.f32.mrf.mxu0
    %2717 = vdwg.mxu0
    %2718 = vmatpush.bf16.msra.mxu0 %v1383
    %2719 = vmatpush.bf16.msra.mxu0 %v1367
    %2720 = vmatpush.bf16.msra.mxu0 %v1351
    %2721 = vmatpush.bf16.msra.mxu0 %v1335
    %2722 = vmatpush.bf16.msra.mxu0 %v1319
    %2723 = vmatpush.bf16.msra.mxu0 %v1303
    %2724 = vmatpush.bf16.msra.mxu0 %v1287
    %2725 = vmatpush.bf16.msra.mxu0 %v1271
    %2726 = vmatmul.bf16.gmra.mxu0 %v336
    %v2727 = vpop.f32.mrf.mxu0
    %v2728 = vadd.f32 %v2685, %v2727
    %v2729 = vpop.f32.mrf.mxu0
    %v2730 = vadd.f32 %v2687, %v2729
    %2731 = vmatmul.bf16.gmra.mxu0 %v338
    %v2732 = vpop.f32.mrf.mxu0
    %v2733 = vadd.f32 %v2690, %v2732
    %v2734 = vpop.f32.mrf.mxu0
    %v2735 = vadd.f32 %v2692, %v2734
    %2736 = vmatmul.bf16.gmra.mxu0 %v340
    %v2737 = vpop.f32.mrf.mxu0
    %v2738 = vadd.f32 %v2695, %v2737
    %v2739 = vpop.f32.mrf.mxu0
    %v2740 = vadd.f32 %v2697, %v2739
    %2741 = vmatmul.bf16.gmra.mxu0 %v342
    %v2742 = vpop.f32.mrf.mxu0
    %v2743 = vadd.f32 %v2700, %v2742
    %v2744 = vpop.f32.mrf.mxu0
    %v2745 = vadd.f32 %v2702, %v2744
    %2746 = vmatmul.bf16.gmra.mxu0 %v344
    %v2747 = vpop.f32.mrf.mxu0
    %v2748 = vadd.f32 %v2705, %v2747
    %v2749 = vpop.f32.mrf.mxu0
    %v2750 = vadd.f32 %v2707, %v2749
    %2751 = vmatmul.bf16.gmra.mxu0 %v346
    %v2752 = vpop.f32.mrf.mxu0
    %v2753 = vadd.f32 %v2710, %v2752
    %v2754 = vpop.f32.mrf.mxu0
    %v2755 = vadd.f32 %v2712, %v2754
    %2756 = vmatmul.bf16.gmra.mxu0 %v348
    %v2757 = vpop.f32.mrf.mxu0
    %v2758 = vadd.f32 %v2715, %v2757
    %v2759 = vpop.f32.mrf.mxu0
    %2760 = vdwg.mxu0
    %2761 = vmatpush.bf16.msra.mxu0 %v1256
    %2762 = vmatpush.bf16.msra.mxu0 %v1240
    %2763 = vmatpush.bf16.msra.mxu0 %v1224
    %2764 = vmatpush.bf16.msra.mxu0 %v1208
    %2765 = vmatpush.bf16.msra.mxu0 %v1192
    %2766 = vmatpush.bf16.msra.mxu0 %v1176
    %2767 = vmatpush.bf16.msra.mxu0 %v1160
    %2768 = vmatpush.bf16.msra.mxu0 %v1144
    %2769 = vmatmul.bf16.gmra.mxu0 %v335
    %v2770 = vpop.f32.mrf.mxu0
    %v2771 = vadd.f32 0.0, %v2770
    %v2772 = vpop.f32.mrf.mxu0
    %v2773 = vadd.f32 0.0, %v2772
    %2774 = vmatmul.bf16.gmra.mxu0 %v337
    %v2775 = vpop.f32.mrf.mxu0
    %v2776 = vadd.f32 0.0, %v2775
    %v2777 = vpop.f32.mrf.mxu0
    %v2778 = vadd.f32 0.0, %v2777
    %2779 = vmatmul.bf16.gmra.mxu0 %v339
    %v2780 = vpop.f32.mrf.mxu0
    %v2781 = vadd.f32 0.0, %v2780
    %v2782 = vpop.f32.mrf.mxu0
    %v2783 = vadd.f32 0.0, %v2782
    %2784 = vmatmul.bf16.gmra.mxu0 %v341
    %v2785 = vpop.f32.mrf.mxu0
    %v2786 = vadd.f32 0.0, %v2785
    %v2787 = vpop.f32.mrf.mxu0
    %v2788 = vadd.f32 0.0, %v2787
    %2789 = vmatmul.bf16.gmra.mxu0 %v343
    %v2790 = vpop.f32.mrf.mxu0
    %v2791 = vadd.f32 0.0, %v2790
    %v2792 = vpop.f32.mrf.mxu0
    %v2793 = vadd.f32 0.0, %v2792
    %2794 = vmatmul.bf16.gmra.mxu0 %v345
    %v2795 = vpop.f32.mrf.mxu0
    %v2796 = vadd.f32 0.0, %v2795
    %v2797 = vpop.f32.mrf.mxu0
    %v2798 = vadd.f32 0.0, %v2797
    %2799 = vmatmul.bf16.gmra.mxu0 %v347
    %v2800 = vpop.f32.mrf.mxu0
    %v2801 = vadd.f32 0.0, %v2800
    %v2802 = vpop.f32.mrf.mxu0
    %2803 = vdwg.mxu0
    %2804 = vmatpush.bf16.msra.mxu0 %v1384
    %2805 = vmatpush.bf16.msra.mxu0 %v1368
    %2806 = vmatpush.bf16.msra.mxu0 %v1352
    %2807 = vmatpush.bf16.msra.mxu0 %v1336
    %2808 = vmatpush.bf16.msra.mxu0 %v1320
    %2809 = vmatpush.bf16.msra.mxu0 %v1304
    %2810 = vmatpush.bf16.msra.mxu0 %v1288
    %2811 = vmatpush.bf16.msra.mxu0 %v1272
    %2812 = vmatmul.bf16.gmra.mxu0 %v336
    %v2813 = vpop.f32.mrf.mxu0
    %v2814 = vadd.f32 %v2771, %v2813
    %v2815 = vpop.f32.mrf.mxu0
    %v2816 = vadd.f32 %v2773, %v2815
    %2817 = vmatmul.bf16.gmra.mxu0 %v338
    %v2818 = vpop.f32.mrf.mxu0
    %v2819 = vadd.f32 %v2776, %v2818
    %v2820 = vpop.f32.mrf.mxu0
    %v2821 = vadd.f32 %v2778, %v2820
    %2822 = vmatmul.bf16.gmra.mxu0 %v340
    %v2823 = vpop.f32.mrf.mxu0
    %v2824 = vadd.f32 %v2781, %v2823
    %v2825 = vpop.f32.mrf.mxu0
    %v2826 = vadd.f32 %v2783, %v2825
    %2827 = vmatmul.bf16.gmra.mxu0 %v342
    %v2828 = vpop.f32.mrf.mxu0
    %v2829 = vadd.f32 %v2786, %v2828
    %v2830 = vpop.f32.mrf.mxu0
    %v2831 = vadd.f32 %v2788, %v2830
    %2832 = vmatmul.bf16.gmra.mxu0 %v344
    %v2833 = vpop.f32.mrf.mxu0
    %v2834 = vadd.f32 %v2791, %v2833
    %v2835 = vpop.f32.mrf.mxu0
    %v2836 = vadd.f32 %v2793, %v2835
    %2837 = vmatmul.bf16.gmra.mxu0 %v346
    %v2838 = vpop.f32.mrf.mxu0
    %v2839 = vadd.f32 %v2796, %v2838
    %v2840 = vpop.f32.mrf.mxu0
    %v2841 = vadd.f32 %v2798, %v2840
    %2842 = vmatmul.bf16.gmra.mxu0 %v348
    %v2843 = vpop.f32.mrf.mxu0
    %v2844 = vadd.f32 %v2801, %v2843
    %v2845 = vpop.f32.mrf.mxu0
    %2846 = vdwg.mxu0
    %2847 = vmatpush.bf16.msra.mxu0 %v1257
    %2848 = vmatpush.bf16.msra.mxu0 %v1241
    %2849 = vmatpush.bf16.msra.mxu0 %v1225
    %2850 = vmatpush.bf16.msra.mxu0 %v1209
    %2851 = vmatpush.bf16.msra.mxu0 %v1193
    %2852 = vmatpush.bf16.msra.mxu0 %v1177
    %2853 = vmatpush.bf16.msra.mxu0 %v1161
    %2854 = vmatpush.bf16.msra.mxu0 %v1145
    %2855 = vmatmul.bf16.gmra.mxu0 %v335
    %v2856 = vpop.f32.mrf.mxu0
    %v2857 = vadd.f32 0.0, %v2856
    %v2858 = vpop.f32.mrf.mxu0
    %v2859 = vadd.f32 0.0, %v2858
    %2860 = vmatmul.bf16.gmra.mxu0 %v337
    %v2861 = vpop.f32.mrf.mxu0
    %v2862 = vadd.f32 0.0, %v2861
    %v2863 = vpop.f32.mrf.mxu0
    %v2864 = vadd.f32 0.0, %v2863
    %2865 = vmatmul.bf16.gmra.mxu0 %v339
    %v2866 = vpop.f32.mrf.mxu0
    %v2867 = vadd.f32 0.0, %v2866
    %v2868 = vpop.f32.mrf.mxu0
    %v2869 = vadd.f32 0.0, %v2868
    %2870 = vmatmul.bf16.gmra.mxu0 %v341
    %v2871 = vpop.f32.mrf.mxu0
    %v2872 = vadd.f32 0.0, %v2871
    %v2873 = vpop.f32.mrf.mxu0
    %v2874 = vadd.f32 0.0, %v2873
    %2875 = vmatmul.bf16.gmra.mxu0 %v343
    %v2876 = vpop.f32.mrf.mxu0
    %v2877 = vadd.f32 0.0, %v2876
    %v2878 = vpop.f32.mrf.mxu0
    %v2879 = vadd.f32 0.0, %v2878
    %2880 = vmatmul.bf16.gmra.mxu0 %v345
    %v2881 = vpop.f32.mrf.mxu0
    %v2882 = vadd.f32 0.0, %v2881
    %v2883 = vpop.f32.mrf.mxu0
    %v2884 = vadd.f32 0.0, %v2883
    %2885 = vmatmul.bf16.gmra.mxu0 %v347
    %v2886 = vpop.f32.mrf.mxu0
    %v2887 = vadd.f32 0.0, %v2886
    %v2888 = vpop.f32.mrf.mxu0
    %2889 = vdwg.mxu0
    %2890 = vmatpush.bf16.msra.mxu0 %v1385
    %2891 = vmatpush.bf16.msra.mxu0 %v1369
    %2892 = vmatpush.bf16.msra.mxu0 %v1353
    %2893 = vmatpush.bf16.msra.mxu0 %v1337
    %2894 = vmatpush.bf16.msra.mxu0 %v1321
    %2895 = vmatpush.bf16.msra.mxu0 %v1305
    %2896 = vmatpush.bf16.msra.mxu0 %v1289
    %2897 = vmatpush.bf16.msra.mxu0 %v1273
    %2898 = vmatmul.bf16.gmra.mxu0 %v336
    %v2899 = vpop.f32.mrf.mxu0
    %v2900 = vadd.f32 %v2857, %v2899
    %v2901 = vpop.f32.mrf.mxu0
    %v2902 = vadd.f32 %v2859, %v2901
    %2903 = vmatmul.bf16.gmra.mxu0 %v338
    %v2904 = vpop.f32.mrf.mxu0
    %v2905 = vadd.f32 %v2862, %v2904
    %v2906 = vpop.f32.mrf.mxu0
    %v2907 = vadd.f32 %v2864, %v2906
    %2908 = vmatmul.bf16.gmra.mxu0 %v340
    %v2909 = vpop.f32.mrf.mxu0
    %v2910 = vadd.f32 %v2867, %v2909
    %v2911 = vpop.f32.mrf.mxu0
    %v2912 = vadd.f32 %v2869, %v2911
    %2913 = vmatmul.bf16.gmra.mxu0 %v342
    %v2914 = vpop.f32.mrf.mxu0
    %v2915 = vadd.f32 %v2872, %v2914
    %v2916 = vpop.f32.mrf.mxu0
    %v2917 = vadd.f32 %v2874, %v2916
    %2918 = vmatmul.bf16.gmra.mxu0 %v344
    %v2919 = vpop.f32.mrf.mxu0
    %v2920 = vadd.f32 %v2877, %v2919
    %v2921 = vpop.f32.mrf.mxu0
    %v2922 = vadd.f32 %v2879, %v2921
    %2923 = vmatmul.bf16.gmra.mxu0 %v346
    %v2924 = vpop.f32.mrf.mxu0
    %v2925 = vadd.f32 %v2882, %v2924
    %v2926 = vpop.f32.mrf.mxu0
    %v2927 = vadd.f32 %v2884, %v2926
    %2928 = vmatmul.bf16.gmra.mxu0 %v348
    %v2929 = vpop.f32.mrf.mxu0
    %v2930 = vadd.f32 %v2887, %v2929
    %v2931 = vpop.f32.mrf.mxu0
    %2932 = vdwg.mxu0
    %2933 = vmatpush.bf16.msra.mxu0 %v1258
    %2934 = vmatpush.bf16.msra.mxu0 %v1242
    %2935 = vmatpush.bf16.msra.mxu0 %v1226
    %2936 = vmatpush.bf16.msra.mxu0 %v1210
    %2937 = vmatpush.bf16.msra.mxu0 %v1194
    %2938 = vmatpush.bf16.msra.mxu0 %v1178
    %2939 = vmatpush.bf16.msra.mxu0 %v1162
    %2940 = vmatpush.bf16.msra.mxu0 %v1146
    %2941 = vmatmul.bf16.gmra.mxu0 %v335
    %v2942 = vpop.f32.mrf.mxu0
    %v2943 = vadd.f32 0.0, %v2942
    %v2944 = vpop.f32.mrf.mxu0
    %v2945 = vadd.f32 0.0, %v2944
    %2946 = vmatmul.bf16.gmra.mxu0 %v337
    %v2947 = vpop.f32.mrf.mxu0
    %v2948 = vadd.f32 0.0, %v2947
    %v2949 = vpop.f32.mrf.mxu0
    %v2950 = vadd.f32 0.0, %v2949
    %2951 = vmatmul.bf16.gmra.mxu0 %v339
    %v2952 = vpop.f32.mrf.mxu0
    %v2953 = vadd.f32 0.0, %v2952
    %v2954 = vpop.f32.mrf.mxu0
    %v2955 = vadd.f32 0.0, %v2954
    %2956 = vmatmul.bf16.gmra.mxu0 %v341
    %v2957 = vpop.f32.mrf.mxu0
    %v2958 = vadd.f32 0.0, %v2957
    %v2959 = vpop.f32.mrf.mxu0
    %v2960 = vadd.f32 0.0, %v2959
    %2961 = vmatmul.bf16.gmra.mxu0 %v343
    %v2962 = vpop.f32.mrf.mxu0
    %v2963 = vadd.f32 0.0, %v2962
    %v2964 = vpop.f32.mrf.mxu0
    %v2965 = vadd.f32 0.0, %v2964
    %2966 = vmatmul.bf16.gmra.mxu0 %v345
    %v2967 = vpop.f32.mrf.mxu0
    %v2968 = vadd.f32 0.0, %v2967
    %v2969 = vpop.f32.mrf.mxu0
    %v2970 = vadd.f32 0.0, %v2969
    %2971 = vmatmul.bf16.gmra.mxu0 %v347
    %v2972 = vpop.f32.mrf.mxu0
    %v2973 = vadd.f32 0.0, %v2972
    %v2974 = vpop.f32.mrf.mxu0
    %2975 = vdwg.mxu0
    %2976 = vmatpush.bf16.msra.mxu0 %v1386
    %2977 = vmatpush.bf16.msra.mxu0 %v1370
    %2978 = vmatpush.bf16.msra.mxu0 %v1354
    %2979 = vmatpush.bf16.msra.mxu0 %v1338
    %2980 = vmatpush.bf16.msra.mxu0 %v1322
    %2981 = vmatpush.bf16.msra.mxu0 %v1306
    %2982 = vmatpush.bf16.msra.mxu0 %v1290
    %2983 = vmatpush.bf16.msra.mxu0 %v1274
    %2984 = vmatmul.bf16.gmra.mxu0 %v336
    %v2985 = vpop.f32.mrf.mxu0
    %v2986 = vadd.f32 %v2943, %v2985
    %v2987 = vpop.f32.mrf.mxu0
    %v2988 = vadd.f32 %v2945, %v2987
    %2989 = vmatmul.bf16.gmra.mxu0 %v338
    %v2990 = vpop.f32.mrf.mxu0
    %v2991 = vadd.f32 %v2948, %v2990
    %v2992 = vpop.f32.mrf.mxu0
    %v2993 = vadd.f32 %v2950, %v2992
    %2994 = vmatmul.bf16.gmra.mxu0 %v340
    %v2995 = vpop.f32.mrf.mxu0
    %v2996 = vadd.f32 %v2953, %v2995
    %v2997 = vpop.f32.mrf.mxu0
    %v2998 = vadd.f32 %v2955, %v2997
    %2999 = vmatmul.bf16.gmra.mxu0 %v342
    %v3000 = vpop.f32.mrf.mxu0
    %v3001 = vadd.f32 %v2958, %v3000
    %v3002 = vpop.f32.mrf.mxu0
    %v3003 = vadd.f32 %v2960, %v3002
    %3004 = vmatmul.bf16.gmra.mxu0 %v344
    %v3005 = vpop.f32.mrf.mxu0
    %v3006 = vadd.f32 %v2963, %v3005
    %v3007 = vpop.f32.mrf.mxu0
    %v3008 = vadd.f32 %v2965, %v3007
    %3009 = vmatmul.bf16.gmra.mxu0 %v346
    %v3010 = vpop.f32.mrf.mxu0
    %v3011 = vadd.f32 %v2968, %v3010
    %v3012 = vpop.f32.mrf.mxu0
    %v3013 = vadd.f32 %v2970, %v3012
    %3014 = vmatmul.bf16.gmra.mxu0 %v348
    %v3015 = vpop.f32.mrf.mxu0
    %v3016 = vadd.f32 %v2973, %v3015
    %v3017 = vpop.f32.mrf.mxu0
    %3018 = vdwg.mxu0
    %v3019 = vpack.c.bf16 %v1782, %v1696
    %v3020 = vpack.c.bf16 %v1954, %v1868
    %v3021 = vpack.c.bf16 %v2126, %v2040
    %v3022 = vpack.c.bf16 %v2298, %v2212
    %v3023 = vpack.c.bf16 %v2470, %v2384
    %v3024 = vpack.c.bf16 %v2642, %v2556
    %v3025 = vpack.c.bf16 %v2814, %v2728
    %v3026 = vpack.c.bf16 %v2986, %v2900
    %v3027 = vpack.c.bf16 %v1784, %v1698
    %v3028 = vpack.c.bf16 %v1956, %v1870
    %v3029 = vpack.c.bf16 %v2128, %v2042
    %v3030 = vpack.c.bf16 %v2300, %v2214
    %v3031 = vpack.c.bf16 %v2472, %v2386
    %v3032 = vpack.c.bf16 %v2644, %v2558
    %v3033 = vpack.c.bf16 %v2816, %v2730
    %v3034 = vpack.c.bf16 %v2988, %v2902
    %v3035 = vpack.c.bf16 %v1787, %v1701
    %v3036 = vpack.c.bf16 %v1959, %v1873
    %v3037 = vpack.c.bf16 %v2131, %v2045
    %v3038 = vpack.c.bf16 %v2303, %v2217
    %v3039 = vpack.c.bf16 %v2475, %v2389
    %v3040 = vpack.c.bf16 %v2647, %v2561
    %v3041 = vpack.c.bf16 %v2819, %v2733
    %v3042 = vpack.c.bf16 %v2991, %v2905
    %v3043 = vpack.c.bf16 %v1789, %v1703
    %v3044 = vpack.c.bf16 %v1961, %v1875
    %v3045 = vpack.c.bf16 %v2133, %v2047
    %v3046 = vpack.c.bf16 %v2305, %v2219
    %v3047 = vpack.c.bf16 %v2477, %v2391
    %v3048 = vpack.c.bf16 %v2649, %v2563
    %v3049 = vpack.c.bf16 %v2821, %v2735
    %v3050 = vpack.c.bf16 %v2993, %v2907
    %v3051 = vpack.c.bf16 %v1792, %v1706
    %v3052 = vpack.c.bf16 %v1964, %v1878
    %v3053 = vpack.c.bf16 %v2136, %v2050
    %v3054 = vpack.c.bf16 %v2308, %v2222
    %v3055 = vpack.c.bf16 %v2480, %v2394
    %v3056 = vpack.c.bf16 %v2652, %v2566
    %v3057 = vpack.c.bf16 %v2824, %v2738
    %v3058 = vpack.c.bf16 %v2996, %v2910
    %v3059 = vpack.c.bf16 %v1794, %v1708
    %v3060 = vpack.c.bf16 %v1966, %v1880
    %v3061 = vpack.c.bf16 %v2138, %v2052
    %v3062 = vpack.c.bf16 %v2310, %v2224
    %v3063 = vpack.c.bf16 %v2482, %v2396
    %v3064 = vpack.c.bf16 %v2654, %v2568
    %v3065 = vpack.c.bf16 %v2826, %v2740
    %v3066 = vpack.c.bf16 %v2998, %v2912
    %v3067 = vpack.c.bf16 %v1797, %v1711
    %v3068 = vpack.c.bf16 %v1969, %v1883
    %v3069 = vpack.c.bf16 %v2141, %v2055
    %v3070 = vpack.c.bf16 %v2313, %v2227
    %v3071 = vpack.c.bf16 %v2485, %v2399
    %v3072 = vpack.c.bf16 %v2657, %v2571
    %v3073 = vpack.c.bf16 %v2829, %v2743
    %v3074 = vpack.c.bf16 %v3001, %v2915
    %v3075 = vpack.c.bf16 %v1799, %v1713
    %v3076 = vpack.c.bf16 %v1971, %v1885
    %v3077 = vpack.c.bf16 %v2143, %v2057
    %v3078 = vpack.c.bf16 %v2315, %v2229
    %v3079 = vpack.c.bf16 %v2487, %v2401
    %v3080 = vpack.c.bf16 %v2659, %v2573
    %v3081 = vpack.c.bf16 %v2831, %v2745
    %v3082 = vpack.c.bf16 %v3003, %v2917
    %v3083 = vpack.c.bf16 %v1802, %v1716
    %v3084 = vpack.c.bf16 %v1974, %v1888
    %v3085 = vpack.c.bf16 %v2146, %v2060
    %v3086 = vpack.c.bf16 %v2318, %v2232
    %v3087 = vpack.c.bf16 %v2490, %v2404
    %v3088 = vpack.c.bf16 %v2662, %v2576
    %v3089 = vpack.c.bf16 %v2834, %v2748
    %v3090 = vpack.c.bf16 %v3006, %v2920
    %v3091 = vpack.c.bf16 %v1804, %v1718
    %v3092 = vpack.c.bf16 %v1976, %v1890
    %v3093 = vpack.c.bf16 %v2148, %v2062
    %v3094 = vpack.c.bf16 %v2320, %v2234
    %v3095 = vpack.c.bf16 %v2492, %v2406
    %v3096 = vpack.c.bf16 %v2664, %v2578
    %v3097 = vpack.c.bf16 %v2836, %v2750
    %v3098 = vpack.c.bf16 %v3008, %v2922
    %v3099 = vpack.c.bf16 %v1807, %v1721
    %v3100 = vpack.c.bf16 %v1979, %v1893
    %v3101 = vpack.c.bf16 %v2151, %v2065
    %v3102 = vpack.c.bf16 %v2323, %v2237
    %v3103 = vpack.c.bf16 %v2495, %v2409
    %v3104 = vpack.c.bf16 %v2667, %v2581
    %v3105 = vpack.c.bf16 %v2839, %v2753
    %v3106 = vpack.c.bf16 %v3011, %v2925
    %v3107 = vpack.c.bf16 %v1809, %v1723
    %v3108 = vpack.c.bf16 %v1981, %v1895
    %v3109 = vpack.c.bf16 %v2153, %v2067
    %v3110 = vpack.c.bf16 %v2325, %v2239
    %v3111 = vpack.c.bf16 %v2497, %v2411
    %v3112 = vpack.c.bf16 %v2669, %v2583
    %v3113 = vpack.c.bf16 %v2841, %v2755
    %v3114 = vpack.c.bf16 %v3013, %v2927
    %v3115 = vpack.c.bf16 %v1812, %v1726
    %v3116 = vpack.c.bf16 %v1984, %v1898
    %v3117 = vpack.c.bf16 %v2156, %v2070
    %v3118 = vpack.c.bf16 %v2328, %v2242
    %v3119 = vpack.c.bf16 %v2500, %v2414
    %v3120 = vpack.c.bf16 %v2672, %v2586
    %v3121 = vpack.c.bf16 %v2844, %v2758
    %v3122 = vpack.c.bf16 %v3016, %v2930
    %3123 = vst [vmem:[%s2] sm:$0xff] %v3019
    %3124 = vst [vmem:[%s2 + $0x8] sm:$0xff] %v3020
    %3125 = vst [vmem:[%s2 + $0x10] sm:$0xff] %v3021
    %3126 = vst [vmem:[%s2 + $0x18] sm:$0xff] %v3022
    %3127 = vst [vmem:[%s2 + $0x20] sm:$0xff] %v3023
    %3128 = vst [vmem:[%s2 + $0x28] sm:$0xff] %v3024
    %3129 = vst [vmem:[%s2 + $0x30] sm:$0xff] %v3025
    %3130 = vst [vmem:[%s2 + $0x38] sm:$0xff] %v3026
    %3131 = vst [vmem:[%s2 + $0x40] sm:$0xff] %v3027
    %3132 = vst [vmem:[%s2 + $0x48] sm:$0xff] %v3028
    %3133 = vst [vmem:[%s2 + $0x50] sm:$0xff] %v3029
    %3134 = vst [vmem:[%s2 + $0x58] sm:$0xff] %v3030
    %3135 = vst [vmem:[%s2 + $0x60] sm:$0xff] %v3031
    %3136 = vst [vmem:[%s2 + $0x68] sm:$0xff] %v3032
    %3137 = vst [vmem:[%s2 + $0x70] sm:$0xff] %v3033
    %3138 = vst [vmem:[%s2 + $0x78] sm:$0xff] %v3034
    %3139 = vst [vmem:[%s2 + $0x80] sm:$0xff] %v3035
    %3140 = vst [vmem:[%s2 + $0x88] sm:$0xff] %v3036
    %3141 = vst [vmem:[%s2 + $0x90] sm:$0xff] %v3037
    %3142 = vst [vmem:[%s2 + $0x98] sm:$0xff] %v3038
    %3143 = vst [vmem:[%s2 + $0xa0] sm:$0xff] %v3039
    %3144 = vst [vmem:[%s2 + $0xa8] sm:$0xff] %v3040
    %3145 = vst [vmem:[%s2 + $0xb0] sm:$0xff] %v3041
    %3146 = vst [vmem:[%s2 + $0xb8] sm:$0xff] %v3042
    %3147 = vst [vmem:[%s2 + $0xc0] sm:$0xff] %v3043
    %3148 = vst [vmem:[%s2 + $0xc8] sm:$0xff] %v3044
    %3149 = vst [vmem:[%s2 + $0xd0] sm:$0xff] %v3045
    %3150 = vst [vmem:[%s2 + $0xd8] sm:$0xff] %v3046
    %3151 = vst [vmem:[%s2 + $0xe0] sm:$0xff] %v3047
    %3152 = vst [vmem:[%s2 + $0xe8] sm:$0xff] %v3048
    %3153 = vst [vmem:[%s2 + $0xf0] sm:$0xff] %v3049
    %3154 = vst [vmem:[%s2 + $0xf8] sm:$0xff] %v3050
    %3155 = vst [vmem:[%s2 + $0x100] sm:$0xff] %v3051
    %3156 = vst [vmem:[%s2 + $0x108] sm:$0xff] %v3052
    %3157 = vst [vmem:[%s2 + $0x110] sm:$0xff] %v3053
    %3158 = vst [vmem:[%s2 + $0x118] sm:$0xff] %v3054
    %3159 = vst [vmem:[%s2 + $0x120] sm:$0xff] %v3055
    %3160 = vst [vmem:[%s2 + $0x128] sm:$0xff] %v3056
    %3161 = vst [vmem:[%s2 + $0x130] sm:$0xff] %v3057
    %3162 = vst [vmem:[%s2 + $0x138] sm:$0xff] %v3058
    %3163 = vst [vmem:[%s2 + $0x140] sm:$0xff] %v3059
    %3164 = vst [vmem:[%s2 + $0x148] sm:$0xff] %v3060
    %3165 = vst [vmem:[%s2 + $0x150] sm:$0xff] %v3061
    %3166 = vst [vmem:[%s2 + $0x158] sm:$0xff] %v3062
    %3167 = vst [vmem:[%s2 + $0x160] sm:$0xff] %v3063
    %3168 = vst [vmem:[%s2 + $0x168] sm:$0xff] %v3064
    %3169 = vst [vmem:[%s2 + $0x170] sm:$0xff] %v3065
    %3170 = vst [vmem:[%s2 + $0x178] sm:$0xff] %v3066
    %3171 = vst [vmem:[%s2 + $0x180] sm:$0xff] %v3067
    %3172 = vst [vmem:[%s2 + $0x188] sm:$0xff] %v3068
    %3173 = vst [vmem:[%s2 + $0x190] sm:$0xff] %v3069
    %3174 = vst [vmem:[%s2 + $0x198] sm:$0xff] %v3070
    %3175 = vst [vmem:[%s2 + $0x1a0] sm:$0xff] %v3071
    %3176 = vst [vmem:[%s2 + $0x1a8] sm:$0xff] %v3072
    %3177 = vst [vmem:[%s2 + $0x1b0] sm:$0xff] %v3073
    %3178 = vst [vmem:[%s2 + $0x1b8] sm:$0xff] %v3074
    %3179 = vst [vmem:[%s2 + $0x1c0] sm:$0xff] %v3075
    %3180 = vst [vmem:[%s2 + $0x1c8] sm:$0xff] %v3076
    %3181 = vst [vmem:[%s2 + $0x1d0] sm:$0xff] %v3077
    %3182 = vst [vmem:[%s2 + $0x1d8] sm:$0xff] %v3078
    %3183 = vst [vmem:[%s2 + $0x1e0] sm:$0xff] %v3079
    %3184 = vst [vmem:[%s2 + $0x1e8] sm:$0xff] %v3080
    %3185 = vst [vmem:[%s2 + $0x1f0] sm:$0xff] %v3081
    %3186 = vst [vmem:[%s2 + $0x1f8] sm:$0xff] %v3082
    %3187 = vst [vmem:[%s2 + $0x200] sm:$0xff] %v3083
    %3188 = vst [vmem:[%s2 + $0x208] sm:$0xff] %v3084
    %3189 = vst [vmem:[%s2 + $0x210] sm:$0xff] %v3085
    %3190 = vst [vmem:[%s2 + $0x218] sm:$0xff] %v3086
    %3191 = vst [vmem:[%s2 + $0x220] sm:$0xff] %v3087
    %3192 = vst [vmem:[%s2 + $0x228] sm:$0xff] %v3088
    %3193 = vst [vmem:[%s2 + $0x230] sm:$0xff] %v3089
    %3194 = vst [vmem:[%s2 + $0x238] sm:$0xff] %v3090
    %3195 = vst [vmem:[%s2 + $0x240] sm:$0xff] %v3091
    %3196 = vst [vmem:[%s2 + $0x248] sm:$0xff] %v3092
    %3197 = vst [vmem:[%s2 + $0x250] sm:$0xff] %v3093
    %3198 = vst [vmem:[%s2 + $0x258] sm:$0xff] %v3094
    %3199 = vst [vmem:[%s2 + $0x260] sm:$0xff] %v3095
    %3200 = vst [vmem:[%s2 + $0x268] sm:$0xff] %v3096
    %3201 = vst [vmem:[%s2 + $0x270] sm:$0xff] %v3097
    %3202 = vst [vmem:[%s2 + $0x278] sm:$0xff] %v3098
    %3203 = vst [vmem:[%s2 + $0x280] sm:$0xff] %v3099
    %3204 = vst [vmem:[%s2 + $0x288] sm:$0xff] %v3100
    %3205 = vst [vmem:[%s2 + $0x290] sm:$0xff] %v3101
    %3206 = vst [vmem:[%s2 + $0x298] sm:$0xff] %v3102
    %3207 = vst [vmem:[%s2 + $0x2a0] sm:$0xff] %v3103
    %3208 = vst [vmem:[%s2 + $0x2a8] sm:$0xff] %v3104
    %3209 = vst [vmem:[%s2 + $0x2b0] sm:$0xff] %v3105
    %3210 = vst [vmem:[%s2 + $0x2b8] sm:$0xff] %v3106
    %3211 = vst [vmem:[%s2 + $0x2c0] sm:$0xff] %v3107
    %3212 = vst [vmem:[%s2 + $0x2c8] sm:$0xff] %v3108
    %3213 = vst [vmem:[%s2 + $0x2d0] sm:$0xff] %v3109
    %3214 = vst [vmem:[%s2 + $0x2d8] sm:$0xff] %v3110
    %3215 = vst [vmem:[%s2 + $0x2e0] sm:$0xff] %v3111
    %3216 = vst [vmem:[%s2 + $0x2e8] sm:$0xff] %v3112
    %3217 = vst [vmem:[%s2 + $0x2f0] sm:$0xff] %v3113
    %3218 = vst [vmem:[%s2 + $0x2f8] sm:$0xff] %v3114
    %3219 = vst [vmem:[%s2 + $0x300] sm:$0x11] %v3115
    %3220 = vst [vmem:[%s2 + $0x308] sm:$0x11] %v3116
    %3221 = vst [vmem:[%s2 + $0x310] sm:$0x11] %v3117
    %3222 = vst [vmem:[%s2 + $0x318] sm:$0x11] %v3118
    %3223 = vst [vmem:[%s2 + $0x320] sm:$0x11] %v3119
    %3224 = vst [vmem:[%s2 + $0x328] sm:$0x11] %v3120
    %3225 = vst [vmem:[%s2 + $0x330] sm:$0x11] %v3121
    %3226 = vst [vmem:[%s2 + $0x338] sm:$0x11] %v3122
    // Predicated region
    $region14: #{generator_forward.4} parent=1 // pred_check
      _
    $region15: #{generator_forward.4} parent=1 // pred_check_branch
      %3228 = sbr.rel (0) target = $region17
    $region16: #{generator_forward.4} parent=1 // pred_region
      _
    $region17: #{generator_forward.4} parent=1 // pred_fallthru
      _
    // Predicated region
    $region18: #{generator_forward.4} parent=1 // pred_check
      _
    $region19: #{generator_forward.4} parent=1 // pred_check_branch
      %3230 = sbr.rel (0) target = $region21
    $region20: #{generator_forward.4} parent=1 // pred_region
      _
    $region21: #{generator_forward.4} parent=1 // pred_fallthru
      _
    %3231 = vsyncpa [#allocation3], 1

// kernel: generator_forward.5
$region0: #{generator_forward.5}
  #allocation0 [shape = 'u32[]', space=smem, size = 0x4, offset = 0x4, fixed_abs, tag = 'smem constant byte address 0x4 - core index']
  #allocation1 [shape = 'u32[72,128]{1,0:T(1,128)}', space=vmem, size = 0x9000, scoped, tag = 'internal scratch']
  %s0 = inlined_call_operand.vmem [shape: f32[392,128], index: 0, kind: input, shape index: {}]
  %s1 = inlined_call_operand.vmem [shape: f32[1,128], index: 1, kind: input, shape index: {}]
  %s2 = inlined_call_operand.vmem [shape: f32[1,128], index: 2, kind: input, shape index: {}]
  %s3 = inlined_call_operand.vmem [shape: bf16[128,128], index: 3, kind: input, shape index: {}]
  %s4 = inlined_call_operand.vmem [shape: f32[392,128], index: 4, kind: output, shape index: {}]
  %s5 = sld [smem:[#allocation0]]
  $region26: #{generator_forward.5} parent=0
    _
  %s7 = ssub.s32 1, %s5
  %s8 = scalar_select 0, %s7, %s5
  // Predicated region
  $region2: #{generator_forward.5} parent=0 // pred_check
    _
  $region3: #{generator_forward.5} parent=0 // pred_check_branch
    %10 = sbr.rel (0) target = $region5
  $region4: #{generator_forward.5} parent=0 // pred_region
    _
  $region5: #{generator_forward.5} parent=0 // pred_fallthru
    _
  // Predicated region
  $region6: #{generator_forward.5} parent=0 // pred_check
    _
  $region7: #{generator_forward.5} parent=0 // pred_check_branch
    %12 = sbr.rel (0) target = $region9
  $region8: #{generator_forward.5} parent=0 // pred_region
    _
  $region9: #{generator_forward.5} parent=0 // pred_fallthru
    _
  // Predicated region
  $region10: #{generator_forward.5} parent=0 // pred_check
    _
  $region11: #{generator_forward.5} parent=0 // pred_check_branch
    %14 = sbr.rel (0) target = $region13
  $region12: #{generator_forward.5} parent=0 // pred_region
    _
  $region13: #{generator_forward.5} parent=0 // pred_fallthru
    _
  // Predicated region
  $region14: #{generator_forward.5} parent=0 // pred_check
    _
  $region15: #{generator_forward.5} parent=0 // pred_check_branch
    %16 = sbr.rel (0) target = $region17
  $region16: #{generator_forward.5} parent=0 // pred_region
    _
  $region17: #{generator_forward.5} parent=0 // pred_fallthru
    _
  %v17 = vld [vmem:[%s0] sm:$0xff]
  %v18 = vld [vmem:[%s0 + $0x8] sm:$0xff]
  %v19 = vld [vmem:[%s0 + $0x10] sm:$0xff]
  %v20 = vld [vmem:[%s0 + $0x18] sm:$0xff]
  %v21 = vld [vmem:[%s0 + $0x20] sm:$0xff]
  %v22 = vld [vmem:[%s0 + $0x28] sm:$0xff]
  %v23 = vld [vmem:[%s0 + $0x30] sm:$0xff]
  %v24 = vld [vmem:[%s0 + $0x38] sm:$0xff]
  %v25 = vld [vmem:[%s0 + $0x40] sm:$0xff]
  %v26 = vld [vmem:[%s0 + $0x48] sm:$0xff]
  %v27 = vld [vmem:[%s0 + $0x50] sm:$0xff]
  %v28 = vld [vmem:[%s0 + $0x58] sm:$0xff]
  %v29 = vld [vmem:[%s0 + $0x60] sm:$0xff]
  %v30 = vld [vmem:[%s0 + $0x68] sm:$0xff]
  %v31 = vld [vmem:[%s0 + $0x70] sm:$0xff]
  %v32 = vld [vmem:[%s0 + $0x78] sm:$0xff]
  %v33 = vld [vmem:[%s0 + $0x80] sm:$0xff]
  %v34 = vld [vmem:[%s0 + $0x88] sm:$0xff]
  %v35 = vld [vmem:[%s0 + $0x90] sm:$0xff]
  %v36 = vld [vmem:[%s0 + $0x98] sm:$0xff]
  %v37 = vld [vmem:[%s0 + $0xa0] sm:$0xff]
  %v38 = vld [vmem:[%s0 + $0xa8] sm:$0xff]
  %v39 = vld [vmem:[%s0 + $0xb0] sm:$0xff]
  %v40 = vld [vmem:[%s0 + $0xb8] sm:$0xff]
  %v41 = vld [vmem:[%s0 + $0xc0] sm:$0xff]
  %v42 = vld [vmem:[%s0 + $0xc8] sm:$0xff]
  %v43 = vld [vmem:[%s0 + $0xd0] sm:$0xff]
  %v44 = vld [vmem:[%s0 + $0xd8] sm:$0xff]
  %v45 = vld [vmem:[%s0 + $0xe0] sm:$0xff]
  %v46 = vld [vmem:[%s0 + $0xe8] sm:$0xff]
  %v47 = vld [vmem:[%s0 + $0xf0] sm:$0xff]
  %v48 = vld [vmem:[%s0 + $0xf8] sm:$0xff]
  %v49 = vld [vmem:[%s0 + $0x100] sm:$0xff]
  %v50 = vld [vmem:[%s0 + $0x108] sm:$0xff]
  %v51 = vld [vmem:[%s0 + $0x110] sm:$0xff]
  %v52 = vld [vmem:[%s0 + $0x118] sm:$0xff]
  %v53 = vld [vmem:[%s0 + $0x120] sm:$0xff]
  %v54 = vld [vmem:[%s0 + $0x128] sm:$0xff]
  %v55 = vld [vmem:[%s0 + $0x130] sm:$0xff]
  %v56 = vld [vmem:[%s0 + $0x138] sm:$0xff]
  %v57 = vld [vmem:[%s0 + $0x140] sm:$0xff]
  %v58 = vld [vmem:[%s0 + $0x148] sm:$0xff]
  %v59 = vld [vmem:[%s0 + $0x150] sm:$0xff]
  %v60 = vld [vmem:[%s0 + $0x158] sm:$0xff]
  %v61 = vld [vmem:[%s0 + $0x160] sm:$0xff]
  %v62 = vld [vmem:[%s0 + $0x168] sm:$0xff]
  %v63 = vld [vmem:[%s0 + $0x170] sm:$0xff]
  %v64 = vld [vmem:[%s0 + $0x178] sm:$0xff]
  %v65 = vld [vmem:[%s0 + $0x180] sm:$0xff]
  %v66 = vadd.f32 %v17, %v18
  %v67 = vadd.f32 %v66, %v19
  %v68 = vadd.f32 %v67, %v20
  %v69 = vadd.f32 %v68, %v21
  %v70 = vadd.f32 %v69, %v22
  %v71 = vadd.f32 %v70, %v23
  %v72 = vadd.f32 %v71, %v24
  %v73 = vadd.f32 %v72, %v25
  %v74 = vadd.f32 %v73, %v26
  %v75 = vadd.f32 %v74, %v27
  %v76 = vadd.f32 %v75, %v28
  %v77 = vadd.f32 %v76, %v29
  %v78 = vadd.f32 %v77, %v30
  %v79 = vadd.f32 %v78, %v31
  %v80 = vadd.f32 %v79, %v32
  %v81 = vadd.f32 %v80, %v33
  %v82 = vadd.f32 %v81, %v34
  %v83 = vadd.f32 %v82, %v35
  %v84 = vadd.f32 %v83, %v36
  %v85 = vadd.f32 %v84, %v37
  %v86 = vadd.f32 %v85, %v38
  %v87 = vadd.f32 %v86, %v39
  %v88 = vadd.f32 %v87, %v40
  %v89 = vadd.f32 %v88, %v41
  %v90 = vadd.f32 %v89, %v42
  %v91 = vadd.f32 %v90, %v43
  %v92 = vadd.f32 %v91, %v44
  %v93 = vadd.f32 %v92, %v45
  %v94 = vadd.f32 %v93, %v46
  %v95 = vadd.f32 %v94, %v47
  %v96 = vadd.f32 %v95, %v48
  %v97 = vadd.f32 %v96, %v49
  %v98 = vadd.f32 %v97, %v50
  %v99 = vadd.f32 %v98, %v51
  %v100 = vadd.f32 %v99, %v52
  %v101 = vadd.f32 %v100, %v53
  %v102 = vadd.f32 %v101, %v54
  %v103 = vadd.f32 %v102, %v55
  %v104 = vadd.f32 %v103, %v56
  %v105 = vadd.f32 %v104, %v57
  %v106 = vadd.f32 %v105, %v58
  %v107 = vadd.f32 %v106, %v59
  %v108 = vadd.f32 %v107, %v60
  %v109 = vadd.f32 %v108, %v61
  %v110 = vadd.f32 %v109, %v62
  %v111 = vadd.f32 %v110, %v63
  %v112 = vadd.f32 %v111, %v64
  %v113 = vadd.f32 %v112, %v65
  %v114 = vrot.slane %v113, 4
  %v115 = vadd.f32 %v113, %v114
  %v116 = vrot.slane %v115, 2
  %v117 = vadd.f32 %v115, %v116
  %v118 = vrot.slane %v117, 1
  %v119 = vadd.f32 %v117, %v118
  %v120 = vmul.f32 %v119, 0.0025510204
  %v121 = vmul.f32 %v17, %v17
  %v122 = vmul.f32 %v18, %v18
  %v123 = vmul.f32 %v19, %v19
  %v124 = vmul.f32 %v20, %v20
  %v125 = vmul.f32 %v21, %v21
  %v126 = vmul.f32 %v22, %v22
  %v127 = vmul.f32 %v23, %v23
  %v128 = vmul.f32 %v24, %v24
  %v129 = vmul.f32 %v25, %v25
  %v130 = vmul.f32 %v26, %v26
  %v131 = vmul.f32 %v27, %v27
  %v132 = vmul.f32 %v28, %v28
  %v133 = vmul.f32 %v29, %v29
  %v134 = vmul.f32 %v30, %v30
  %v135 = vmul.f32 %v31, %v31
  %v136 = vmul.f32 %v32, %v32
  %v137 = vmul.f32 %v33, %v33
  %v138 = vmul.f32 %v34, %v34
  %v139 = vmul.f32 %v35, %v35
  %v140 = vmul.f32 %v36, %v36
  %v141 = vmul.f32 %v37, %v37
  %v142 = vmul.f32 %v38, %v38
  %v143 = vmul.f32 %v39, %v39
  %v144 = vmul.f32 %v40, %v40
  %v145 = vmul.f32 %v41, %v41
  %v146 = vmul.f32 %v42, %v42
  %v147 = vmul.f32 %v43, %v43
  %v148 = vmul.f32 %v44, %v44
  %v149 = vmul.f32 %v45, %v45
  %v150 = vmul.f32 %v46, %v46
  %v151 = vmul.f32 %v47, %v47
  %v152 = vmul.f32 %v48, %v48
  %v153 = vmul.f32 %v49, %v49
  %v154 = vmul.f32 %v50, %v50
  %v155 = vmul.f32 %v51, %v51
  %v156 = vmul.f32 %v52, %v52
  %v157 = vmul.f32 %v53, %v53
  %v158 = vmul.f32 %v54, %v54
  %v159 = vmul.f32 %v55, %v55
  %v160 = vmul.f32 %v56, %v56
  %v161 = vmul.f32 %v57, %v57
  %v162 = vmul.f32 %v58, %v58
  %v163 = vmul.f32 %v59, %v59
  %v164 = vmul.f32 %v60, %v60
  %v165 = vmul.f32 %v61, %v61
  %v166 = vmul.f32 %v62, %v62
  %v167 = vmul.f32 %v63, %v63
  %v168 = vmul.f32 %v64, %v64
  %v169 = vmul.f32 %v65, %v65
  %v170 = vadd.f32 %v121, %v122
  %v171 = vadd.f32 %v170, %v123
  %v172 = vadd.f32 %v171, %v124
  %v173 = vadd.f32 %v172, %v125
  %v174 = vadd.f32 %v173, %v126
  %v175 = vadd.f32 %v174, %v127
  %v176 = vadd.f32 %v175, %v128
  %v177 = vadd.f32 %v176, %v129
  %v178 = vadd.f32 %v177, %v130
  %v179 = vadd.f32 %v178, %v131
  %v180 = vadd.f32 %v179, %v132
  %v181 = vadd.f32 %v180, %v133
  %v182 = vadd.f32 %v181, %v134
  %v183 = vadd.f32 %v182, %v135
  %v184 = vadd.f32 %v183, %v136
  %v185 = vadd.f32 %v184, %v137
  %v186 = vadd.f32 %v185, %v138
  %v187 = vadd.f32 %v186, %v139
  %v188 = vadd.f32 %v187, %v140
  %v189 = vadd.f32 %v188, %v141
  %v190 = vadd.f32 %v189, %v142
  %v191 = vadd.f32 %v190, %v143
  %v192 = vadd.f32 %v191, %v144
  %v193 = vadd.f32 %v192, %v145
  %v194 = vadd.f32 %v193, %v146
  %v195 = vadd.f32 %v194, %v147
  %v196 = vadd.f32 %v195, %v148
  %v197 = vadd.f32 %v196, %v149
  %v198 = vadd.f32 %v197, %v150
  %v199 = vadd.f32 %v198, %v151
  %v200 = vadd.f32 %v199, %v152
  %v201 = vadd.f32 %v200, %v153
  %v202 = vadd.f32 %v201, %v154
  %v203 = vadd.f32 %v202, %v155
  %v204 = vadd.f32 %v203, %v156
  %v205 = vadd.f32 %v204, %v157
  %v206 = vadd.f32 %v205, %v158
  %v207 = vadd.f32 %v206, %v159
  %v208 = vadd.f32 %v207, %v160
  %v209 = vadd.f32 %v208, %v161
  %v210 = vadd.f32 %v209, %v162
  %v211 = vadd.f32 %v210, %v163
  %v212 = vadd.f32 %v211, %v164
  %v213 = vadd.f32 %v212, %v165
  %v214 = vadd.f32 %v213, %v166
  %v215 = vadd.f32 %v214, %v167
  %v216 = vadd.f32 %v215, %v168
  %v217 = vadd.f32 %v216, %v169
  %v218 = vrot.slane %v217, 4
  %v219 = vadd.f32 %v217, %v218
  %v220 = vrot.slane %v219, 2
  %v221 = vadd.f32 %v219, %v220
  %v222 = vrot.slane %v221, 1
  %v223 = vadd.f32 %v221, %v222
  %v224 = vmul.f32 %v223, 0.0025510204
  %v225 = vmul.f32 %v120, %v120
  %v226 = vsub.f32 %v224, %v225
  %v227 = vmax.f32 %v226, 0.0
  %v228 = vld [vmem:[%s1] sm:$0x1]
  %v229 = vadd.f32 %v227, 1e-05
  %v230 = vrsqrt.pop %v229
  %v231 = vmul.f32 %v230, %v229
  %v232 = vmul.f32 %v231, %v230
  %v233 = vmul.f32 0.5, %v232
  %v234 = vsub.f32 1.5, %v233
  %v235 = vmul.f32 %v230, %v234
  %vm236 = vweird.f32 %v229
  %vm237 = vweird.f32 %v230
  %vm238 = vmor %vm236, %vm237
  %v239 = vsel %vm238, %v230, %v235
  %v240 = vmul.f32 %v228, %v239
  %v241 = vld [vmem:[%s2] sm:$0x1]
  %v242 = vmul.f32 %v120, %v240
  %v243 = vsub.f32 %v241, %v242
  %v245 = vperm.slane %v240, 0
  %v247 = vmul.f32 %v17, %v245
  %v248 = vmul.f32 %v18, %v245
  %v249 = vmul.f32 %v19, %v245
  %v250 = vmul.f32 %v20, %v245
  %v251 = vmul.f32 %v21, %v245
  %v252 = vmul.f32 %v22, %v245
  %v253 = vmul.f32 %v23, %v245
  %v254 = vmul.f32 %v24, %v245
  %v255 = vmul.f32 %v25, %v245
  %v256 = vmul.f32 %v26, %v245
  %v257 = vmul.f32 %v27, %v245
  %v258 = vmul.f32 %v28, %v245
  %v259 = vmul.f32 %v29, %v245
  %v260 = vmul.f32 %v30, %v245
  %v261 = vmul.f32 %v31, %v245
  %v262 = vmul.f32 %v32, %v245
  %v263 = vmul.f32 %v33, %v245
  %v264 = vmul.f32 %v34, %v245
  %v265 = vmul.f32 %v35, %v245
  %v266 = vmul.f32 %v36, %v245
  %v267 = vmul.f32 %v37, %v245
  %v268 = vmul.f32 %v38, %v245
  %v269 = vmul.f32 %v39, %v245
  %v270 = vmul.f32 %v40, %v245
  %v271 = vmul.f32 %v41, %v245
  %v272 = vmul.f32 %v42, %v245
  %v273 = vmul.f32 %v43, %v245
  %v274 = vmul.f32 %v44, %v245
  %v275 = vmul.f32 %v45, %v245
  %v276 = vmul.f32 %v46, %v245
  %v277 = vmul.f32 %v47, %v245
  %v278 = vmul.f32 %v48, %v245
  %v279 = vmul.f32 %v49, %v245
  %v280 = vmul.f32 %v50, %v245
  %v281 = vmul.f32 %v51, %v245
  %v282 = vmul.f32 %v52, %v245
  %v283 = vmul.f32 %v53, %v245
  %v284 = vmul.f32 %v54, %v245
  %v285 = vmul.f32 %v55, %v245
  %v286 = vmul.f32 %v56, %v245
  %v287 = vmul.f32 %v57, %v245
  %v288 = vmul.f32 %v58, %v245
  %v289 = vmul.f32 %v59, %v245
  %v290 = vmul.f32 %v60, %v245
  %v291 = vmul.f32 %v61, %v245
  %v292 = vmul.f32 %v62, %v245
  %v293 = vmul.f32 %v63, %v245
  %v294 = vmul.f32 %v64, %v245
  %v295 = vmul.f32 %v65, %v245
  %v297 = vperm.slane %v243, 0
  %v299 = vadd.f32 %v247, %v297
  %v300 = vadd.f32 %v248, %v297
  %v301 = vadd.f32 %v249, %v297
  %v302 = vadd.f32 %v250, %v297
  %v303 = vadd.f32 %v251, %v297
  %v304 = vadd.f32 %v252, %v297
  %v305 = vadd.f32 %v253, %v297
  %v306 = vadd.f32 %v254, %v297
  %v307 = vadd.f32 %v255, %v297
  %v308 = vadd.f32 %v256, %v297
  %v309 = vadd.f32 %v257, %v297
  %v310 = vadd.f32 %v258, %v297
  %v311 = vadd.f32 %v259, %v297
  %v312 = vadd.f32 %v260, %v297
  %v313 = vadd.f32 %v261, %v297
  %v314 = vadd.f32 %v262, %v297
  %v315 = vadd.f32 %v263, %v297
  %v316 = vadd.f32 %v264, %v297
  %v317 = vadd.f32 %v265, %v297
  %v318 = vadd.f32 %v266, %v297
  %v319 = vadd.f32 %v267, %v297
  %v320 = vadd.f32 %v268, %v297
  %v321 = vadd.f32 %v269, %v297
  %v322 = vadd.f32 %v270, %v297
  %v323 = vadd.f32 %v271, %v297
  %v324 = vadd.f32 %v272, %v297
  %v325 = vadd.f32 %v273, %v297
  %v326 = vadd.f32 %v274, %v297
  %v327 = vadd.f32 %v275, %v297
  %v328 = vadd.f32 %v276, %v297
  %v329 = vadd.f32 %v277, %v297
  %v330 = vadd.f32 %v278, %v297
  %v331 = vadd.f32 %v279, %v297
  %v332 = vadd.f32 %v280, %v297
  %v333 = vadd.f32 %v281, %v297
  %v334 = vadd.f32 %v282, %v297
  %v335 = vadd.f32 %v283, %v297
  %v336 = vadd.f32 %v284, %v297
  %v337 = vadd.f32 %v285, %v297
  %v338 = vadd.f32 %v286, %v297
  %v339 = vadd.f32 %v287, %v297
  %v340 = vadd.f32 %v288, %v297
  %v341 = vadd.f32 %v289, %v297
  %v342 = vadd.f32 %v290, %v297
  %v343 = vadd.f32 %v291, %v297
  %v344 = vadd.f32 %v292, %v297
  %v345 = vadd.f32 %v293, %v297
  %v346 = vadd.f32 %v294, %v297
  %v347 = vadd.f32 %v295, %v297
  %v348 = vmax.f32 %v299, 0.0
  %v349 = vmax.f32 %v300, 0.0
  %v350 = vmax.f32 %v301, 0.0
  %v351 = vmax.f32 %v302, 0.0
  %v352 = vmax.f32 %v303, 0.0
  %v353 = vmax.f32 %v304, 0.0
  %v354 = vmax.f32 %v305, 0.0
  %v355 = vmax.f32 %v306, 0.0
  %v356 = vmax.f32 %v307, 0.0
  %v357 = vmax.f32 %v308, 0.0
  %v358 = vmax.f32 %v309, 0.0
  %v359 = vmax.f32 %v310, 0.0
  %v360 = vmax.f32 %v311, 0.0
  %v361 = vmax.f32 %v312, 0.0
  %v362 = vmax.f32 %v313, 0.0
  %v363 = vmax.f32 %v314, 0.0
  %v364 = vmax.f32 %v315, 0.0
  %v365 = vmax.f32 %v316, 0.0
  %v366 = vmax.f32 %v317, 0.0
  %v367 = vmax.f32 %v318, 0.0
  %v368 = vmax.f32 %v319, 0.0
  %v369 = vmax.f32 %v320, 0.0
  %v370 = vmax.f32 %v321, 0.0
  %v371 = vmax.f32 %v322, 0.0
  %v372 = vmax.f32 %v323, 0.0
  %v373 = vmax.f32 %v324, 0.0
  %v374 = vmax.f32 %v325, 0.0
  %v375 = vmax.f32 %v326, 0.0
  %v376 = vmax.f32 %v327, 0.0
  %v377 = vmax.f32 %v328, 0.0
  %v378 = vmax.f32 %v329, 0.0
  %v379 = vmax.f32 %v330, 0.0
  %v380 = vmax.f32 %v331, 0.0
  %v381 = vmax.f32 %v332, 0.0
  %v382 = vmax.f32 %v333, 0.0
  %v383 = vmax.f32 %v334, 0.0
  %v384 = vmax.f32 %v335, 0.0
  %v385 = vmax.f32 %v336, 0.0
  %v386 = vmax.f32 %v337, 0.0
  %v387 = vmax.f32 %v338, 0.0
  %v388 = vmax.f32 %v339, 0.0
  %v389 = vmax.f32 %v340, 0.0
  %v390 = vmax.f32 %v341, 0.0
  %v391 = vmax.f32 %v342, 0.0
  %v392 = vmax.f32 %v343, 0.0
  %v393 = vmax.f32 %v344, 0.0
  %v394 = vmax.f32 %v345, 0.0
  %v395 = vmax.f32 %v346, 0.0
  %v396 = vmax.f32 %v347, 0.0
  %v397 = vpack.c.bf16 %v349, %v348
  %v398 = vpack.c.bf16 %v351, %v350
  %v399 = vpack.c.bf16 %v353, %v352
  %v400 = vpack.c.bf16 %v355, %v354
  %v401 = vpack.c.bf16 %v357, %v356
  %v402 = vpack.c.bf16 %v359, %v358
  %v403 = vpack.c.bf16 %v361, %v360
  %v404 = vpack.c.bf16 %v363, %v362
  %v405 = vpack.c.bf16 %v365, %v364
  %v406 = vpack.c.bf16 %v367, %v366
  %v407 = vpack.c.bf16 %v369, %v368
  %v408 = vpack.c.bf16 %v371, %v370
  %v409 = vpack.c.bf16 %v373, %v372
  %v410 = vpack.c.bf16 %v375, %v374
  %v411 = vpack.c.bf16 %v377, %v376
  %v412 = vpack.c.bf16 %v379, %v378
  %v413 = vpack.c.bf16 %v381, %v380
  %v414 = vpack.c.bf16 %v383, %v382
  %v415 = vpack.c.bf16 %v385, %v384
  %v416 = vpack.c.bf16 %v387, %v386
  %v417 = vpack.c.bf16 %v389, %v388
  %v418 = vpack.c.bf16 %v391, %v390
  %v419 = vpack.c.bf16 %v393, %v392
  %v420 = vpack.c.bf16 %v395, %v394
  %v421 = vpack.c.bf16 %v396, %v396
  %v422 = vld [vmem:[%s3] sm:$0xf]
  %v423 = vld [vmem:[%s3 + $0x4] sm:$0xf]
  %v424 = vld [vmem:[%s3 + $0x8] sm:$0xf]
  %v425 = vld [vmem:[%s3 + $0xc] sm:$0xf]
  %v426 = vld [vmem:[%s3 + $0x10] sm:$0xf]
  %v427 = vld [vmem:[%s3 + $0x14] sm:$0xf]
  %v428 = vld [vmem:[%s3 + $0x18] sm:$0xf]
  %v429 = vld [vmem:[%s3 + $0x1c] sm:$0xf]
  %v430 = vld [vmem:[%s3 + $0x20] sm:$0xf]
  %v431 = vld [vmem:[%s3 + $0x24] sm:$0xf]
  %v432 = vld [vmem:[%s3 + $0x28] sm:$0xf]
  %v433 = vld [vmem:[%s3 + $0x2c] sm:$0xf]
  %v434 = vld [vmem:[%s3 + $0x30] sm:$0xf]
  %v435 = vld [vmem:[%s3 + $0x34] sm:$0xf]
  %v436 = vld [vmem:[%s3 + $0x38] sm:$0xf]
  %v437 = vld [vmem:[%s3 + $0x3c] sm:$0xf]
  %v454 = vunpack.c.l.b16 %v422
  %v455 = vunpack.c.l.b16 %v423
  %v456 = vunpack.c.l.b16 %v424
  %v457 = vunpack.c.l.b16 %v425
  %v458 = vunpack.c.l.b16 %v426
  %v459 = vunpack.c.l.b16 %v427
  %v460 = vunpack.c.l.b16 %v428
  %v461 = vunpack.c.l.b16 %v429
  %v462 = vunpack.c.l.b16 %v430
  %v463 = vunpack.c.l.b16 %v431
  %v464 = vunpack.c.l.b16 %v432
  %v465 = vunpack.c.l.b16 %v433
  %v466 = vunpack.c.l.b16 %v434
  %v467 = vunpack.c.l.b16 %v435
  %v468 = vunpack.c.l.b16 %v436
  %v469 = vunpack.c.l.b16 %v437
  %v470 = vpack.c.b16 %v455, %v454
  %v471 = vpack.c.b16 %v457, %v456
  %v472 = vpack.c.b16 %v459, %v458
  %v473 = vpack.c.b16 %v461, %v460
  %v474 = vpack.c.b16 %v463, %v462
  %v475 = vpack.c.b16 %v465, %v464
  %v476 = vpack.c.b16 %v467, %v466
  %v477 = vpack.c.b16 %v469, %v468
  %486 = vmatpush.bf16.msra.mxu0 %v477
  %487 = vmatpush.bf16.msra.mxu0 %v476
  %488 = vmatpush.bf16.msra.mxu0 %v475
  %489 = vmatpush.bf16.msra.mxu0 %v474
  %490 = vmatpush.bf16.msra.mxu0 %v473
  %491 = vmatpush.bf16.msra.mxu0 %v472
  %492 = vmatpush.bf16.msra.mxu0 %v471
  %493 = vmatpush.bf16.msra.mxu0 %v470
  %494 = vmatmul.bf16.gmra.mxu0 %v397
  %v495 = vpop.f32.mrf.mxu0
  %v496 = vadd.f32 0.0, %v495
  %v497 = vpop.f32.mrf.mxu0
  %v498 = vadd.f32 0.0, %v497
  %499 = vmatmul.bf16.gmra.mxu0 %v398
  %v500 = vpop.f32.mrf.mxu0
  %v501 = vadd.f32 0.0, %v500
  %v502 = vpop.f32.mrf.mxu0
  %v503 = vadd.f32 0.0, %v502
  %504 = vmatmul.bf16.gmra.mxu0 %v399
  %v505 = vpop.f32.mrf.mxu0
  %v506 = vadd.f32 0.0, %v505
  %v507 = vpop.f32.mrf.mxu0
  %v508 = vadd.f32 0.0, %v507
  %509 = vmatmul.bf16.gmra.mxu0 %v400
  %v510 = vpop.f32.mrf.mxu0
  %v511 = vadd.f32 0.0, %v510
  %v512 = vpop.f32.mrf.mxu0
  %v513 = vadd.f32 0.0, %v512
  %514 = vmatmul.bf16.gmra.mxu0 %v401
  %v515 = vpop.f32.mrf.mxu0
  %v516 = vadd.f32 0.0, %v515
  %v517 = vpop.f32.mrf.mxu0
  %v518 = vadd.f32 0.0, %v517
  %519 = vmatmul.bf16.gmra.mxu0 %v402
  %v520 = vpop.f32.mrf.mxu0
  %v521 = vadd.f32 0.0, %v520
  %v522 = vpop.f32.mrf.mxu0
  %v523 = vadd.f32 0.0, %v522
  %524 = vmatmul.bf16.gmra.mxu0 %v403
  %v525 = vpop.f32.mrf.mxu0
  %v526 = vadd.f32 0.0, %v525
  %v527 = vpop.f32.mrf.mxu0
  %v528 = vadd.f32 0.0, %v527
  %529 = vmatmul.bf16.gmra.mxu0 %v404
  %v530 = vpop.f32.mrf.mxu0
  %v531 = vadd.f32 0.0, %v530
  %v532 = vpop.f32.mrf.mxu0
  %v533 = vadd.f32 0.0, %v532
  %534 = vmatmul.bf16.gmra.mxu0 %v405
  %v535 = vpop.f32.mrf.mxu0
  %v536 = vadd.f32 0.0, %v535
  %v537 = vpop.f32.mrf.mxu0
  %v538 = vadd.f32 0.0, %v537
  %539 = vmatmul.bf16.gmra.mxu0 %v406
  %v540 = vpop.f32.mrf.mxu0
  %v541 = vadd.f32 0.0, %v540
  %v542 = vpop.f32.mrf.mxu0
  %v543 = vadd.f32 0.0, %v542
  %544 = vmatmul.bf16.gmra.mxu0 %v407
  %v545 = vpop.f32.mrf.mxu0
  %v546 = vadd.f32 0.0, %v545
  %v547 = vpop.f32.mrf.mxu0
  %v548 = vadd.f32 0.0, %v547
  %549 = vmatmul.bf16.gmra.mxu0 %v408
  %v550 = vpop.f32.mrf.mxu0
  %v551 = vadd.f32 0.0, %v550
  %v552 = vpop.f32.mrf.mxu0
  %v553 = vadd.f32 0.0, %v552
  %554 = vmatmul.bf16.gmra.mxu0 %v409
  %v555 = vpop.f32.mrf.mxu0
  %v556 = vadd.f32 0.0, %v555
  %v557 = vpop.f32.mrf.mxu0
  %v558 = vadd.f32 0.0, %v557
  %559 = vmatmul.bf16.gmra.mxu0 %v410
  %v560 = vpop.f32.mrf.mxu0
  %v561 = vadd.f32 0.0, %v560
  %v562 = vpop.f32.mrf.mxu0
  %v563 = vadd.f32 0.0, %v562
  %564 = vmatmul.bf16.gmra.mxu0 %v411
  %v565 = vpop.f32.mrf.mxu0
  %v566 = vadd.f32 0.0, %v565
  %v567 = vpop.f32.mrf.mxu0
  %v568 = vadd.f32 0.0, %v567
  %569 = vmatmul.bf16.gmra.mxu0 %v412
  %v570 = vpop.f32.mrf.mxu0
  %v571 = vadd.f32 0.0, %v570
  %v572 = vpop.f32.mrf.mxu0
  %v573 = vadd.f32 0.0, %v572
  %574 = vmatmul.bf16.gmra.mxu0 %v413
  %v575 = vpop.f32.mrf.mxu0
  %v576 = vadd.f32 0.0, %v575
  %v577 = vpop.f32.mrf.mxu0
  %v578 = vadd.f32 0.0, %v577
  %579 = vmatmul.bf16.gmra.mxu0 %v414
  %v580 = vpop.f32.mrf.mxu0
  %v581 = vadd.f32 0.0, %v580
  %v582 = vpop.f32.mrf.mxu0
  %v583 = vadd.f32 0.0, %v582
  %584 = vmatmul.bf16.gmra.mxu0 %v415
  %v585 = vpop.f32.mrf.mxu0
  %v586 = vadd.f32 0.0, %v585
  %v587 = vpop.f32.mrf.mxu0
  %v588 = vadd.f32 0.0, %v587
  %589 = vmatmul.bf16.gmra.mxu0 %v416
  %v590 = vpop.f32.mrf.mxu0
  %v591 = vadd.f32 0.0, %v590
  %v592 = vpop.f32.mrf.mxu0
  %v593 = vadd.f32 0.0, %v592
  %594 = vmatmul.bf16.gmra.mxu0 %v417
  %v595 = vpop.f32.mrf.mxu0
  %v596 = vadd.f32 0.0, %v595
  %v597 = vpop.f32.mrf.mxu0
  %v598 = vadd.f32 0.0, %v597
  %599 = vmatmul.bf16.gmra.mxu0 %v418
  %v600 = vpop.f32.mrf.mxu0
  %v601 = vadd.f32 0.0, %v600
  %v602 = vpop.f32.mrf.mxu0
  %v603 = vadd.f32 0.0, %v602
  %604 = vmatmul.bf16.gmra.mxu0 %v419
  %v605 = vpop.f32.mrf.mxu0
  %v606 = vadd.f32 0.0, %v605
  %v607 = vpop.f32.mrf.mxu0
  %v608 = vadd.f32 0.0, %v607
  %609 = vmatmul.bf16.gmra.mxu0 %v420
  %v610 = vpop.f32.mrf.mxu0
  %v611 = vadd.f32 0.0, %v610
  %v612 = vpop.f32.mrf.mxu0
  %v613 = vadd.f32 0.0, %v612
  %614 = vmatmul.bf16.gmra.mxu0 %v421
  %v615 = vpop.f32.mrf.mxu0
  %v616 = vadd.f32 0.0, %v615
  %v617 = vpop.f32.mrf.mxu0
  %618 = vdwg.mxu0
  %619 = vst [vmem:[%s4] sm:$0xff] %v496
  %620 = vst [vmem:[%s4 + $0x8] sm:$0xff] %v498
  %621 = vst [vmem:[%s4 + $0x10] sm:$0xff] %v501
  %622 = vst [vmem:[%s4 + $0x18] sm:$0xff] %v503
  %623 = vst [vmem:[%s4 + $0x20] sm:$0xff] %v506
  %624 = vst [vmem:[%s4 + $0x28] sm:$0xff] %v508
  %625 = vst [vmem:[%s4 + $0x30] sm:$0xff] %v511
  %626 = vst [vmem:[%s4 + $0x38] sm:$0xff] %v513
  %627 = vst [vmem:[%s4 + $0x40] sm:$0xff] %v516
  %628 = vst [vmem:[%s4 + $0x48] sm:$0xff] %v518
  %629 = vst [vmem:[%s4 + $0x50] sm:$0xff] %v521
  %630 = vst [vmem:[%s4 + $0x58] sm:$0xff] %v523
  %631 = vst [vmem:[%s4 + $0x60] sm:$0xff] %v526
  %632 = vst [vmem:[%s4 + $0x68] sm:$0xff] %v528
  %633 = vst [vmem:[%s4 + $0x70] sm:$0xff] %v531
  %634 = vst [vmem:[%s4 + $0x78] sm:$0xff] %v533
  %635 = vst [vmem:[%s4 + $0x80] sm:$0xff] %v536
  %636 = vst [vmem:[%s4 + $0x88] sm:$0xff] %v538
  %637 = vst [vmem:[%s4 + $0x90] sm:$0xff] %v541
  %638 = vst [vmem:[%s4 + $0x98] sm:$0xff] %v543
  %639 = vst [vmem:[%s4 + $0xa0] sm:$0xff] %v546
  %640 = vst [vmem:[%s4 + $0xa8] sm:$0xff] %v548
  %641 = vst [vmem:[%s4 + $0xb0] sm:$0xff] %v551
  %642 = vst [vmem:[%s4 + $0xb8] sm:$0xff] %v553
  %643 = vst [vmem:[%s4 + $0xc0] sm:$0xff] %v556
  %644 = vst [vmem:[%s4 + $0xc8] sm:$0xff] %v558
  %645 = vst [vmem:[%s4 + $0xd0] sm:$0xff] %v561
  %646 = vst [vmem:[%s4 + $0xd8] sm:$0xff] %v563
  %647 = vst [vmem:[%s4 + $0xe0] sm:$0xff] %v566
  %648 = vst [vmem:[%s4 + $0xe8] sm:$0xff] %v568
  %649 = vst [vmem:[%s4 + $0xf0] sm:$0xff] %v571
  %650 = vst [vmem:[%s4 + $0xf8] sm:$0xff] %v573
  %651 = vst [vmem:[%s4 + $0x100] sm:$0xff] %v576
  %652 = vst [vmem:[%s4 + $0x108] sm:$0xff] %v578
  %653 = vst [vmem:[%s4 + $0x110] sm:$0xff] %v581
  %654 = vst [vmem:[%s4 + $0x118] sm:$0xff] %v583
  %655 = vst [vmem:[%s4 + $0x120] sm:$0xff] %v586
  %656 = vst [vmem:[%s4 + $0x128] sm:$0xff] %v588
  %657 = vst [vmem:[%s4 + $0x130] sm:$0xff] %v591
  %658 = vst [vmem:[%s4 + $0x138] sm:$0xff] %v593
  %659 = vst [vmem:[%s4 + $0x140] sm:$0xff] %v596
  %660 = vst [vmem:[%s4 + $0x148] sm:$0xff] %v598
  %661 = vst [vmem:[%s4 + $0x150] sm:$0xff] %v601
  %662 = vst [vmem:[%s4 + $0x158] sm:$0xff] %v603
  %663 = vst [vmem:[%s4 + $0x160] sm:$0xff] %v606
  %664 = vst [vmem:[%s4 + $0x168] sm:$0xff] %v608
  %665 = vst [vmem:[%s4 + $0x170] sm:$0xff] %v611
  %666 = vst [vmem:[%s4 + $0x178] sm:$0xff] %v613
  %667 = vst [vmem:[%s4 + $0x180] sm:$0xff] %v616
  // Predicated region
  $region18: #{generator_forward.5} parent=0 // pred_check
    _
  $region19: #{generator_forward.5} parent=0 // pred_check_branch
    %669 = sbr.rel (0) target = $region21
  $region20: #{generator_forward.5} parent=0 // pred_region
    _
  $region21: #{generator_forward.5} parent=0 // pred_fallthru
    _
  // Predicated region
  $region22: #{generator_forward.5} parent=0 // pred_check
    _
  $region23: #{generator_forward.5} parent=0 // pred_check_branch
    %671 = sbr.rel (0) target = $region25
  $region24: #{generator_forward.5} parent=0 // pred_region
    _
  $region25: #{generator_forward.5} parent=0 // pred_fallthru
    _

</llo_original>
